<compile_context>
chip_gen: v5e
topology: v5e:2x2
jax: 0.10.0
libtpu: 0.0.40
codegen_flags: <defaults>
</compile_context>

<pallas_src>
import functools

import jax
import jax.numpy as jnp
from jax.experimental import pallas as pl
from jax.experimental.pallas import tpu as pltpu


def basic_block_kernel(x_ref, w1_ref, b1_ref, w2_ref, b2_ref,
                       out_ref, pad_ref, *, H, W, C):
    """One batch element per grid step (NHWC).

    x_ref  : (1, H, W, C)      f32  input block (also the residual)
    w*_ref : (3, 3*C, C)       bf16 conv weights, BN scale folded in,
                               K index = kw*C + cin (kw packed into K)
    b*_ref : (1, C)            f32  folded BN bias
    out_ref: (1, H, W, C)
    pad_ref: (H+2, W, 3*C)     bf16 VMEM scratch. Lane block k (k=0,1,2) at
                               (row hp, col w) holds activation[hp-1, w+k-1]
                               (zero outside the image), so reading rows
                               [dh:dh+H] gives the kw-packed im2col patch for
                               kernel row dh as one aligned contiguous plane.
                               Reused for conv1 and conv2.
    """
    # ---- zero only the halo cells staging never writes (interior is fully ----
    # ---- overwritten every stage() call). Re-done each step: megacore-safe. ----
    zrow = jnp.zeros((1, W, 3 * C), jnp.bfloat16)
    pad_ref[0:1, :, :] = zrow                                # top padding row
    pad_ref[H + 1:H + 2, :, :] = zrow                        # bottom padding row
    zcol = jnp.zeros((H + 2, 1, C), jnp.bfloat16)
    pad_ref[:, 0:1, 0:C] = zcol                              # left halo, kw=0 block
    pad_ref[:, W - 1:W, 2 * C:3 * C] = zcol                  # right halo, kw=2 block

    def stage(v):
        """v: (H, W, C) bf16 activation. Write it 3x, column-shifted, so lane
        block k at column w holds v[:, w+k-1, :] (halo columns stay zero)."""
        pad_ref[1:H + 1, :, C:2 * C] = v                      # kw=1: aligned full store
        pad_ref[1:H + 1, 1:W, 0:C] = v[:, 0:W - 1, :]         # kw=0: shift right by 1
        pad_ref[1:H + 1, 0:W - 1, 2 * C:3 * C] = v[:, 1:W, :]  # kw=2: shift left by 1

    def conv3x3(w_ref, b_ref):
        """3 MXU matmuls with K = 3*C; each tap-row read is an aligned full
        (H, W, 3C) plane whose flatten to (H*W, 3C) is contiguous."""
        acc = jnp.dot(pad_ref[0:H, :, :].reshape(H * W, 3 * C), w_ref[0],
                      preferred_element_type=jnp.float32)
        acc = acc + jnp.dot(pad_ref[1:H + 1, :, :].reshape(H * W, 3 * C), w_ref[1],
                            preferred_element_type=jnp.float32)
        acc = acc + jnp.dot(pad_ref[2:H + 2, :, :].reshape(H * W, 3 * C), w_ref[2],
                            preferred_element_type=jnp.float32)
        return acc + b_ref[...]                               # folded BN bias (f32)

    # ---- conv1 -> bn1 (scale folded into weights) -> relu ----
    stage(x_ref[0].astype(jnp.bfloat16))
    y = jnp.maximum(conv3x3(w1_ref, b1_ref), 0.0)             # (H*W, C) f32

    # ---- conv2 -> bn2 (scratch reused; halo still zero) ----
    stage(y.astype(jnp.bfloat16).reshape(H, W, C))
    out = conv3x3(w2_ref, b2_ref).reshape(H, W, C)            # (H, W, C) f32

    # ---- residual add + relu (re-read x_ref: keeps the residual live range short) ----
    out_ref[0] = jnp.maximum(out + x_ref[0], 0.0).astype(out_ref.dtype)


def basic_block_v1b(x_nchw, w1, bn1, w2, bn2, eps=1e-5):
    """x_nchw: (B, C, H, W) f32; w*: (Cout, Cin, 3, 3) torch OIHW layout;
    bn* = (gamma, beta, running_mean, running_var), each (Cout,)."""
    B, Cin, H, W = x_nchw.shape
    Cout = w1.shape[0]
    assert Cin == Cout, "BasicBlockV1b.conv2 requires inplanes == planes"
    C = Cout

    x = jnp.transpose(x_nchw, (0, 2, 3, 1))                   # NHWC, single HBM copy

    def fold_bn(params):
        gamma, beta, mean, var = params
        scale = gamma / jnp.sqrt(var + eps)
        bias = (beta - mean * scale).reshape(1, C).astype(jnp.float32)
        return scale, bias

    s1, b1 = fold_bn(bn1)
    s2, b2 = fold_bn(bn2)

    def pack_weights(w, scale):
        # OIHW -> (kh, kw, Cin, Cout); fold BN scale into the output channel;
        # pack kw into K -> (3, 3*Cin, Cout); bf16 operands for the MXU.
        wk = jnp.transpose(w, (2, 3, 1, 0)) * scale[None, None, None, :]
        return wk.reshape(3, 3 * C, C).astype(jnp.bfloat16)

    w1_k = pack_weights(w1, s1)
    w2_k = pack_weights(w2, s2)

    kern = functools.partial(basic_block_kernel, H=H, W=W, C=C)

    out_nhwc = pl.pallas_call(
        kern,
        out_shape=jax.ShapeDtypeStruct((B, H, W, C), x.dtype),
        grid_spec=pltpu.PrefetchScalarGridSpec(
            num_scalar_prefetch=0,
            grid=(B,),
            in_specs=[
                pl.BlockSpec((1, H, W, C), lambda b: (b, 0, 0, 0)),
                pl.BlockSpec((3, 3 * C, C), lambda b: (0, 0, 0)),
                pl.BlockSpec((1, C), lambda b: (0, 0)),
                pl.BlockSpec((3, 3 * C, C), lambda b: (0, 0, 0)),
                pl.BlockSpec((1, C), lambda b: (0, 0)),
            ],
            out_specs=pl.BlockSpec((1, H, W, C), lambda b: (b, 0, 0, 0)),
            scratch_shapes=[pltpu.VMEM((H + 2, W, 3 * C), jnp.bfloat16)],
        ),
        compiler_params=pltpu.CompilerParams(
            dimension_semantics=("parallel",),
            vmem_limit_bytes=32 * 1024 * 1024),
    )(x, w1_k, b1, w2_k, b2)

    return jnp.transpose(out_nhwc, (0, 3, 1, 2))               # back to NCHW


# ---------------- pure-JAX reference (for correctness check) ----------------
def ref_forward(x, w1, bn1, w2, bn2, eps=1e-5):
    def conv(x, w):
        return jax.lax.conv_general_dilated(
            x, w, window_strides=(1, 1), padding=((1, 1), (1, 1)),
            dimension_numbers=("NCHW", "OIHW", "NCHW"))

    def bn(x, params):
        g, b, m, v = (p[None, :, None, None] for p in params)
        return (x - m) / jnp.sqrt(v + eps) * g + b

    out = jax.nn.relu(bn(conv(x, w1), bn1))
    out = bn(conv(out, w2), bn2)
    return jax.nn.relu(out + x)


if __name__ == "__main__":
    B, C, H, W = 2, 4, 16, 16        # inplanes == planes == 4
    key = jax.random.PRNGKey(0)
    ks = jax.random.split(key, 11)

    x = jax.random.normal(ks[0], (B, C, H, W), jnp.float32)

    w1 = 0.1 * jax.random.normal(ks[1], (C, C, 3, 3), jnp.float32)
    w2 = 0.1 * jax.random.normal(ks[2], (C, C, 3, 3), jnp.float32)

    bn1 = (1.0 + 0.1 * jax.random.normal(ks[3], (C,), jnp.float32),   # gamma
           0.1 * jax.random.normal(ks[4], (C,), jnp.float32),         # beta
           0.1 * jax.random.normal(ks[5], (C,), jnp.float32),         # running_mean
           1.0 + 0.1 * jax.random.uniform(ks[6], (C,), jnp.float32))  # running_var
    bn2 = (1.0 + 0.1 * jax.random.normal(ks[7], (C,), jnp.float32),
           0.1 * jax.random.normal(ks[8], (C,), jnp.float32),
           0.1 * jax.random.normal(ks[9], (C,), jnp.float32),
           1.0 + 0.1 * jax.random.uniform(ks[10], (C,), jnp.float32))

    out = basic_block_v1b(x, w1, bn1, w2, bn2)
    out = jax.block_until_ready(out)

    ref = jax.block_until_ready(ref_forward(x, w1, bn1, w2, bn2))
    assert out.shape == (B, C, H, W)
    # bf16 matmul operands with f32 accumulation -> tolerance relaxed vs. f32 ref.
    max_err = float(jnp.max(jnp.abs(out - ref)))
    assert jnp.allclose(out, ref, atol=5e-2, rtol=5e-2), max_err

    print("KERNEL_OK")
</pallas_src>

<mosaic_0001>
module attributes {stable_mosaic.version = 11 : i64} {
  func.func @basic_block_kernel(%arg0: i32, %arg1: memref<1x16x16x4xf32, #tpu.memory_space<vmem>>, %arg2: memref<3x12x4xbf16, #tpu.memory_space<vmem>>, %arg3: memref<1x4xf32, #tpu.memory_space<vmem>>, %arg4: memref<3x12x4xbf16, #tpu.memory_space<vmem>>, %arg5: memref<1x4xf32, #tpu.memory_space<vmem>>, %arg6: memref<1x16x16x4xf32, #tpu.memory_space<vmem>>, %arg7: memref<18x16x12xbf16, #tpu.memory_space<vmem>>) attributes {dimension_semantics = [#tpu.dimension_semantics<parallel>], iteration_bounds = array<i64: 2>, scalar_prefetch = 0 : i64, scratch_operands = 1 : i64, tpu.core_type = #tpu.core_type<tc>, window_params = [{transform_indices = @transform_0, window_bounds = array<i64: 1, 16, 16, 4>}, {pipeline_mode = #tpu.pipeline_mode<synchronous>, transform_indices = @transform_1, window_bounds = array<i64: 3, 12, 4>}, {pipeline_mode = #tpu.pipeline_mode<synchronous>, transform_indices = @transform_2, window_bounds = array<i64: 1, 4>}, {pipeline_mode = #tpu.pipeline_mode<synchronous>, transform_indices = @transform_3, window_bounds = array<i64: 3, 12, 4>}, {pipeline_mode = #tpu.pipeline_mode<synchronous>, transform_indices = @transform_4, window_bounds = array<i64: 1, 4>}, {transform_indices = @transform_5, window_bounds = array<i64: 1, 16, 16, 4>}]} {
    %cst = arith.constant 0.000000e+00 : bf16
    %0 = vector.broadcast %cst : bf16 to vector<1x16x12xbf16>
    %c0 = arith.constant 0 : index
    %c0_0 = arith.constant 0 : index
    %c0_1 = arith.constant 0 : index
    %1 = vector.load %arg7[%c0, %c0_0, %c0_1] : memref<18x16x12xbf16, #tpu.memory_space<vmem>>, vector<1x16x12xbf16>
    tpu.vector_store %arg7[%c0, %c0_0, %c0_1], %0 {strides = array<i32>} : memref<18x16x12xbf16, #tpu.memory_space<vmem>>, vector<1x16x12xbf16>,
    %c17 = arith.constant 17 : index
    %c0_2 = arith.constant 0 : index
    %c0_3 = arith.constant 0 : index
    %2 = vector.load %arg7[%c17, %c0_2, %c0_3] : memref<18x16x12xbf16, #tpu.memory_space<vmem>>, vector<1x16x12xbf16>
    tpu.vector_store %arg7[%c17, %c0_2, %c0_3], %0 {strides = array<i32>} : memref<18x16x12xbf16, #tpu.memory_space<vmem>>, vector<1x16x12xbf16>,
    %cst_4 = arith.constant 0.000000e+00 : bf16
    %3 = vector.broadcast %cst_4 : bf16 to vector<18x1x4xbf16>
    %c0_5 = arith.constant 0 : index
    %c0_6 = arith.constant 0 : index
    %c0_7 = arith.constant 0 : index
    %4 = vector.load %arg7[%c0_5, %c0_6, %c0_7] : memref<18x16x12xbf16, #tpu.memory_space<vmem>>, vector<18x1x4xbf16>
    tpu.vector_store %arg7[%c0_5, %c0_6, %c0_7], %3 {strides = array<i32>} : memref<18x16x12xbf16, #tpu.memory_space<vmem>>, vector<18x1x4xbf16>,
    %c0_8 = arith.constant 0 : index
    %c15 = arith.constant 15 : index
    %c8 = arith.constant 8 : index
    %5 = vector.load %arg7[%c0_8, %c15, %c8] : memref<18x16x12xbf16, #tpu.memory_space<vmem>>, vector<18x1x4xbf16>
    tpu.vector_store %arg7[%c0_8, %c15, %c8], %3 {strides = array<i32>} : memref<18x16x12xbf16, #tpu.memory_space<vmem>>, vector<18x1x4xbf16>,
    %c0_9 = arith.constant 0 : index
    %c0_10 = arith.constant 0 : index
    %c0_11 = arith.constant 0 : index
    %c0_12 = arith.constant 0 : index
    %6 = vector.load %arg1[%c0_9, %c0_10, %c0_11, %c0_12] : memref<1x16x16x4xf32, #tpu.memory_space<vmem>>, vector<1x16x16x4xf32>
    %7 = vector.shape_cast %6 : vector<1x16x16x4xf32> to vector<16x16x4xf32>
    %8 = arith.truncf %7 : vector<16x16x4xf32> to vector<16x16x4xbf16>
    %c1 = arith.constant 1 : index
    %c0_13 = arith.constant 0 : index
    %c4 = arith.constant 4 : index
    %9 = vector.load %arg7[%c1, %c0_13, %c4] : memref<18x16x12xbf16, #tpu.memory_space<vmem>>, vector<16x16x4xbf16>
    tpu.vector_store %arg7[%c1, %c0_13, %c4], %8 {strides = array<i32>} : memref<18x16x12xbf16, #tpu.memory_space<vmem>>, vector<16x16x4xbf16>,
    %10 = vector.extract_strided_slice %8 {offsets = [0, 0, 0], sizes = [16, 15, 4], strides = [1, 1, 1]} : vector<16x16x4xbf16> to vector<16x15x4xbf16>
    %c1_14 = arith.constant 1 : index
    %c1_15 = arith.constant 1 : index
    %c0_16 = arith.constant 0 : index
    %11 = vector.load %arg7[%c1_14, %c1_15, %c0_16] : memref<18x16x12xbf16, #tpu.memory_space<vmem>>, vector<16x15x4xbf16>
    tpu.vector_store %arg7[%c1_14, %c1_15, %c0_16], %10 {strides = array<i32>} : memref<18x16x12xbf16, #tpu.memory_space<vmem>>, vector<16x15x4xbf16>,
    %12 = vector.extract_strided_slice %8 {offsets = [0, 1, 0], sizes = [16, 15, 4], strides = [1, 1, 1]} : vector<16x16x4xbf16> to vector<16x15x4xbf16>
    %c1_17 = arith.constant 1 : index
    %c0_18 = arith.constant 0 : index
    %c8_19 = arith.constant 8 : index
    %13 = vector.load %arg7[%c1_17, %c0_18, %c8_19] : memref<18x16x12xbf16, #tpu.memory_space<vmem>>, vector<16x15x4xbf16>
    tpu.vector_store %arg7[%c1_17, %c0_18, %c8_19], %12 {strides = array<i32>} : memref<18x16x12xbf16, #tpu.memory_space<vmem>>, vector<16x15x4xbf16>,
    %c0_20 = arith.constant 0 : index
    %c0_21 = arith.constant 0 : index
    %c0_22 = arith.constant 0 : index
    %14 = vector.load %arg7[%c0_20, %c0_21, %c0_22] : memref<18x16x12xbf16, #tpu.memory_space<vmem>>, vector<16x16x12xbf16>
    %15 = vector.shape_cast %14 : vector<16x16x12xbf16> to vector<256x12xbf16>
    %c0_23 = arith.constant 0 : index
    %c0_24 = arith.constant 0 : index
    %c0_25 = arith.constant 0 : index
    %16 = vector.load %arg2[%c0_23, %c0_24, %c0_25] : memref<3x12x4xbf16, #tpu.memory_space<vmem>>, vector<1x12x4xbf16>
    %17 = vector.shape_cast %16 : vector<1x12x4xbf16> to vector<12x4xbf16>
    %cst_26 = arith.constant dense<0.000000e+00> : vector<256x4xf32>
    %18 = tpu.matmul %15, %17, %cst_26 {dimension_numbers = #tpu.dot_dimension_numbers<[1], [0], [0], [1], [0, 0, 1, 1], [], []>} : vector<256x12xbf16>, vector<12x4xbf16>, vector<256x4xf32> -> vector<256x4xf32>
    %c1_27 = arith.constant 1 : index
    %c0_28 = arith.constant 0 : index
    %c0_29 = arith.constant 0 : index
    %19 = vector.load %arg7[%c1_27, %c0_28, %c0_29] : memref<18x16x12xbf16, #tpu.memory_space<vmem>>, vector<16x16x12xbf16>
    %20 = vector.shape_cast %19 : vector<16x16x12xbf16> to vector<256x12xbf16>
    %c1_30 = arith.constant 1 : index
    %c0_31 = arith.constant 0 : index
    %c0_32 = arith.constant 0 : index
    %21 = vector.load %arg2[%c1_30, %c0_31, %c0_32] : memref<3x12x4xbf16, #tpu.memory_space<vmem>>, vector<1x12x4xbf16>
    %22 = vector.shape_cast %21 : vector<1x12x4xbf16> to vector<12x4xbf16>
    %cst_33 = arith.constant dense<0.000000e+00> : vector<256x4xf32>
    %23 = tpu.matmul %20, %22, %cst_33 {dimension_numbers = #tpu.dot_dimension_numbers<[1], [0], [0], [1], [0, 0, 1, 1], [], []>} : vector<256x12xbf16>, vector<12x4xbf16>, vector<256x4xf32> -> vector<256x4xf32>
    %24 = arith.addf %18, %23 : vector<256x4xf32>
    %c2 = arith.constant 2 : index
    %c0_34 = arith.constant 0 : index
    %c0_35 = arith.constant 0 : index
    %25 = vector.load %arg7[%c2, %c0_34, %c0_35] : memref<18x16x12xbf16, #tpu.memory_space<vmem>>, vector<16x16x12xbf16>
    %26 = vector.shape_cast %25 : vector<16x16x12xbf16> to vector<256x12xbf16>
    %c2_36 = arith.constant 2 : index
    %c0_37 = arith.constant 0 : index
    %c0_38 = arith.constant 0 : index
    %27 = vector.load %arg2[%c2_36, %c0_37, %c0_38] : memref<3x12x4xbf16, #tpu.memory_space<vmem>>, vector<1x12x4xbf16>
    %28 = vector.shape_cast %27 : vector<1x12x4xbf16> to vector<12x4xbf16>
    %cst_39 = arith.constant dense<0.000000e+00> : vector<256x4xf32>
    %29 = tpu.matmul %26, %28, %cst_39 {dimension_numbers = #tpu.dot_dimension_numbers<[1], [0], [0], [1], [0, 0, 1, 1], [], []>} : vector<256x12xbf16>, vector<12x4xbf16>, vector<256x4xf32> -> vector<256x4xf32>
    %30 = arith.addf %24, %29 : vector<256x4xf32>
    %c0_40 = arith.constant 0 : index
    %c0_41 = arith.constant 0 : index
    %31 = vector.load %arg3[%c0_40, %c0_41] : memref<1x4xf32, #tpu.memory_space<vmem>>, vector<1x4xf32>
    %32 = vector.broadcast %31 : vector<1x4xf32> to vector<256x4xf32>
    %33 = arith.addf %30, %32 : vector<256x4xf32>
    %cst_42 = arith.constant 0.000000e+00 : f32
    %34 = vector.broadcast %cst_42 : f32 to vector<256x4xf32>
    %35 = arith.maximumf %33, %34 : vector<256x4xf32>
    %36 = arith.truncf %35 : vector<256x4xf32> to vector<256x4xbf16>
    %37 = vector.shape_cast %36 : vector<256x4xbf16> to vector<16x16x4xbf16>
    %c1_43 = arith.constant 1 : index
    %c0_44 = arith.constant 0 : index
    %c4_45 = arith.constant 4 : index
    %38 = vector.load %arg7[%c1_43, %c0_44, %c4_45] : memref<18x16x12xbf16, #tpu.memory_space<vmem>>, vector<16x16x4xbf16>
    tpu.vector_store %arg7[%c1_43, %c0_44, %c4_45], %37 {strides = array<i32>} : memref<18x16x12xbf16, #tpu.memory_space<vmem>>, vector<16x16x4xbf16>,
    %39 = vector.extract_strided_slice %37 {offsets = [0, 0, 0], sizes = [16, 15, 4], strides = [1, 1, 1]} : vector<16x16x4xbf16> to vector<16x15x4xbf16>
    %c1_46 = arith.constant 1 : index
    %c1_47 = arith.constant 1 : index
    %c0_48 = arith.constant 0 : index
    %40 = vector.load %arg7[%c1_46, %c1_47, %c0_48] : memref<18x16x12xbf16, #tpu.memory_space<vmem>>, vector<16x15x4xbf16>
    tpu.vector_store %arg7[%c1_46, %c1_47, %c0_48], %39 {strides = array<i32>} : memref<18x16x12xbf16, #tpu.memory_space<vmem>>, vector<16x15x4xbf16>,
    %41 = vector.extract_strided_slice %37 {offsets = [0, 1, 0], sizes = [16, 15, 4], strides = [1, 1, 1]} : vector<16x16x4xbf16> to vector<16x15x4xbf16>
    %c1_49 = arith.constant 1 : index
    %c0_50 = arith.constant 0 : index
    %c8_51 = arith.constant 8 : index
    %42 = vector.load %arg7[%c1_49, %c0_50, %c8_51] : memref<18x16x12xbf16, #tpu.memory_space<vmem>>, vector<16x15x4xbf16>
    tpu.vector_store %arg7[%c1_49, %c0_50, %c8_51], %41 {strides = array<i32>} : memref<18x16x12xbf16, #tpu.memory_space<vmem>>, vector<16x15x4xbf16>,
    %c0_52 = arith.constant 0 : index
    %c0_53 = arith.constant 0 : index
    %c0_54 = arith.constant 0 : index
    %43 = vector.load %arg7[%c0_52, %c0_53, %c0_54] : memref<18x16x12xbf16, #tpu.memory_space<vmem>>, vector<16x16x12xbf16>
    %44 = vector.shape_cast %43 : vector<16x16x12xbf16> to vector<256x12xbf16>
    %c0_55 = arith.constant 0 : index
    %c0_56 = arith.constant 0 : index
    %c0_57 = arith.constant 0 : index
    %45 = vector.load %arg4[%c0_55, %c0_56, %c0_57] : memref<3x12x4xbf16, #tpu.memory_space<vmem>>, vector<1x12x4xbf16>
    %46 = vector.shape_cast %45 : vector<1x12x4xbf16> to vector<12x4xbf16>
    %cst_58 = arith.constant dense<0.000000e+00> : vector<256x4xf32>
    %47 = tpu.matmul %44, %46, %cst_58 {dimension_numbers = #tpu.dot_dimension_numbers<[1], [0], [0], [1], [0, 0, 1, 1], [], []>} : vector<256x12xbf16>, vector<12x4xbf16>, vector<256x4xf32> -> vector<256x4xf32>
    %c1_59 = arith.constant 1 : index
    %c0_60 = arith.constant 0 : index
    %c0_61 = arith.constant 0 : index
    %48 = vector.load %arg7[%c1_59, %c0_60, %c0_61] : memref<18x16x12xbf16, #tpu.memory_space<vmem>>, vector<16x16x12xbf16>
    %49 = vector.shape_cast %48 : vector<16x16x12xbf16> to vector<256x12xbf16>
    %c1_62 = arith.constant 1 : index
    %c0_63 = arith.constant 0 : index
    %c0_64 = arith.constant 0 : index
    %50 = vector.load %arg4[%c1_62, %c0_63, %c0_64] : memref<3x12x4xbf16, #tpu.memory_space<vmem>>, vector<1x12x4xbf16>
    %51 = vector.shape_cast %50 : vector<1x12x4xbf16> to vector<12x4xbf16>
    %cst_65 = arith.constant dense<0.000000e+00> : vector<256x4xf32>
    %52 = tpu.matmul %49, %51, %cst_65 {dimension_numbers = #tpu.dot_dimension_numbers<[1], [0], [0], [1], [0, 0, 1, 1], [], []>} : vector<256x12xbf16>, vector<12x4xbf16>, vector<256x4xf32> -> vector<256x4xf32>
    %53 = arith.addf %47, %52 : vector<256x4xf32>
    %c2_66 = arith.constant 2 : index
    %c0_67 = arith.constant 0 : index
    %c0_68 = arith.constant 0 : index
    %54 = vector.load %arg7[%c2_66, %c0_67, %c0_68] : memref<18x16x12xbf16, #tpu.memory_space<vmem>>, vector<16x16x12xbf16>
    %55 = vector.shape_cast %54 : vector<16x16x12xbf16> to vector<256x12xbf16>
    %c2_69 = arith.constant 2 : index
    %c0_70 = arith.constant 0 : index
    %c0_71 = arith.constant 0 : index
    %56 = vector.load %arg4[%c2_69, %c0_70, %c0_71] : memref<3x12x4xbf16, #tpu.memory_space<vmem>>, vector<1x12x4xbf16>
    %57 = vector.shape_cast %56 : vector<1x12x4xbf16> to vector<12x4xbf16>
    %cst_72 = arith.constant dense<0.000000e+00> : vector<256x4xf32>
    %58 = tpu.matmul %55, %57, %cst_72 {dimension_numbers = #tpu.dot_dimension_numbers<[1], [0], [0], [1], [0, 0, 1, 1], [], []>} : vector<256x12xbf16>, vector<12x4xbf16>, vector<256x4xf32> -> vector<256x4xf32>
    %59 = arith.addf %53, %58 : vector<256x4xf32>
    %c0_73 = arith.constant 0 : index
    %c0_74 = arith.constant 0 : index
    %60 = vector.load %arg5[%c0_73, %c0_74] : memref<1x4xf32, #tpu.memory_space<vmem>>, vector<1x4xf32>
    %61 = vector.broadcast %60 : vector<1x4xf32> to vector<256x4xf32>
    %62 = arith.addf %59, %61 : vector<256x4xf32>
    %63 = vector.shape_cast %62 : vector<256x4xf32> to vector<16x16x4xf32>
    %c0_75 = arith.constant 0 : index
    %c0_76 = arith.constant 0 : index
    %c0_77 = arith.constant 0 : index
    %c0_78 = arith.constant 0 : index
    %64 = vector.load %arg1[%c0_75, %c0_76, %c0_77, %c0_78] : memref<1x16x16x4xf32, #tpu.memory_space<vmem>>, vector<1x16x16x4xf32>
    %65 = vector.shape_cast %64 : vector<1x16x16x4xf32> to vector<16x16x4xf32>
    %66 = arith.addf %63, %65 : vector<16x16x4xf32>
    %cst_79 = arith.constant 0.000000e+00 : f32
    %67 = vector.broadcast %cst_79 : f32 to vector<16x16x4xf32>
    %68 = arith.maximumf %66, %67 : vector<16x16x4xf32>
    %c0_80 = arith.constant 0 : index
    %c0_81 = arith.constant 0 : index
    %c0_82 = arith.constant 0 : index
    %c0_83 = arith.constant 0 : index
    %69 = vector.load %arg6[%c0_80, %c0_81, %c0_82, %c0_83] : memref<1x16x16x4xf32, #tpu.memory_space<vmem>>, vector<1x16x16x4xf32>
    %70 = vector.shape_cast %69 : vector<1x16x16x4xf32> to vector<16x16x4xf32>
    %71 = vector.shape_cast %68 : vector<16x16x4xf32> to vector<1x16x16x4xf32>
    tpu.vector_store %arg6[%c0_80, %c0_81, %c0_82, %c0_83], %71 {strides = array<i32>} : memref<1x16x16x4xf32, #tpu.memory_space<vmem>>, vector<1x16x16x4xf32>,
    return
  }
  func.func @transform_0(%arg0: i32) -> (i32, i32, i32, i32) {
    %c0_i32 = arith.constant 0 : i32
    %c0_i32_0 = arith.constant 0 : i32
    %c0_i32_1 = arith.constant 0 : i32
    %c0_i32_2 = arith.constant 0 : i32
    return %arg0, %c0_i32, %c0_i32_0, %c0_i32_1 : i32, i32, i32, i32
  }
  func.func @transform_1(%arg0: i32) -> (i32, i32, i32) {
    %c0_i32 = arith.constant 0 : i32
    %c0_i32_0 = arith.constant 0 : i32
    %c0_i32_1 = arith.constant 0 : i32
    %c0_i32_2 = arith.constant 0 : i32
    return %c0_i32, %c0_i32_0, %c0_i32_1 : i32, i32, i32
  }
  func.func @transform_2(%arg0: i32) -> (i32, i32) {
    %c0_i32 = arith.constant 0 : i32
    %c0_i32_0 = arith.constant 0 : i32
    %c0_i32_1 = arith.constant 0 : i32
    return %c0_i32, %c0_i32_0 : i32, i32
  }
  func.func @transform_3(%arg0: i32) -> (i32, i32, i32) {
    %c0_i32 = arith.constant 0 : i32
    %c0_i32_0 = arith.constant 0 : i32
    %c0_i32_1 = arith.constant 0 : i32
    %c0_i32_2 = arith.constant 0 : i32
    return %c0_i32, %c0_i32_0, %c0_i32_1 : i32, i32, i32
  }
  func.func @transform_4(%arg0: i32) -> (i32, i32) {
    %c0_i32 = arith.constant 0 : i32
    %c0_i32_0 = arith.constant 0 : i32
    %c0_i32_1 = arith.constant 0 : i32
    return %c0_i32, %c0_i32_0 : i32, i32
  }
  func.func @transform_5(%arg0: i32) -> (i32, i32, i32, i32) {
    %c0_i32 = arith.constant 0 : i32
    %c0_i32_0 = arith.constant 0 : i32
    %c0_i32_1 = arith.constant 0 : i32
    %c0_i32_2 = arith.constant 0 : i32
    return %arg0, %c0_i32, %c0_i32_0, %c0_i32_1 : i32, i32, i32, i32
  }
}

</mosaic_0001>

<llo_original>
// kernel: tpu_custom_call.1
$region0: #{tpu_custom_call.1}
  #allocation0 [shape = 'u32[]', space=smem, size = 0x4, offset = 0x4, fixed_abs, tag = 'smem constant byte address 0x4 - core index']
  #allocation1 [shape = 'u32[72,128]{1,0:T(1,128)}', space=vmem, size = 0x9000, scoped, tag = 'internal scratch']
  #allocation2 [shape = 'bf16[18,16,12]{2,1,0:T(8,128)(2,1)}', space=vmem, size = 0x12000, scoped, tag = 'scratch operand']
  %s0 = inlined_call_operand.vmem [shape: f32[2,16,16,4], index: 0, kind: input, shape index: {}]
  %s1 = inlined_call_operand.vmem [shape: bf16[3,12,4], index: 1, kind: input, shape index: {}]
  %s2 = inlined_call_operand.vmem [shape: f32[1,4], index: 2, kind: input, shape index: {}]
  %s3 = inlined_call_operand.vmem [shape: bf16[3,12,4], index: 3, kind: input, shape index: {}]
  %s4 = inlined_call_operand.vmem [shape: f32[1,4], index: 4, kind: input, shape index: {}]
  %s5 = inlined_call_operand.vmem [shape: f32[2,16,16,4], index: 5, kind: output, shape index: {}]
  %s6 = sld [smem:[#allocation0]]
  $region53: #{tpu_custom_call.1} parent=0
    _
  %s8 = ssub.s32 1, %s6
  %s9 = scalar_select 0, %s8, %s6
  loop: start=0, step=1, limit=4
  $region2: #{tpu_custom_call.1} parent=0 // loop_pre_header
    _
  $region3: #{tpu_custom_call.1} parent=0 // loop_header
    %s11 = sphi 0, %s15
    %p12 = scmp.ge.s32.totalorder %s11, 4
    %s21 = sphi 0, %s23
    %s24 = sphi 0, %s21
    %s25 = sphi 0, %s24
    %s41 = sphi 0, %s25
    %s45 = sphi 0, %s45
    %s47 = sphi 0, %s45
    %s48 = sphi 0, %s47
    %s62 = sphi 0, %s48
    %s66 = sphi 0, %s66
    %s68 = sphi 0, %s66
    %s69 = sphi 0, %s68
    %s83 = sphi 0, %s69
    %s87 = sphi 0, %s87
    %s89 = sphi 0, %s87
    %s90 = sphi 0, %s89
    %s104 = sphi 0, %s90
    %s108 = sphi 0, %s108
    %s110 = sphi 0, %s108
    %s111 = sphi 0, %s110
    %s125 = sphi 0, %s111
    %s131 = sphi 0, %s133
    %s134 = sphi 0, %s131
    %s135 = sphi 0, %s134
    %s151 = sphi 0, %s135
  $region4: #{tpu_custom_call.1} parent=0 // loop_header_branch
    %14 = sbr.rel (%p12) target = $region8
  $region5: #{tpu_custom_call.1} parent=0 // loop_body
    %s16 = ssub.s32 %s11, 1
    %s17 = ssub.s32 %s11, 2
    %s18 = sadd.s32 %s11, 1
    %s19 = ssub.s32 %s11, %s18
    %p20 = scmp.eq.s32.totalorder %s19, 0
    %s22 = sadd.s32 %s21, 1
    %s23 = scalar_select %p20, %s21, %s22
    %p26 = pneg %p20
    %p27 = scmp.eq.s32.totalorder %s11, 1
    %p28 = por %p26, %p27
    %p29 = scmp.ne.s32.totalorder %s21, %s24
    %p30 = scmp.eq.s32.totalorder %s11, 0
    %p31 = por %p29, %p30
    %p32 = scmp.ne.s32.totalorder %s21, %s24
    %p33 = scmp.eq.s32.totalorder %s16, 1
    %p34 = por %p32, %p33
    %p35 = scmp.ne.s32.totalorder %s24, %s25
    %p36 = scmp.eq.s32.totalorder %s16, 0
    %p37 = por %p35, %p36
    %p38 = scmp.ne.s32.totalorder %s24, %s25
    %p39 = scmp.eq.s32.totalorder %s17, 1
    %p40 = por %p38, %p39
    %p42 = scmp.ne.s32.totalorder %s25, %s41
    %p43 = scmp.eq.s32.totalorder %s17, 0
    %p44 = por %p42, %p43
    %s46 = sadd.s32 %s45, 1
    %p49 = scmp.eq.s32.totalorder %s11, 1
    %p50 = scmp.ne.s32.totalorder %s45, %s47
    %p51 = scmp.eq.s32.totalorder %s11, 0
    %p52 = por %p50, %p51
    %p53 = scmp.ne.s32.totalorder %s45, %s47
    %p54 = scmp.eq.s32.totalorder %s16, 1
    %p55 = por %p53, %p54
    %p56 = scmp.ne.s32.totalorder %s47, %s48
    %p57 = scmp.eq.s32.totalorder %s16, 0
    %p58 = por %p56, %p57
    %p59 = scmp.ne.s32.totalorder %s47, %s48
    %p60 = scmp.eq.s32.totalorder %s17, 1
    %p61 = por %p59, %p60
    %p63 = scmp.ne.s32.totalorder %s48, %s62
    %p64 = scmp.eq.s32.totalorder %s17, 0
    %p65 = por %p63, %p64
    %s67 = sadd.s32 %s66, 1
    %p70 = scmp.eq.s32.totalorder %s11, 1
    %p71 = scmp.ne.s32.totalorder %s66, %s68
    %p72 = scmp.eq.s32.totalorder %s11, 0
    %p73 = por %p71, %p72
    %p74 = scmp.ne.s32.totalorder %s66, %s68
    %p75 = scmp.eq.s32.totalorder %s16, 1
    %p76 = por %p74, %p75
    %p77 = scmp.ne.s32.totalorder %s68, %s69
    %p78 = scmp.eq.s32.totalorder %s16, 0
    %p79 = por %p77, %p78
    %p80 = scmp.ne.s32.totalorder %s68, %s69
    %p81 = scmp.eq.s32.totalorder %s17, 1
    %p82 = por %p80, %p81
    %p84 = scmp.ne.s32.totalorder %s69, %s83
    %p85 = scmp.eq.s32.totalorder %s17, 0
    %p86 = por %p84, %p85
    %s88 = sadd.s32 %s87, 1
    %p91 = scmp.eq.s32.totalorder %s11, 1
    %p92 = scmp.ne.s32.totalorder %s87, %s89
    %p93 = scmp.eq.s32.totalorder %s11, 0
    %p94 = por %p92, %p93
    %p95 = scmp.ne.s32.totalorder %s87, %s89
    %p96 = scmp.eq.s32.totalorder %s16, 1
    %p97 = por %p95, %p96
    %p98 = scmp.ne.s32.totalorder %s89, %s90
    %p99 = scmp.eq.s32.totalorder %s16, 0
    %p100 = por %p98, %p99
    %p101 = scmp.ne.s32.totalorder %s89, %s90
    %p102 = scmp.eq.s32.totalorder %s17, 1
    %p103 = por %p101, %p102
    %p105 = scmp.ne.s32.totalorder %s90, %s104
    %p106 = scmp.eq.s32.totalorder %s17, 0
    %p107 = por %p105, %p106
    %s109 = sadd.s32 %s108, 1
    %p112 = scmp.eq.s32.totalorder %s11, 1
    %p113 = scmp.ne.s32.totalorder %s108, %s110
    %p114 = scmp.eq.s32.totalorder %s11, 0
    %p115 = por %p113, %p114
    %p116 = scmp.ne.s32.totalorder %s108, %s110
    %p117 = scmp.eq.s32.totalorder %s16, 1
    %p118 = por %p116, %p117
    %p119 = scmp.ne.s32.totalorder %s110, %s111
    %p120 = scmp.eq.s32.totalorder %s16, 0
    %p121 = por %p119, %p120
    %p122 = scmp.ne.s32.totalorder %s110, %s111
    %p123 = scmp.eq.s32.totalorder %s17, 1
    %p124 = por %p122, %p123
    %p126 = scmp.ne.s32.totalorder %s111, %s125
    %p127 = scmp.eq.s32.totalorder %s17, 0
    %p128 = por %p126, %p127
    %s129 = ssub.s32 %s11, %s18
    %p130 = scmp.eq.s32.totalorder %s129, 0
    %s132 = sadd.s32 %s131, 1
    %s133 = scalar_select %p130, %s131, %s132
    %p136 = pneg %p130
    %p137 = scmp.eq.s32.totalorder %s11, 1
    %p138 = por %p136, %p137
    %p139 = scmp.ne.s32.totalorder %s131, %s134
    %p140 = scmp.eq.s32.totalorder %s11, 0
    %p141 = por %p139, %p140
    %p142 = scmp.ne.s32.totalorder %s131, %s134
    %p143 = scmp.eq.s32.totalorder %s16, 1
    %p144 = por %p142, %p143
    %p145 = scmp.ne.s32.totalorder %s134, %s135
    %p146 = scmp.eq.s32.totalorder %s16, 0
    %p147 = por %p145, %p146
    %p148 = scmp.ne.s32.totalorder %s134, %s135
    %p149 = scmp.eq.s32.totalorder %s17, 1
    %p150 = por %p148, %p149
    %p152 = scmp.ne.s32.totalorder %s135, %s151
    %p153 = scmp.eq.s32.totalorder %s17, 0
    %p154 = por %p152, %p153
    %p155 = scmp.le.s32.totalorder 1, %s11
    %p156 = scmp.lt.s32.totalorder %s11, 3
    %p157 = pnand %p155, %p156
    %p158 = pneg %p157
    // Predicated region
    $region9: #{tpu_custom_call.1} parent=5 // pred_check
      _
    $region10: #{tpu_custom_call.1} parent=5 // pred_check_branch
      %160 = sbr.rel (%p157) target = $region12
    $region11: #{tpu_custom_call.1} parent=5 // pred_region
      %s161 = ssub.s32 %s11, 1
      // Predicated region
      $region13: #{tpu_custom_call.1} parent=11 // pred_check
        %p162 = pneg %p58
      $region14: #{tpu_custom_call.1} parent=11 // pred_check_branch
        %164 = sbr.rel (%p162) target = $region16
      $region15: #{tpu_custom_call.1} parent=11 // pred_region
        _
      $region16: #{tpu_custom_call.1} parent=11 // pred_fallthru
        _
      // Predicated region
      $region17: #{tpu_custom_call.1} parent=11 // pred_check
        %p165 = pneg %p79
      $region18: #{tpu_custom_call.1} parent=11 // pred_check_branch
        %167 = sbr.rel (%p165) target = $region20
      $region19: #{tpu_custom_call.1} parent=11 // pred_region
        _
      $region20: #{tpu_custom_call.1} parent=11 // pred_fallthru
        _
      // Predicated region
      $region21: #{tpu_custom_call.1} parent=11 // pred_check
        %p168 = pneg %p100
      $region22: #{tpu_custom_call.1} parent=11 // pred_check_branch
        %170 = sbr.rel (%p168) target = $region24
      $region23: #{tpu_custom_call.1} parent=11 // pred_region
        _
      $region24: #{tpu_custom_call.1} parent=11 // pred_fallthru
        _
      // Predicated region
      $region25: #{tpu_custom_call.1} parent=11 // pred_check
        %p171 = pneg %p121
      $region26: #{tpu_custom_call.1} parent=11 // pred_check_branch
        %173 = sbr.rel (%p171) target = $region28
      $region27: #{tpu_custom_call.1} parent=11 // pred_region
        _
      $region28: #{tpu_custom_call.1} parent=11 // pred_fallthru
        _
    $region12: #{tpu_custom_call.1} parent=5 // pred_fallthru
      _
    %p174 = scmp.lt.s32.totalorder %s11, 2
    // Predicated region
    $region29: #{tpu_custom_call.1} parent=5 // pred_check
      %p175 = pneg %p174
    $region30: #{tpu_custom_call.1} parent=5 // pred_check_branch
      %177 = sbr.rel (%p175) target = $region32
    $region31: #{tpu_custom_call.1} parent=5 // pred_region
      // Predicated region
      $region33: #{tpu_custom_call.1} parent=31 // pred_check
        %p178 = pneg %p31
      $region34: #{tpu_custom_call.1} parent=31 // pred_check_branch
        %180 = sbr.rel (%p178) target = $region36
      $region35: #{tpu_custom_call.1} parent=31 // pred_region
        %p181 = scmp.lt.s32.totalorder %s11, 1
        %s182 = scalar_select %p181, %s11, 1
        %s183 = smul.addr %s182, 32
        %s184 = smul.addr %s183, 8
        %s185 = scalar_lea.vmem %s0, %s184
      $region36: #{tpu_custom_call.1} parent=31 // pred_fallthru
        _
    $region32: #{tpu_custom_call.1} parent=5 // pred_fallthru
      _
    %p186 = scmp.le.s32.totalorder 1, %s11
    %p187 = scmp.lt.s32.totalorder %s11, 3
    %p188 = pnand %p186, %p187
    %p189 = pneg %p188
    // Predicated region
    $region37: #{tpu_custom_call.1} parent=5 // pred_check
      _
    $region38: #{tpu_custom_call.1} parent=5 // pred_check_branch
      %191 = sbr.rel (%p188) target = $region40
    $region39: #{tpu_custom_call.1} parent=5 // pred_region
      %s192 = ssub.s32 %s11, 1
      %p193 = scmp.lt.s32.totalorder %s16, 1
      %s194 = scalar_select %p193, %s16, 1
      %s195 = smul.addr %s194, 32
      %s196 = smul.addr %s195, 8
      %s197 = scalar_lea.vmem %s0, %s196
      %p198 = pneg %p37
      %p199 = pneg %p34
      %p200 = pneg %p58
      %p201 = pneg %p55
      %p202 = pneg %p79
      %p203 = pneg %p76
      %p204 = pneg %p100
      %p205 = pneg %p97
      %p206 = pneg %p121
      %p207 = pneg %p118
      %p208 = pneg %p147
      %p209 = pneg %p144
      %p210 = scmp.lt.s32.totalorder %s16, 1
      %s211 = scalar_select %p210, %s16, 1
      %s212 = smul.addr %s211, 32
      %s213 = smul.addr %s212, 8
      %s214 = scalar_lea.vmem %s5, %s213
      %p215 = scmp.lt.s32.totalorder %s16, 1
      %s216 = scalar_select %p215, %s16, 1
      %s217 = smul.addr %s216, 32
      %s218 = smul.addr %s217, 8
      %s219 = scalar_lea.vmem %s0, %s218
      %p220 = scmp.lt.s32.totalorder %s16, 1
      %s221 = scalar_select %p220, %s16, 1
      %s222 = smul.addr %s221, 32
      %s223 = smul.addr %s222, 8
      %s224 = scalar_lea.vmem %s5, %s223
      %vm226 = vcmask 93184
      %227 = vst.msk [vmem:[#allocation2] sm:$0xf] %vm226, 0
      %228 = vst.msk [vmem:[#allocation2 + $0x4] sm:$0xf] %vm226, 0
      %s229 = scalar_lea.vmem [#allocation2], 136
      %230 = vst.msk [vmem:[%s229] sm:$0xf] %vm226, 0
      %231 = vst.msk [vmem:[%s229 + $0x4] sm:$0xf] %vm226, 0
      %vm232 = vcmask 24576
      %vm233 = vsmask.f32 256
      %vm234 = vmand %vm232, %vm233
      %v235 = vld [vmem:[#allocation2] sm:$0x1]
      %v236 = vsel %vm234, 0, %v235
      %237 = vst [vmem:[#allocation2] sm:$0x1] %v236
      %v238 = vld [vmem:[#allocation2 + $0x8] sm:$0x1]
      %v239 = vsel %vm234, 0, %v238
      %240 = vst [vmem:[#allocation2 + $0x8] sm:$0x1] %v239
      %v241 = vld [vmem:[#allocation2 + $0x10] sm:$0x1]
      %v242 = vsel %vm234, 0, %v241
      %243 = vst [vmem:[#allocation2 + $0x10] sm:$0x1] %v242
      %v244 = vld [vmem:[#allocation2 + $0x18] sm:$0x1]
      %v245 = vsel %vm234, 0, %v244
      %246 = vst [vmem:[#allocation2 + $0x18] sm:$0x1] %v245
      %v247 = vld [vmem:[#allocation2 + $0x20] sm:$0x1]
      %v248 = vsel %vm234, 0, %v247
      %249 = vst [vmem:[#allocation2 + $0x20] sm:$0x1] %v248
      %v250 = vld [vmem:[#allocation2 + $0x28] sm:$0x1]
      %v251 = vsel %vm234, 0, %v250
      %252 = vst [vmem:[#allocation2 + $0x28] sm:$0x1] %v251
      %v253 = vld [vmem:[#allocation2 + $0x30] sm:$0x1]
      %v254 = vsel %vm234, 0, %v253
      %255 = vst [vmem:[#allocation2 + $0x30] sm:$0x1] %v254
      %v256 = vld [vmem:[#allocation2 + $0x38] sm:$0x1]
      %v257 = vsel %vm234, 0, %v256
      %258 = vst [vmem:[#allocation2 + $0x38] sm:$0x1] %v257
      %v259 = vld [vmem:[#allocation2 + $0x40] sm:$0x1]
      %v260 = vsel %vm234, 0, %v259
      %261 = vst [vmem:[#allocation2 + $0x40] sm:$0x1] %v260
      %v262 = vld [vmem:[#allocation2 + $0x48] sm:$0x1]
      %v263 = vsel %vm234, 0, %v262
      %264 = vst [vmem:[#allocation2 + $0x48] sm:$0x1] %v263
      %v265 = vld [vmem:[#allocation2 + $0x50] sm:$0x1]
      %v266 = vsel %vm234, 0, %v265
      %267 = vst [vmem:[#allocation2 + $0x50] sm:$0x1] %v266
      %v268 = vld [vmem:[#allocation2 + $0x58] sm:$0x1]
      %v269 = vsel %vm234, 0, %v268
      %270 = vst [vmem:[#allocation2 + $0x58] sm:$0x1] %v269
      %v271 = vld [vmem:[#allocation2 + $0x60] sm:$0x1]
      %v272 = vsel %vm234, 0, %v271
      %273 = vst [vmem:[#allocation2 + $0x60] sm:$0x1] %v272
      %v274 = vld [vmem:[#allocation2 + $0x68] sm:$0x1]
      %v275 = vsel %vm234, 0, %v274
      %276 = vst [vmem:[#allocation2 + $0x68] sm:$0x1] %v275
      %v277 = vld [vmem:[#allocation2 + $0x70] sm:$0x1]
      %v278 = vsel %vm234, 0, %v277
      %279 = vst [vmem:[#allocation2 + $0x70] sm:$0x1] %v278
      %v280 = vld [vmem:[#allocation2 + $0x78] sm:$0x1]
      %v281 = vsel %vm234, 0, %v280
      %282 = vst [vmem:[#allocation2 + $0x78] sm:$0x1] %v281
      %v283 = vld [vmem:[#allocation2 + $0x80] sm:$0x1]
      %v284 = vsel %vm234, 0, %v283
      %285 = vst [vmem:[#allocation2 + $0x80] sm:$0x1] %v284
      %v286 = vld [vmem:[#allocation2 + $0x88] sm:$0x1]
      %v287 = vsel %vm234, 0, %v286
      %288 = vst [vmem:[#allocation2 + $0x88] sm:$0x1] %v287
      %vm289 = vcmask 93251
      %vm290 = vsmask.f32 7950
      %vm291 = vmand %vm289, %vm290
      %v292 = vld [vmem:[#allocation2 + $0x4] sm:$0x8]
      %v293 = vsel %vm291, 0, %v292
      %294 = vst [vmem:[#allocation2 + $0x4] sm:$0x8] %v293
      %v295 = vld [vmem:[#allocation2 + $0xc] sm:$0x8]
      %v296 = vsel %vm291, 0, %v295
      %297 = vst [vmem:[#allocation2 + $0xc] sm:$0x8] %v296
      %v298 = vld [vmem:[#allocation2 + $0x14] sm:$0x8]
      %v299 = vsel %vm291, 0, %v298
      %300 = vst [vmem:[#allocation2 + $0x14] sm:$0x8] %v299
      %v301 = vld [vmem:[#allocation2 + $0x1c] sm:$0x8]
      %v302 = vsel %vm291, 0, %v301
      %303 = vst [vmem:[#allocation2 + $0x1c] sm:$0x8] %v302
      %v304 = vld [vmem:[#allocation2 + $0x24] sm:$0x8]
      %v305 = vsel %vm291, 0, %v304
      %306 = vst [vmem:[#allocation2 + $0x24] sm:$0x8] %v305
      %v307 = vld [vmem:[#allocation2 + $0x2c] sm:$0x8]
      %v308 = vsel %vm291, 0, %v307
      %309 = vst [vmem:[#allocation2 + $0x2c] sm:$0x8] %v308
      %v310 = vld [vmem:[#allocation2 + $0x34] sm:$0x8]
      %v311 = vsel %vm291, 0, %v310
      %312 = vst [vmem:[#allocation2 + $0x34] sm:$0x8] %v311
      %v313 = vld [vmem:[#allocation2 + $0x3c] sm:$0x8]
      %v314 = vsel %vm291, 0, %v313
      %315 = vst [vmem:[#allocation2 + $0x3c] sm:$0x8] %v314
      %v316 = vld [vmem:[#allocation2 + $0x44] sm:$0x8]
      %v317 = vsel %vm291, 0, %v316
      %318 = vst [vmem:[#allocation2 + $0x44] sm:$0x8] %v317
      %v319 = vld [vmem:[#allocation2 + $0x4c] sm:$0x8]
      %v320 = vsel %vm291, 0, %v319
      %321 = vst [vmem:[#allocation2 + $0x4c] sm:$0x8] %v320
      %v322 = vld [vmem:[#allocation2 + $0x54] sm:$0x8]
      %v323 = vsel %vm291, 0, %v322
      %324 = vst [vmem:[#allocation2 + $0x54] sm:$0x8] %v323
      %v325 = vld [vmem:[#allocation2 + $0x5c] sm:$0x8]
      %v326 = vsel %vm291, 0, %v325
      %327 = vst [vmem:[#allocation2 + $0x5c] sm:$0x8] %v326
      %v328 = vld [vmem:[#allocation2 + $0x64] sm:$0x8]
      %v329 = vsel %vm291, 0, %v328
      %330 = vst [vmem:[#allocation2 + $0x64] sm:$0x8] %v329
      %v331 = vld [vmem:[#allocation2 + $0x6c] sm:$0x8]
      %v332 = vsel %vm291, 0, %v331
      %333 = vst [vmem:[#allocation2 + $0x6c] sm:$0x8] %v332
      %v334 = vld [vmem:[#allocation2 + $0x74] sm:$0x8]
      %v335 = vsel %vm291, 0, %v334
      %336 = vst [vmem:[#allocation2 + $0x74] sm:$0x8] %v335
      %v337 = vld [vmem:[#allocation2 + $0x7c] sm:$0x8]
      %v338 = vsel %vm291, 0, %v337
      %339 = vst [vmem:[#allocation2 + $0x7c] sm:$0x8] %v338
      %v340 = vld [vmem:[#allocation2 + $0x84] sm:$0x8]
      %v341 = vsel %vm291, 0, %v340
      %342 = vst [vmem:[#allocation2 + $0x84] sm:$0x8] %v341
      %v343 = vld [vmem:[#allocation2 + $0x8c] sm:$0x8]
      %v344 = vsel %vm291, 0, %v343
      %345 = vst [vmem:[#allocation2 + $0x8c] sm:$0x8] %v344
      %v346 = vld [vmem:[%s219] sm:$0xff]
      %v347 = vld [vmem:[%s219 + $0x8] sm:$0xff]
      %v348 = vld [vmem:[%s219 + $0x10] sm:$0xff]
      %v349 = vld [vmem:[%s219 + $0x18] sm:$0xff]
      %v350 = vld [vmem:[%s219 + $0x20] sm:$0xff]
      %v351 = vld [vmem:[%s219 + $0x28] sm:$0xff]
      %v352 = vld [vmem:[%s219 + $0x30] sm:$0xff]
      %v353 = vld [vmem:[%s219 + $0x38] sm:$0xff]
      %v354 = vld [vmem:[%s219 + $0x40] sm:$0xff]
      %v355 = vld [vmem:[%s219 + $0x48] sm:$0xff]
      %v356 = vld [vmem:[%s219 + $0x50] sm:$0xff]
      %v357 = vld [vmem:[%s219 + $0x58] sm:$0xff]
      %v358 = vld [vmem:[%s219 + $0x60] sm:$0xff]
      %v359 = vld [vmem:[%s219 + $0x68] sm:$0xff]
      %v360 = vld [vmem:[%s219 + $0x70] sm:$0xff]
      %v361 = vld [vmem:[%s219 + $0x78] sm:$0xff]
      %v362 = vld [vmem:[%s219 + $0x80] sm:$0xff]
      %v363 = vld [vmem:[%s219 + $0x88] sm:$0xff]
      %v364 = vld [vmem:[%s219 + $0x90] sm:$0xff]
      %v365 = vld [vmem:[%s219 + $0x98] sm:$0xff]
      %v366 = vld [vmem:[%s219 + $0xa0] sm:$0xff]
      %v367 = vld [vmem:[%s219 + $0xa8] sm:$0xff]
      %v368 = vld [vmem:[%s219 + $0xb0] sm:$0xff]
      %v369 = vld [vmem:[%s219 + $0xb8] sm:$0xff]
      %v370 = vld [vmem:[%s219 + $0xc0] sm:$0xff]
      %v371 = vld [vmem:[%s219 + $0xc8] sm:$0xff]
      %v372 = vld [vmem:[%s219 + $0xd0] sm:$0xff]
      %v373 = vld [vmem:[%s219 + $0xd8] sm:$0xff]
      %v374 = vld [vmem:[%s219 + $0xe0] sm:$0xff]
      %v375 = vld [vmem:[%s219 + $0xe8] sm:$0xff]
      %v376 = vld [vmem:[%s219 + $0xf0] sm:$0xff]
      %v377 = vld [vmem:[%s219 + $0xf8] sm:$0xff]
      %v378 = vpack.c.bf16 %v346, %v346
      %v379 = vpack.c.bf16 %v347, %v347
      %v380 = vpack.c.bf16 %v348, %v348
      %v381 = vpack.c.bf16 %v349, %v349
      %v382 = vpack.c.bf16 %v350, %v350
      %v383 = vpack.c.bf16 %v351, %v351
      %v384 = vpack.c.bf16 %v352, %v352
      %v385 = vpack.c.bf16 %v353, %v353
      %v386 = vpack.c.bf16 %v354, %v354
      %v387 = vpack.c.bf16 %v355, %v355
      %v388 = vpack.c.bf16 %v356, %v356
      %v389 = vpack.c.bf16 %v357, %v357
      %v390 = vpack.c.bf16 %v358, %v358
      %v391 = vpack.c.bf16 %v359, %v359
      %v392 = vpack.c.bf16 %v360, %v360
      %v393 = vpack.c.bf16 %v361, %v361
      %v394 = vpack.c.bf16 %v362, %v362
      %v395 = vpack.c.bf16 %v363, %v363
      %v396 = vpack.c.bf16 %v364, %v364
      %v397 = vpack.c.bf16 %v365, %v365
      %v398 = vpack.c.bf16 %v366, %v366
      %v399 = vpack.c.bf16 %v367, %v367
      %v400 = vpack.c.bf16 %v368, %v368
      %v401 = vpack.c.bf16 %v369, %v369
      %v402 = vpack.c.bf16 %v370, %v370
      %v403 = vpack.c.bf16 %v371, %v371
      %v404 = vpack.c.bf16 %v372, %v372
      %v405 = vpack.c.bf16 %v373, %v373
      %v406 = vpack.c.bf16 %v374, %v374
      %v407 = vpack.c.bf16 %v375, %v375
      %v408 = vpack.c.bf16 %v376, %v376
      %v409 = vpack.c.bf16 %v377, %v377
      %442 = vrot.lane.b32.xlu0 %v378, 4
      %v443 = vpop.permute.xlu0 %442
      %444 = vrot.lane.b32.xlu0 %v379, 4
      %v445 = vpop.permute.xlu0 %444
      %446 = vrot.lane.b32.xlu0 %v380, 4
      %v447 = vpop.permute.xlu0 %446
      %448 = vrot.lane.b32.xlu0 %v381, 4
      %v449 = vpop.permute.xlu0 %448
      %450 = vrot.lane.b32.xlu0 %v382, 4
      %v451 = vpop.permute.xlu0 %450
      %452 = vrot.lane.b32.xlu0 %v383, 4
      %v453 = vpop.permute.xlu0 %452
      %454 = vrot.lane.b32.xlu0 %v384, 4
      %v455 = vpop.permute.xlu0 %454
      %456 = vrot.lane.b32.xlu0 %v385, 4
      %v457 = vpop.permute.xlu0 %456
      %458 = vrot.lane.b32.xlu0 %v386, 4
      %v459 = vpop.permute.xlu0 %458
      %460 = vrot.lane.b32.xlu0 %v387, 4
      %v461 = vpop.permute.xlu0 %460
      %462 = vrot.lane.b32.xlu0 %v388, 4
      %v463 = vpop.permute.xlu0 %462
      %464 = vrot.lane.b32.xlu0 %v389, 4
      %v465 = vpop.permute.xlu0 %464
      %466 = vrot.lane.b32.xlu0 %v390, 4
      %v467 = vpop.permute.xlu0 %466
      %468 = vrot.lane.b32.xlu0 %v391, 4
      %v469 = vpop.permute.xlu0 %468
      %470 = vrot.lane.b32.xlu0 %v392, 4
      %v471 = vpop.permute.xlu0 %470
      %472 = vrot.lane.b32.xlu0 %v393, 4
      %v473 = vpop.permute.xlu0 %472
      %474 = vrot.lane.b32.xlu0 %v394, 4
      %v475 = vpop.permute.xlu0 %474
      %476 = vrot.lane.b32.xlu0 %v395, 4
      %v477 = vpop.permute.xlu0 %476
      %478 = vrot.lane.b32.xlu0 %v396, 4
      %v479 = vpop.permute.xlu0 %478
      %480 = vrot.lane.b32.xlu0 %v397, 4
      %v481 = vpop.permute.xlu0 %480
      %482 = vrot.lane.b32.xlu0 %v398, 4
      %v483 = vpop.permute.xlu0 %482
      %484 = vrot.lane.b32.xlu0 %v399, 4
      %v485 = vpop.permute.xlu0 %484
      %486 = vrot.lane.b32.xlu0 %v400, 4
      %v487 = vpop.permute.xlu0 %486
      %488 = vrot.lane.b32.xlu0 %v401, 4
      %v489 = vpop.permute.xlu0 %488
      %490 = vrot.lane.b32.xlu0 %v402, 4
      %v491 = vpop.permute.xlu0 %490
      %492 = vrot.lane.b32.xlu0 %v403, 4
      %v493 = vpop.permute.xlu0 %492
      %494 = vrot.lane.b32.xlu0 %v404, 4
      %v495 = vpop.permute.xlu0 %494
      %496 = vrot.lane.b32.xlu0 %v405, 4
      %v497 = vpop.permute.xlu0 %496
      %498 = vrot.lane.b32.xlu0 %v406, 4
      %v499 = vpop.permute.xlu0 %498
      %500 = vrot.lane.b32.xlu0 %v407, 4
      %v501 = vpop.permute.xlu0 %500
      %502 = vrot.lane.b32.xlu0 %v408, 4
      %v503 = vpop.permute.xlu0 %502
      %504 = vrot.lane.b32.xlu0 %v409, 4
      %v505 = vpop.permute.xlu0 %504
      %s538 = scalar_lea.vmem [#allocation2], 8
      %vm539 = vcmask 60448
      %540 = vst.msk [vmem:[%s538] sm:$0xf] %vm539, %v443
      %541 = vst.msk [vmem:[%s538 + $0x4] sm:$0xf] %vm539, %v445
      %542 = vst.msk [vmem:[%s538 + $0x8] sm:$0xf] %vm539, %v447
      %543 = vst.msk [vmem:[%s538 + $0xc] sm:$0xf] %vm539, %v449
      %544 = vst.msk [vmem:[%s538 + $0x10] sm:$0xf] %vm539, %v451
      %545 = vst.msk [vmem:[%s538 + $0x14] sm:$0xf] %vm539, %v453
      %546 = vst.msk [vmem:[%s538 + $0x18] sm:$0xf] %vm539, %v455
      %547 = vst.msk [vmem:[%s538 + $0x1c] sm:$0xf] %vm539, %v457
      %548 = vst.msk [vmem:[%s538 + $0x20] sm:$0xf] %vm539, %v459
      %549 = vst.msk [vmem:[%s538 + $0x24] sm:$0xf] %vm539, %v461
      %550 = vst.msk [vmem:[%s538 + $0x28] sm:$0xf] %vm539, %v463
      %551 = vst.msk [vmem:[%s538 + $0x2c] sm:$0xf] %vm539, %v465
      %552 = vst.msk [vmem:[%s538 + $0x30] sm:$0xf] %vm539, %v467
      %553 = vst.msk [vmem:[%s538 + $0x34] sm:$0xf] %vm539, %v469
      %554 = vst.msk [vmem:[%s538 + $0x38] sm:$0xf] %vm539, %v471
      %555 = vst.msk [vmem:[%s538 + $0x3c] sm:$0xf] %vm539, %v473
      %556 = vst.msk [vmem:[%s538 + $0x40] sm:$0xf] %vm539, %v475
      %557 = vst.msk [vmem:[%s538 + $0x44] sm:$0xf] %vm539, %v477
      %558 = vst.msk [vmem:[%s538 + $0x48] sm:$0xf] %vm539, %v479
      %559 = vst.msk [vmem:[%s538 + $0x4c] sm:$0xf] %vm539, %v481
      %560 = vst.msk [vmem:[%s538 + $0x50] sm:$0xf] %vm539, %v483
      %561 = vst.msk [vmem:[%s538 + $0x54] sm:$0xf] %vm539, %v485
      %562 = vst.msk [vmem:[%s538 + $0x58] sm:$0xf] %vm539, %v487
      %563 = vst.msk [vmem:[%s538 + $0x5c] sm:$0xf] %vm539, %v489
      %564 = vst.msk [vmem:[%s538 + $0x60] sm:$0xf] %vm539, %v491
      %565 = vst.msk [vmem:[%s538 + $0x64] sm:$0xf] %vm539, %v493
      %566 = vst.msk [vmem:[%s538 + $0x68] sm:$0xf] %vm539, %v495
      %567 = vst.msk [vmem:[%s538 + $0x6c] sm:$0xf] %vm539, %v497
      %568 = vst.msk [vmem:[%s538 + $0x70] sm:$0xf] %vm539, %v499
      %569 = vst.msk [vmem:[%s538 + $0x74] sm:$0xf] %vm539, %v501
      %570 = vst.msk [vmem:[%s538 + $0x78] sm:$0xf] %vm539, %v503
      %571 = vst.msk [vmem:[%s538 + $0x7c] sm:$0xf] %vm539, %v505
      %vm572 = vsmask.f32 4368
      %vm573 = vmor %vm233, %vm572
      %v575 = vshrl.u32 %v378, 16
      %v577 = vrot.slane %v575, 7
      %v578 = vshll.u32 %v378, 16
      %v580 = vor.u32 %v577, %v578
      %v581 = vrot.slane %v577, 4
      %v583 = vshrl.u32 %v379, 16
      %v585 = vrot.slane %v583, 7
      %v586 = vshll.u32 %v379, 16
      %v588 = vor.u32 %v585, %v586
      %v589 = vsel %vm573, %v581, %v588
      %v591 = vshrl.u32 %v380, 16
      %v593 = vrot.slane %v591, 7
      %v594 = vshll.u32 %v380, 16
      %v596 = vor.u32 %v593, %v594
      %v597 = vrot.slane %v593, 4
      %v599 = vshrl.u32 %v381, 16
      %v601 = vrot.slane %v599, 7
      %v602 = vshll.u32 %v381, 16
      %v604 = vor.u32 %v601, %v602
      %v605 = vsel %vm573, %v597, %v604
      %v607 = vshrl.u32 %v382, 16
      %v609 = vrot.slane %v607, 7
      %v610 = vshll.u32 %v382, 16
      %v612 = vor.u32 %v609, %v610
      %v613 = vrot.slane %v609, 4
      %v615 = vshrl.u32 %v383, 16
      %v617 = vrot.slane %v615, 7
      %v618 = vshll.u32 %v383, 16
      %v620 = vor.u32 %v617, %v618
      %v621 = vsel %vm573, %v613, %v620
      %v623 = vshrl.u32 %v384, 16
      %v625 = vrot.slane %v623, 7
      %v626 = vshll.u32 %v384, 16
      %v628 = vor.u32 %v625, %v626
      %v629 = vrot.slane %v625, 4
      %v631 = vshrl.u32 %v385, 16
      %v633 = vrot.slane %v631, 7
      %v634 = vshll.u32 %v385, 16
      %v636 = vor.u32 %v633, %v634
      %v637 = vsel %vm573, %v629, %v636
      %v639 = vshrl.u32 %v386, 16
      %v641 = vrot.slane %v639, 7
      %v642 = vshll.u32 %v386, 16
      %v644 = vor.u32 %v641, %v642
      %v645 = vrot.slane %v641, 4
      %v647 = vshrl.u32 %v387, 16
      %v649 = vrot.slane %v647, 7
      %v650 = vshll.u32 %v387, 16
      %v652 = vor.u32 %v649, %v650
      %v653 = vsel %vm573, %v645, %v652
      %v655 = vshrl.u32 %v388, 16
      %v657 = vrot.slane %v655, 7
      %v658 = vshll.u32 %v388, 16
      %v660 = vor.u32 %v657, %v658
      %v661 = vrot.slane %v657, 4
      %v663 = vshrl.u32 %v389, 16
      %v665 = vrot.slane %v663, 7
      %v666 = vshll.u32 %v389, 16
      %v668 = vor.u32 %v665, %v666
      %v669 = vsel %vm573, %v661, %v668
      %v671 = vshrl.u32 %v390, 16
      %v673 = vrot.slane %v671, 7
      %v674 = vshll.u32 %v390, 16
      %v676 = vor.u32 %v673, %v674
      %v677 = vrot.slane %v673, 4
      %v679 = vshrl.u32 %v391, 16
      %v681 = vrot.slane %v679, 7
      %v682 = vshll.u32 %v391, 16
      %v684 = vor.u32 %v681, %v682
      %v685 = vsel %vm573, %v677, %v684
      %v687 = vshrl.u32 %v392, 16
      %v689 = vrot.slane %v687, 7
      %v690 = vshll.u32 %v392, 16
      %v692 = vor.u32 %v689, %v690
      %v693 = vrot.slane %v689, 4
      %v695 = vshrl.u32 %v393, 16
      %v697 = vrot.slane %v695, 7
      %v698 = vshll.u32 %v393, 16
      %v700 = vor.u32 %v697, %v698
      %v701 = vsel %vm573, %v693, %v700
      %v703 = vshrl.u32 %v394, 16
      %v705 = vrot.slane %v703, 7
      %v706 = vshll.u32 %v394, 16
      %v708 = vor.u32 %v705, %v706
      %v709 = vrot.slane %v705, 4
      %v711 = vshrl.u32 %v395, 16
      %v713 = vrot.slane %v711, 7
      %v714 = vshll.u32 %v395, 16
      %v716 = vor.u32 %v713, %v714
      %v717 = vsel %vm573, %v709, %v716
      %v719 = vshrl.u32 %v396, 16
      %v721 = vrot.slane %v719, 7
      %v722 = vshll.u32 %v396, 16
      %v724 = vor.u32 %v721, %v722
      %v725 = vrot.slane %v721, 4
      %v727 = vshrl.u32 %v397, 16
      %v729 = vrot.slane %v727, 7
      %v730 = vshll.u32 %v397, 16
      %v732 = vor.u32 %v729, %v730
      %v733 = vsel %vm573, %v725, %v732
      %v735 = vshrl.u32 %v398, 16
      %v737 = vrot.slane %v735, 7
      %v738 = vshll.u32 %v398, 16
      %v740 = vor.u32 %v737, %v738
      %v741 = vrot.slane %v737, 4
      %v743 = vshrl.u32 %v399, 16
      %v745 = vrot.slane %v743, 7
      %v746 = vshll.u32 %v399, 16
      %v748 = vor.u32 %v745, %v746
      %v749 = vsel %vm573, %v741, %v748
      %v751 = vshrl.u32 %v400, 16
      %v753 = vrot.slane %v751, 7
      %v754 = vshll.u32 %v400, 16
      %v756 = vor.u32 %v753, %v754
      %v757 = vrot.slane %v753, 4
      %v759 = vshrl.u32 %v401, 16
      %v761 = vrot.slane %v759, 7
      %v762 = vshll.u32 %v401, 16
      %v764 = vor.u32 %v761, %v762
      %v765 = vsel %vm573, %v757, %v764
      %v767 = vshrl.u32 %v402, 16
      %v769 = vrot.slane %v767, 7
      %v770 = vshll.u32 %v402, 16
      %v772 = vor.u32 %v769, %v770
      %v773 = vrot.slane %v769, 4
      %v775 = vshrl.u32 %v403, 16
      %v777 = vrot.slane %v775, 7
      %v778 = vshll.u32 %v403, 16
      %v780 = vor.u32 %v777, %v778
      %v781 = vsel %vm573, %v773, %v780
      %v783 = vshrl.u32 %v404, 16
      %v785 = vrot.slane %v783, 7
      %v786 = vshll.u32 %v404, 16
      %v788 = vor.u32 %v785, %v786
      %v789 = vrot.slane %v785, 4
      %v791 = vshrl.u32 %v405, 16
      %v793 = vrot.slane %v791, 7
      %v794 = vshll.u32 %v405, 16
      %v796 = vor.u32 %v793, %v794
      %v797 = vsel %vm573, %v789, %v796
      %v799 = vshrl.u32 %v406, 16
      %v801 = vrot.slane %v799, 7
      %v802 = vshll.u32 %v406, 16
      %v804 = vor.u32 %v801, %v802
      %v805 = vrot.slane %v801, 4
      %v807 = vshrl.u32 %v407, 16
      %v809 = vrot.slane %v807, 7
      %v810 = vshll.u32 %v407, 16
      %v812 = vor.u32 %v809, %v810
      %v813 = vsel %vm573, %v805, %v812
      %v815 = vshrl.u32 %v408, 16
      %v817 = vrot.slane %v815, 7
      %v818 = vshll.u32 %v408, 16
      %v820 = vor.u32 %v817, %v818
      %v821 = vrot.slane %v817, 4
      %v823 = vshrl.u32 %v409, 16
      %v825 = vrot.slane %v823, 7
      %v826 = vshll.u32 %v409, 16
      %v828 = vor.u32 %v825, %v826
      %v829 = vsel %vm573, %v821, %v828
      %vm862 = vcmask 27648
      %vm863 = vsmask.f32 7938
      %vm864 = vmand %vm862, %vm863
      %v865 = vld [vmem:[%s538] sm:$0xf]
      %v866 = vsel %vm864, %v580, %v865
      %867 = vst [vmem:[%s538] sm:$0xf] %v866
      %vm868 = vcmask 27648
      %869 = vst.msk [vmem:[%s538 + $0x4] sm:$0xf] %vm868, %v589
      %v870 = vld [vmem:[%s538 + $0x8] sm:$0xf]
      %v871 = vsel %vm864, %v596, %v870
      %872 = vst [vmem:[%s538 + $0x8] sm:$0xf] %v871
      %873 = vst.msk [vmem:[%s538 + $0xc] sm:$0xf] %vm868, %v605
      %v874 = vld [vmem:[%s538 + $0x10] sm:$0xf]
      %v875 = vsel %vm864, %v612, %v874
      %876 = vst [vmem:[%s538 + $0x10] sm:$0xf] %v875
      %877 = vst.msk [vmem:[%s538 + $0x14] sm:$0xf] %vm868, %v621
      %v878 = vld [vmem:[%s538 + $0x18] sm:$0xf]
      %v879 = vsel %vm864, %v628, %v878
      %880 = vst [vmem:[%s538 + $0x18] sm:$0xf] %v879
      %881 = vst.msk [vmem:[%s538 + $0x1c] sm:$0xf] %vm868, %v637
      %v882 = vld [vmem:[%s538 + $0x20] sm:$0xf]
      %v883 = vsel %vm864, %v644, %v882
      %884 = vst [vmem:[%s538 + $0x20] sm:$0xf] %v883
      %885 = vst.msk [vmem:[%s538 + $0x24] sm:$0xf] %vm868, %v653
      %v886 = vld [vmem:[%s538 + $0x28] sm:$0xf]
      %v887 = vsel %vm864, %v660, %v886
      %888 = vst [vmem:[%s538 + $0x28] sm:$0xf] %v887
      %889 = vst.msk [vmem:[%s538 + $0x2c] sm:$0xf] %vm868, %v669
      %v890 = vld [vmem:[%s538 + $0x30] sm:$0xf]
      %v891 = vsel %vm864, %v676, %v890
      %892 = vst [vmem:[%s538 + $0x30] sm:$0xf] %v891
      %893 = vst.msk [vmem:[%s538 + $0x34] sm:$0xf] %vm868, %v685
      %v894 = vld [vmem:[%s538 + $0x38] sm:$0xf]
      %v895 = vsel %vm864, %v692, %v894
      %896 = vst [vmem:[%s538 + $0x38] sm:$0xf] %v895
      %897 = vst.msk [vmem:[%s538 + $0x3c] sm:$0xf] %vm868, %v701
      %v898 = vld [vmem:[%s538 + $0x40] sm:$0xf]
      %v899 = vsel %vm864, %v708, %v898
      %900 = vst [vmem:[%s538 + $0x40] sm:$0xf] %v899
      %901 = vst.msk [vmem:[%s538 + $0x44] sm:$0xf] %vm868, %v717
      %v902 = vld [vmem:[%s538 + $0x48] sm:$0xf]
      %v903 = vsel %vm864, %v724, %v902
      %904 = vst [vmem:[%s538 + $0x48] sm:$0xf] %v903
      %905 = vst.msk [vmem:[%s538 + $0x4c] sm:$0xf] %vm868, %v733
      %v906 = vld [vmem:[%s538 + $0x50] sm:$0xf]
      %v907 = vsel %vm864, %v740, %v906
      %908 = vst [vmem:[%s538 + $0x50] sm:$0xf] %v907
      %909 = vst.msk [vmem:[%s538 + $0x54] sm:$0xf] %vm868, %v749
      %v910 = vld [vmem:[%s538 + $0x58] sm:$0xf]
      %v911 = vsel %vm864, %v756, %v910
      %912 = vst [vmem:[%s538 + $0x58] sm:$0xf] %v911
      %913 = vst.msk [vmem:[%s538 + $0x5c] sm:$0xf] %vm868, %v765
      %v914 = vld [vmem:[%s538 + $0x60] sm:$0xf]
      %v915 = vsel %vm864, %v772, %v914
      %916 = vst [vmem:[%s538 + $0x60] sm:$0xf] %v915
      %917 = vst.msk [vmem:[%s538 + $0x64] sm:$0xf] %vm868, %v781
      %v918 = vld [vmem:[%s538 + $0x68] sm:$0xf]
      %v919 = vsel %vm864, %v788, %v918
      %920 = vst [vmem:[%s538 + $0x68] sm:$0xf] %v919
      %921 = vst.msk [vmem:[%s538 + $0x6c] sm:$0xf] %vm868, %v797
      %v922 = vld [vmem:[%s538 + $0x70] sm:$0xf]
      %v923 = vsel %vm864, %v804, %v922
      %924 = vst [vmem:[%s538 + $0x70] sm:$0xf] %v923
      %925 = vst.msk [vmem:[%s538 + $0x74] sm:$0xf] %vm868, %v813
      %v926 = vld [vmem:[%s538 + $0x78] sm:$0xf]
      %v927 = vsel %vm864, %v820, %v926
      %928 = vst [vmem:[%s538 + $0x78] sm:$0xf] %v927
      %929 = vst.msk [vmem:[%s538 + $0x7c] sm:$0xf] %vm868, %v829
      %vm930 = vsmask.f32 3328
      %vm931 = vsmask.f32 7440
      %vm932 = vmor %vm930, %vm931
      %v933 = vrot.slane %v575, 4
      %v934 = vrot.slane %v578, 5
      %v935 = vor.u32 %v933, %v934
      %v936 = vrot.slane %v935, 4
      %v937 = vrot.slane %v586, 5
      %v938 = vsel %vm932, %v936, %v937
      %v939 = vrot.slane %v583, 4
      %v940 = vor.u32 %v939, %v937
      %v941 = vrot.slane %v940, 4
      %v942 = vrot.slane %v591, 4
      %v943 = vrot.slane %v594, 5
      %v944 = vor.u32 %v942, %v943
      %v945 = vrot.slane %v944, 4
      %v946 = vrot.slane %v602, 5
      %v947 = vsel %vm932, %v945, %v946
      %v948 = vrot.slane %v599, 4
      %v949 = vor.u32 %v948, %v946
      %v950 = vrot.slane %v949, 4
      %v951 = vrot.slane %v607, 4
      %v952 = vrot.slane %v610, 5
      %v953 = vor.u32 %v951, %v952
      %v954 = vrot.slane %v953, 4
      %v955 = vrot.slane %v618, 5
      %v956 = vsel %vm932, %v954, %v955
      %v957 = vrot.slane %v615, 4
      %v958 = vor.u32 %v957, %v955
      %v959 = vrot.slane %v958, 4
      %v960 = vrot.slane %v623, 4
      %v961 = vrot.slane %v626, 5
      %v962 = vor.u32 %v960, %v961
      %v963 = vrot.slane %v962, 4
      %v964 = vrot.slane %v634, 5
      %v965 = vsel %vm932, %v963, %v964
      %v966 = vrot.slane %v631, 4
      %v967 = vor.u32 %v966, %v964
      %v968 = vrot.slane %v967, 4
      %v969 = vrot.slane %v639, 4
      %v970 = vrot.slane %v642, 5
      %v971 = vor.u32 %v969, %v970
      %v972 = vrot.slane %v971, 4
      %v973 = vrot.slane %v650, 5
      %v974 = vsel %vm932, %v972, %v973
      %v975 = vrot.slane %v647, 4
      %v976 = vor.u32 %v975, %v973
      %v977 = vrot.slane %v976, 4
      %v978 = vrot.slane %v655, 4
      %v979 = vrot.slane %v658, 5
      %v980 = vor.u32 %v978, %v979
      %v981 = vrot.slane %v980, 4
      %v982 = vrot.slane %v666, 5
      %v983 = vsel %vm932, %v981, %v982
      %v984 = vrot.slane %v663, 4
      %v985 = vor.u32 %v984, %v982
      %v986 = vrot.slane %v985, 4
      %v987 = vrot.slane %v671, 4
      %v988 = vrot.slane %v674, 5
      %v989 = vor.u32 %v987, %v988
      %v990 = vrot.slane %v989, 4
      %v991 = vrot.slane %v682, 5
      %v992 = vsel %vm932, %v990, %v991
      %v993 = vrot.slane %v679, 4
      %v994 = vor.u32 %v993, %v991
      %v995 = vrot.slane %v994, 4
      %v996 = vrot.slane %v687, 4
      %v997 = vrot.slane %v690, 5
      %v998 = vor.u32 %v996, %v997
      %v999 = vrot.slane %v998, 4
      %v1000 = vrot.slane %v698, 5
      %v1001 = vsel %vm932, %v999, %v1000
      %v1002 = vrot.slane %v695, 4
      %v1003 = vor.u32 %v1002, %v1000
      %v1004 = vrot.slane %v1003, 4
      %v1005 = vrot.slane %v703, 4
      %v1006 = vrot.slane %v706, 5
      %v1007 = vor.u32 %v1005, %v1006
      %v1008 = vrot.slane %v1007, 4
      %v1009 = vrot.slane %v714, 5
      %v1010 = vsel %vm932, %v1008, %v1009
      %v1011 = vrot.slane %v711, 4
      %v1012 = vor.u32 %v1011, %v1009
      %v1013 = vrot.slane %v1012, 4
      %v1014 = vrot.slane %v719, 4
      %v1015 = vrot.slane %v722, 5
      %v1016 = vor.u32 %v1014, %v1015
      %v1017 = vrot.slane %v1016, 4
      %v1018 = vrot.slane %v730, 5
      %v1019 = vsel %vm932, %v1017, %v1018
      %v1020 = vrot.slane %v727, 4
      %v1021 = vor.u32 %v1020, %v1018
      %v1022 = vrot.slane %v1021, 4
      %v1023 = vrot.slane %v735, 4
      %v1024 = vrot.slane %v738, 5
      %v1025 = vor.u32 %v1023, %v1024
      %v1026 = vrot.slane %v1025, 4
      %v1027 = vrot.slane %v746, 5
      %v1028 = vsel %vm932, %v1026, %v1027
      %v1029 = vrot.slane %v743, 4
      %v1030 = vor.u32 %v1029, %v1027
      %v1031 = vrot.slane %v1030, 4
      %v1032 = vrot.slane %v751, 4
      %v1033 = vrot.slane %v754, 5
      %v1034 = vor.u32 %v1032, %v1033
      %v1035 = vrot.slane %v1034, 4
      %v1036 = vrot.slane %v762, 5
      %v1037 = vsel %vm932, %v1035, %v1036
      %v1038 = vrot.slane %v759, 4
      %v1039 = vor.u32 %v1038, %v1036
      %v1040 = vrot.slane %v1039, 4
      %v1041 = vrot.slane %v767, 4
      %v1042 = vrot.slane %v770, 5
      %v1043 = vor.u32 %v1041, %v1042
      %v1044 = vrot.slane %v1043, 4
      %v1045 = vrot.slane %v778, 5
      %v1046 = vsel %vm932, %v1044, %v1045
      %v1047 = vrot.slane %v775, 4
      %v1048 = vor.u32 %v1047, %v1045
      %v1049 = vrot.slane %v1048, 4
      %v1050 = vrot.slane %v783, 4
      %v1051 = vrot.slane %v786, 5
      %v1052 = vor.u32 %v1050, %v1051
      %v1053 = vrot.slane %v1052, 4
      %v1054 = vrot.slane %v794, 5
      %v1055 = vsel %vm932, %v1053, %v1054
      %v1056 = vrot.slane %v791, 4
      %v1057 = vor.u32 %v1056, %v1054
      %v1058 = vrot.slane %v1057, 4
      %v1059 = vrot.slane %v799, 4
      %v1060 = vrot.slane %v802, 5
      %v1061 = vor.u32 %v1059, %v1060
      %v1062 = vrot.slane %v1061, 4
      %v1063 = vrot.slane %v810, 5
      %v1064 = vsel %vm932, %v1062, %v1063
      %v1065 = vrot.slane %v807, 4
      %v1066 = vor.u32 %v1065, %v1063
      %v1067 = vrot.slane %v1066, 4
      %v1068 = vrot.slane %v815, 4
      %v1069 = vrot.slane %v818, 5
      %v1070 = vor.u32 %v1068, %v1069
      %v1071 = vrot.slane %v1070, 4
      %v1072 = vrot.slane %v826, 5
      %v1073 = vsel %vm932, %v1071, %v1072
      %v1074 = vrot.slane %v823, 4
      %v1075 = vor.u32 %v1074, %v1072
      %v1076 = vrot.slane %v1075, 4
      %1077 = vrot.lane.b32.xlu0 %v938, 8
      %v1078 = vpop.permute.xlu0 %1077
      %1079 = vrot.lane.b32.xlu0 %v941, 8
      %v1080 = vpop.permute.xlu0 %1079
      %1081 = vrot.lane.b32.xlu0 %v947, 8
      %v1082 = vpop.permute.xlu0 %1081
      %1083 = vrot.lane.b32.xlu0 %v950, 8
      %v1084 = vpop.permute.xlu0 %1083
      %1085 = vrot.lane.b32.xlu0 %v956, 8
      %v1086 = vpop.permute.xlu0 %1085
      %1087 = vrot.lane.b32.xlu0 %v959, 8
      %v1088 = vpop.permute.xlu0 %1087
      %1089 = vrot.lane.b32.xlu0 %v965, 8
      %v1090 = vpop.permute.xlu0 %1089
      %1091 = vrot.lane.b32.xlu0 %v968, 8
      %v1092 = vpop.permute.xlu0 %1091
      %1093 = vrot.lane.b32.xlu0 %v974, 8
      %v1094 = vpop.permute.xlu0 %1093
      %1095 = vrot.lane.b32.xlu0 %v977, 8
      %v1096 = vpop.permute.xlu0 %1095
      %1097 = vrot.lane.b32.xlu0 %v983, 8
      %v1098 = vpop.permute.xlu0 %1097
      %1099 = vrot.lane.b32.xlu0 %v986, 8
      %v1100 = vpop.permute.xlu0 %1099
      %1101 = vrot.lane.b32.xlu0 %v992, 8
      %v1102 = vpop.permute.xlu0 %1101
      %1103 = vrot.lane.b32.xlu0 %v995, 8
      %v1104 = vpop.permute.xlu0 %1103
      %1105 = vrot.lane.b32.xlu0 %v1001, 8
      %v1106 = vpop.permute.xlu0 %1105
      %1107 = vrot.lane.b32.xlu0 %v1004, 8
      %v1108 = vpop.permute.xlu0 %1107
      %1109 = vrot.lane.b32.xlu0 %v1010, 8
      %v1110 = vpop.permute.xlu0 %1109
      %1111 = vrot.lane.b32.xlu0 %v1013, 8
      %v1112 = vpop.permute.xlu0 %1111
      %1113 = vrot.lane.b32.xlu0 %v1019, 8
      %v1114 = vpop.permute.xlu0 %1113
      %1115 = vrot.lane.b32.xlu0 %v1022, 8
      %v1116 = vpop.permute.xlu0 %1115
      %1117 = vrot.lane.b32.xlu0 %v1028, 8
      %v1118 = vpop.permute.xlu0 %1117
      %1119 = vrot.lane.b32.xlu0 %v1031, 8
      %v1120 = vpop.permute.xlu0 %1119
      %1121 = vrot.lane.b32.xlu0 %v1037, 8
      %v1122 = vpop.permute.xlu0 %1121
      %1123 = vrot.lane.b32.xlu0 %v1040, 8
      %v1124 = vpop.permute.xlu0 %1123
      %1125 = vrot.lane.b32.xlu0 %v1046, 8
      %v1126 = vpop.permute.xlu0 %1125
      %1127 = vrot.lane.b32.xlu0 %v1049, 8
      %v1128 = vpop.permute.xlu0 %1127
      %1129 = vrot.lane.b32.xlu0 %v1055, 8
      %v1130 = vpop.permute.xlu0 %1129
      %1131 = vrot.lane.b32.xlu0 %v1058, 8
      %v1132 = vpop.permute.xlu0 %1131
      %1133 = vrot.lane.b32.xlu0 %v1064, 8
      %v1134 = vpop.permute.xlu0 %1133
      %1135 = vrot.lane.b32.xlu0 %v1067, 8
      %v1136 = vpop.permute.xlu0 %1135
      %1137 = vrot.lane.b32.xlu0 %v1073, 8
      %v1138 = vpop.permute.xlu0 %1137
      %1139 = vrot.lane.b32.xlu0 %v1076, 8
      %v1140 = vpop.permute.xlu0 %1139
      %vm1173 = vcmask 93248
      %1174 = vst.msk [vmem:[%s538] sm:$0xf] %vm1173, %v1078
      %vm1175 = vcmask 93248
      %vm1176 = vmand %vm1175, %vm930
      %v1177 = vld [vmem:[%s538 + $0x4] sm:$0xf]
      %v1178 = vsel %vm1176, %v1080, %v1177
      %1179 = vst [vmem:[%s538 + $0x4] sm:$0xf] %v1178
      %1180 = vst.msk [vmem:[%s538 + $0x8] sm:$0xf] %vm1173, %v1082
      %v1181 = vld [vmem:[%s538 + $0xc] sm:$0xf]
      %v1182 = vsel %vm1176, %v1084, %v1181
      %1183 = vst [vmem:[%s538 + $0xc] sm:$0xf] %v1182
      %1184 = vst.msk [vmem:[%s538 + $0x10] sm:$0xf] %vm1173, %v1086
      %v1185 = vld [vmem:[%s538 + $0x14] sm:$0xf]
      %v1186 = vsel %vm1176, %v1088, %v1185
      %1187 = vst [vmem:[%s538 + $0x14] sm:$0xf] %v1186
      %1188 = vst.msk [vmem:[%s538 + $0x18] sm:$0xf] %vm1173, %v1090
      %v1189 = vld [vmem:[%s538 + $0x1c] sm:$0xf]
      %v1190 = vsel %vm1176, %v1092, %v1189
      %1191 = vst [vmem:[%s538 + $0x1c] sm:$0xf] %v1190
      %1192 = vst.msk [vmem:[%s538 + $0x20] sm:$0xf] %vm1173, %v1094
      %v1193 = vld [vmem:[%s538 + $0x24] sm:$0xf]
      %v1194 = vsel %vm1176, %v1096, %v1193
      %1195 = vst [vmem:[%s538 + $0x24] sm:$0xf] %v1194
      %1196 = vst.msk [vmem:[%s538 + $0x28] sm:$0xf] %vm1173, %v1098
      %v1197 = vld [vmem:[%s538 + $0x2c] sm:$0xf]
      %v1198 = vsel %vm1176, %v1100, %v1197
      %1199 = vst [vmem:[%s538 + $0x2c] sm:$0xf] %v1198
      %1200 = vst.msk [vmem:[%s538 + $0x30] sm:$0xf] %vm1173, %v1102
      %v1201 = vld [vmem:[%s538 + $0x34] sm:$0xf]
      %v1202 = vsel %vm1176, %v1104, %v1201
      %1203 = vst [vmem:[%s538 + $0x34] sm:$0xf] %v1202
      %1204 = vst.msk [vmem:[%s538 + $0x38] sm:$0xf] %vm1173, %v1106
      %v1205 = vld [vmem:[%s538 + $0x3c] sm:$0xf]
      %v1206 = vsel %vm1176, %v1108, %v1205
      %1207 = vst [vmem:[%s538 + $0x3c] sm:$0xf] %v1206
      %1208 = vst.msk [vmem:[%s538 + $0x40] sm:$0xf] %vm1173, %v1110
      %v1209 = vld [vmem:[%s538 + $0x44] sm:$0xf]
      %v1210 = vsel %vm1176, %v1112, %v1209
      %1211 = vst [vmem:[%s538 + $0x44] sm:$0xf] %v1210
      %1212 = vst.msk [vmem:[%s538 + $0x48] sm:$0xf] %vm1173, %v1114
      %v1213 = vld [vmem:[%s538 + $0x4c] sm:$0xf]
      %v1214 = vsel %vm1176, %v1116, %v1213
      %1215 = vst [vmem:[%s538 + $0x4c] sm:$0xf] %v1214
      %1216 = vst.msk [vmem:[%s538 + $0x50] sm:$0xf] %vm1173, %v1118
      %v1217 = vld [vmem:[%s538 + $0x54] sm:$0xf]
      %v1218 = vsel %vm1176, %v1120, %v1217
      %1219 = vst [vmem:[%s538 + $0x54] sm:$0xf] %v1218
      %1220 = vst.msk [vmem:[%s538 + $0x58] sm:$0xf] %vm1173, %v1122
      %v1221 = vld [vmem:[%s538 + $0x5c] sm:$0xf]
      %v1222 = vsel %vm1176, %v1124, %v1221
      %1223 = vst [vmem:[%s538 + $0x5c] sm:$0xf] %v1222
      %1224 = vst.msk [vmem:[%s538 + $0x60] sm:$0xf] %vm1173, %v1126
      %v1225 = vld [vmem:[%s538 + $0x64] sm:$0xf]
      %v1226 = vsel %vm1176, %v1128, %v1225
      %1227 = vst [vmem:[%s538 + $0x64] sm:$0xf] %v1226
      %1228 = vst.msk [vmem:[%s538 + $0x68] sm:$0xf] %vm1173, %v1130
      %v1229 = vld [vmem:[%s538 + $0x6c] sm:$0xf]
      %v1230 = vsel %vm1176, %v1132, %v1229
      %1231 = vst [vmem:[%s538 + $0x6c] sm:$0xf] %v1230
      %1232 = vst.msk [vmem:[%s538 + $0x70] sm:$0xf] %vm1173, %v1134
      %v1233 = vld [vmem:[%s538 + $0x74] sm:$0xf]
      %v1234 = vsel %vm1176, %v1136, %v1233
      %1235 = vst [vmem:[%s538 + $0x74] sm:$0xf] %v1234
      %1236 = vst.msk [vmem:[%s538 + $0x78] sm:$0xf] %vm1173, %v1138
      %v1237 = vld [vmem:[%s538 + $0x7c] sm:$0xf]
      %v1238 = vsel %vm1176, %v1140, %v1237
      %1239 = vst [vmem:[%s538 + $0x7c] sm:$0xf] %v1238
      %v1240 = vld [vmem:[#allocation2] sm:$0xf]
      %v1241 = vld [vmem:[#allocation2 + $0x4] sm:$0xf]
      %v1242 = vld [vmem:[#allocation2 + $0x8] sm:$0xf]
      %v1243 = vld [vmem:[#allocation2 + $0xc] sm:$0xf]
      %v1244 = vld [vmem:[#allocation2 + $0x10] sm:$0xf]
      %v1245 = vld [vmem:[#allocation2 + $0x14] sm:$0xf]
      %v1246 = vld [vmem:[#allocation2 + $0x18] sm:$0xf]
      %v1247 = vld [vmem:[#allocation2 + $0x1c] sm:$0xf]
      %v1248 = vld [vmem:[#allocation2 + $0x20] sm:$0xf]
      %v1249 = vld [vmem:[#allocation2 + $0x24] sm:$0xf]
      %v1250 = vld [vmem:[#allocation2 + $0x28] sm:$0xf]
      %v1251 = vld [vmem:[#allocation2 + $0x2c] sm:$0xf]
      %v1252 = vld [vmem:[#allocation2 + $0x30] sm:$0xf]
      %v1253 = vld [vmem:[#allocation2 + $0x34] sm:$0xf]
      %v1254 = vld [vmem:[#allocation2 + $0x38] sm:$0xf]
      %v1255 = vld [vmem:[#allocation2 + $0x3c] sm:$0xf]
      %v1256 = vld [vmem:[#allocation2 + $0x40] sm:$0xf]
      %v1257 = vld [vmem:[#allocation2 + $0x44] sm:$0xf]
      %v1258 = vld [vmem:[#allocation2 + $0x48] sm:$0xf]
      %v1259 = vld [vmem:[#allocation2 + $0x4c] sm:$0xf]
      %v1260 = vld [vmem:[#allocation2 + $0x50] sm:$0xf]
      %v1261 = vld [vmem:[#allocation2 + $0x54] sm:$0xf]
      %v1262 = vld [vmem:[#allocation2 + $0x58] sm:$0xf]
      %v1263 = vld [vmem:[#allocation2 + $0x5c] sm:$0xf]
      %v1264 = vld [vmem:[#allocation2 + $0x60] sm:$0xf]
      %v1265 = vld [vmem:[#allocation2 + $0x64] sm:$0xf]
      %v1266 = vld [vmem:[#allocation2 + $0x68] sm:$0xf]
      %v1267 = vld [vmem:[#allocation2 + $0x6c] sm:$0xf]
      %v1268 = vld [vmem:[#allocation2 + $0x70] sm:$0xf]
      %v1269 = vld [vmem:[#allocation2 + $0x74] sm:$0xf]
      %v1270 = vld [vmem:[#allocation2 + $0x78] sm:$0xf]
      %v1271 = vld [vmem:[#allocation2 + $0x7c] sm:$0xf]
      %v1272 = vld [vmem:[%s1] sm:$0xf]
      %v1273 = vld [vmem:[%s1 + $0x4] sm:$0x3]
      %v1274 = vld [vmem:[%s538] sm:$0xf]
      %v1275 = vld [vmem:[%s538 + $0x4] sm:$0xf]
      %v1276 = vld [vmem:[%s538 + $0x8] sm:$0xf]
      %v1277 = vld [vmem:[%s538 + $0xc] sm:$0xf]
      %v1278 = vld [vmem:[%s538 + $0x10] sm:$0xf]
      %v1279 = vld [vmem:[%s538 + $0x14] sm:$0xf]
      %v1280 = vld [vmem:[%s538 + $0x18] sm:$0xf]
      %v1281 = vld [vmem:[%s538 + $0x1c] sm:$0xf]
      %v1282 = vld [vmem:[%s538 + $0x20] sm:$0xf]
      %v1283 = vld [vmem:[%s538 + $0x24] sm:$0xf]
      %v1284 = vld [vmem:[%s538 + $0x28] sm:$0xf]
      %v1285 = vld [vmem:[%s538 + $0x2c] sm:$0xf]
      %v1286 = vld [vmem:[%s538 + $0x30] sm:$0xf]
      %v1287 = vld [vmem:[%s538 + $0x34] sm:$0xf]
      %v1288 = vld [vmem:[%s538 + $0x38] sm:$0xf]
      %v1289 = vld [vmem:[%s538 + $0x3c] sm:$0xf]
      %v1290 = vld [vmem:[%s538 + $0x40] sm:$0xf]
      %v1291 = vld [vmem:[%s538 + $0x44] sm:$0xf]
      %v1292 = vld [vmem:[%s538 + $0x48] sm:$0xf]
      %v1293 = vld [vmem:[%s538 + $0x4c] sm:$0xf]
      %v1294 = vld [vmem:[%s538 + $0x50] sm:$0xf]
      %v1295 = vld [vmem:[%s538 + $0x54] sm:$0xf]
      %v1296 = vld [vmem:[%s538 + $0x58] sm:$0xf]
      %v1297 = vld [vmem:[%s538 + $0x5c] sm:$0xf]
      %v1298 = vld [vmem:[%s538 + $0x60] sm:$0xf]
      %v1299 = vld [vmem:[%s538 + $0x64] sm:$0xf]
      %v1300 = vld [vmem:[%s538 + $0x68] sm:$0xf]
      %v1301 = vld [vmem:[%s538 + $0x6c] sm:$0xf]
      %v1302 = vld [vmem:[%s538 + $0x70] sm:$0xf]
      %v1303 = vld [vmem:[%s538 + $0x74] sm:$0xf]
      %v1304 = vld [vmem:[%s538 + $0x78] sm:$0xf]
      %v1305 = vld [vmem:[%s538 + $0x7c] sm:$0xf]
      %s1306 = scalar_lea.vmem %s1, 8
      %v1307 = vld [vmem:[%s1306] sm:$0xf]
      %v1308 = vld [vmem:[%s1306 + $0x4] sm:$0x3]
      %v1341 = vunpack.c.l.b16 %v1274
      %v1342 = vunpack.c.l.b16 %v1275
      %v1343 = vunpack.c.l.b16 %v1276
      %v1344 = vunpack.c.l.b16 %v1277
      %v1345 = vunpack.c.l.b16 %v1278
      %v1346 = vunpack.c.l.b16 %v1279
      %v1347 = vunpack.c.l.b16 %v1280
      %v1348 = vunpack.c.l.b16 %v1281
      %v1349 = vunpack.c.l.b16 %v1282
      %v1350 = vunpack.c.l.b16 %v1283
      %v1351 = vunpack.c.l.b16 %v1284
      %v1352 = vunpack.c.l.b16 %v1285
      %v1353 = vunpack.c.l.b16 %v1286
      %v1354 = vunpack.c.l.b16 %v1287
      %v1355 = vunpack.c.l.b16 %v1288
      %v1356 = vunpack.c.l.b16 %v1289
      %v1357 = vunpack.c.l.b16 %v1290
      %v1358 = vunpack.c.l.b16 %v1291
      %v1359 = vunpack.c.l.b16 %v1292
      %v1360 = vunpack.c.l.b16 %v1293
      %v1361 = vunpack.c.l.b16 %v1294
      %v1362 = vunpack.c.l.b16 %v1295
      %v1363 = vunpack.c.l.b16 %v1296
      %v1364 = vunpack.c.l.b16 %v1297
      %v1365 = vunpack.c.l.b16 %v1298
      %v1366 = vunpack.c.l.b16 %v1299
      %v1367 = vunpack.c.l.b16 %v1300
      %v1368 = vunpack.c.l.b16 %v1301
      %v1369 = vunpack.c.l.b16 %v1302
      %v1370 = vunpack.c.l.b16 %v1303
      %v1371 = vunpack.c.l.b16 %v1304
      %v1372 = vunpack.c.l.b16 %v1305
      %v1373 = vpack.c.b16 %v1342, %v1341
      %v1374 = vpack.c.b16 %v1344, %v1343
      %v1375 = vpack.c.b16 %v1346, %v1345
      %v1376 = vpack.c.b16 %v1348, %v1347
      %v1377 = vpack.c.b16 %v1350, %v1349
      %v1378 = vpack.c.b16 %v1352, %v1351
      %v1379 = vpack.c.b16 %v1354, %v1353
      %v1380 = vpack.c.b16 %v1356, %v1355
      %v1381 = vpack.c.b16 %v1358, %v1357
      %v1382 = vpack.c.b16 %v1360, %v1359
      %v1383 = vpack.c.b16 %v1362, %v1361
      %v1384 = vpack.c.b16 %v1364, %v1363
      %v1385 = vpack.c.b16 %v1366, %v1365
      %v1386 = vpack.c.b16 %v1368, %v1367
      %v1387 = vpack.c.b16 %v1370, %v1369
      %v1388 = vpack.c.b16 %v1372, %v1371
      %v1391 = vunpack.c.l.b16 %v1307
      %v1392 = vunpack.c.l.b16 %v1308
      %v1393 = vpack.c.b16 %v1392, %v1391
      %vm1394 = vcmask 97280
      %v1396 = vsel %vm1394, %v1373, 0
      %v1399 = vsel %vm1394, %v1374, 0
      %v1402 = vsel %vm1394, %v1375, 0
      %v1405 = vsel %vm1394, %v1376, 0
      %v1408 = vsel %vm1394, %v1377, 0
      %v1411 = vsel %vm1394, %v1378, 0
      %v1414 = vsel %vm1394, %v1379, 0
      %v1417 = vsel %vm1394, %v1380, 0
      %v1420 = vsel %vm1394, %v1381, 0
      %v1423 = vsel %vm1394, %v1382, 0
      %v1426 = vsel %vm1394, %v1383, 0
      %v1429 = vsel %vm1394, %v1384, 0
      %v1432 = vsel %vm1394, %v1385, 0
      %v1435 = vsel %vm1394, %v1386, 0
      %v1438 = vsel %vm1394, %v1387, 0
      %v1441 = vsel %vm1394, %v1388, 0
      %vm1443 = vcmask 1045504
      %v1445 = vsel %vm1443, %v1393, 0
      %1447 = vmatpush.bf16.msra.mxu0 0
      %1448 = vmatpush.bf16.msra.mxu0 0
      %1449 = vmatpush.bf16.msra.mxu0 0
      %1450 = vmatpush.bf16.msra.mxu0 0
      %1451 = vmatpush.bf16.msra.mxu0 0
      %1452 = vmatpush.bf16.msra.mxu0 0
      %1453 = vmatpush.bf16.msra.mxu0 0
      %1454 = vmatpush.bf16.msra.mxu0 %v1445
      %1455 = vmatmul.bf16.gmra.mxu0 %v1396
      %v1456 = vpop.f32.mrf.mxu0
      %v1457 = vadd.f32 0.0, %v1456
      %v1458 = vpop.f32.mrf.mxu0
      %v1459 = vadd.f32 0.0, %v1458
      %1460 = vmatmul.bf16.gmra.mxu0 %v1399
      %v1461 = vpop.f32.mrf.mxu0
      %v1462 = vadd.f32 0.0, %v1461
      %v1463 = vpop.f32.mrf.mxu0
      %v1464 = vadd.f32 0.0, %v1463
      %1465 = vmatmul.bf16.gmra.mxu0 %v1402
      %v1466 = vpop.f32.mrf.mxu0
      %v1467 = vadd.f32 0.0, %v1466
      %v1468 = vpop.f32.mrf.mxu0
      %v1469 = vadd.f32 0.0, %v1468
      %1470 = vmatmul.bf16.gmra.mxu0 %v1405
      %v1471 = vpop.f32.mrf.mxu0
      %v1472 = vadd.f32 0.0, %v1471
      %v1473 = vpop.f32.mrf.mxu0
      %v1474 = vadd.f32 0.0, %v1473
      %1475 = vmatmul.bf16.gmra.mxu0 %v1408
      %v1476 = vpop.f32.mrf.mxu0
      %v1477 = vadd.f32 0.0, %v1476
      %v1478 = vpop.f32.mrf.mxu0
      %v1479 = vadd.f32 0.0, %v1478
      %1480 = vmatmul.bf16.gmra.mxu0 %v1411
      %v1481 = vpop.f32.mrf.mxu0
      %v1482 = vadd.f32 0.0, %v1481
      %v1483 = vpop.f32.mrf.mxu0
      %v1484 = vadd.f32 0.0, %v1483
      %1485 = vmatmul.bf16.gmra.mxu0 %v1414
      %v1486 = vpop.f32.mrf.mxu0
      %v1487 = vadd.f32 0.0, %v1486
      %v1488 = vpop.f32.mrf.mxu0
      %v1489 = vadd.f32 0.0, %v1488
      %1490 = vmatmul.bf16.gmra.mxu0 %v1417
      %v1491 = vpop.f32.mrf.mxu0
      %v1492 = vadd.f32 0.0, %v1491
      %v1493 = vpop.f32.mrf.mxu0
      %v1494 = vadd.f32 0.0, %v1493
      %1495 = vmatmul.bf16.gmra.mxu0 %v1420
      %v1496 = vpop.f32.mrf.mxu0
      %v1497 = vadd.f32 0.0, %v1496
      %v1498 = vpop.f32.mrf.mxu0
      %v1499 = vadd.f32 0.0, %v1498
      %1500 = vmatmul.bf16.gmra.mxu0 %v1423
      %v1501 = vpop.f32.mrf.mxu0
      %v1502 = vadd.f32 0.0, %v1501
      %v1503 = vpop.f32.mrf.mxu0
      %v1504 = vadd.f32 0.0, %v1503
      %1505 = vmatmul.bf16.gmra.mxu0 %v1426
      %v1506 = vpop.f32.mrf.mxu0
      %v1507 = vadd.f32 0.0, %v1506
      %v1508 = vpop.f32.mrf.mxu0
      %v1509 = vadd.f32 0.0, %v1508
      %1510 = vmatmul.bf16.gmra.mxu0 %v1429
      %v1511 = vpop.f32.mrf.mxu0
      %v1512 = vadd.f32 0.0, %v1511
      %v1513 = vpop.f32.mrf.mxu0
      %v1514 = vadd.f32 0.0, %v1513
      %1515 = vmatmul.bf16.gmra.mxu0 %v1432
      %v1516 = vpop.f32.mrf.mxu0
      %v1517 = vadd.f32 0.0, %v1516
      %v1518 = vpop.f32.mrf.mxu0
      %v1519 = vadd.f32 0.0, %v1518
      %1520 = vmatmul.bf16.gmra.mxu0 %v1435
      %v1521 = vpop.f32.mrf.mxu0
      %v1522 = vadd.f32 0.0, %v1521
      %v1523 = vpop.f32.mrf.mxu0
      %v1524 = vadd.f32 0.0, %v1523
      %1525 = vmatmul.bf16.gmra.mxu0 %v1438
      %v1526 = vpop.f32.mrf.mxu0
      %v1527 = vadd.f32 0.0, %v1526
      %v1528 = vpop.f32.mrf.mxu0
      %v1529 = vadd.f32 0.0, %v1528
      %1530 = vmatmul.bf16.gmra.mxu0 %v1441
      %v1531 = vpop.f32.mrf.mxu0
      %v1532 = vadd.f32 0.0, %v1531
      %v1533 = vpop.f32.mrf.mxu0
      %v1534 = vadd.f32 0.0, %v1533
      %1535 = vdwg.mxu0
      %v1568 = vunpack.c.l.b16 %v1240
      %v1569 = vunpack.c.l.b16 %v1241
      %v1570 = vunpack.c.l.b16 %v1242
      %v1571 = vunpack.c.l.b16 %v1243
      %v1572 = vunpack.c.l.b16 %v1244
      %v1573 = vunpack.c.l.b16 %v1245
      %v1574 = vunpack.c.l.b16 %v1246
      %v1575 = vunpack.c.l.b16 %v1247
      %v1576 = vunpack.c.l.b16 %v1248
      %v1577 = vunpack.c.l.b16 %v1249
      %v1578 = vunpack.c.l.b16 %v1250
      %v1579 = vunpack.c.l.b16 %v1251
      %v1580 = vunpack.c.l.b16 %v1252
      %v1581 = vunpack.c.l.b16 %v1253
      %v1582 = vunpack.c.l.b16 %v1254
      %v1583 = vunpack.c.l.b16 %v1255
      %v1584 = vunpack.c.l.b16 %v1256
      %v1585 = vunpack.c.l.b16 %v1257
      %v1586 = vunpack.c.l.b16 %v1258
      %v1587 = vunpack.c.l.b16 %v1259
      %v1588 = vunpack.c.l.b16 %v1260
      %v1589 = vunpack.c.l.b16 %v1261
      %v1590 = vunpack.c.l.b16 %v1262
      %v1591 = vunpack.c.l.b16 %v1263
      %v1592 = vunpack.c.l.b16 %v1264
      %v1593 = vunpack.c.l.b16 %v1265
      %v1594 = vunpack.c.l.b16 %v1266
      %v1595 = vunpack.c.l.b16 %v1267
      %v1596 = vunpack.c.l.b16 %v1268
      %v1597 = vunpack.c.l.b16 %v1269
      %v1598 = vunpack.c.l.b16 %v1270
      %v1599 = vunpack.c.l.b16 %v1271
      %v1600 = vpack.c.b16 %v1569, %v1568
      %v1601 = vpack.c.b16 %v1571, %v1570
      %v1602 = vpack.c.b16 %v1573, %v1572
      %v1603 = vpack.c.b16 %v1575, %v1574
      %v1604 = vpack.c.b16 %v1577, %v1576
      %v1605 = vpack.c.b16 %v1579, %v1578
      %v1606 = vpack.c.b16 %v1581, %v1580
      %v1607 = vpack.c.b16 %v1583, %v1582
      %v1608 = vpack.c.b16 %v1585, %v1584
      %v1609 = vpack.c.b16 %v1587, %v1586
      %v1610 = vpack.c.b16 %v1589, %v1588
      %v1611 = vpack.c.b16 %v1591, %v1590
      %v1612 = vpack.c.b16 %v1593, %v1592
      %v1613 = vpack.c.b16 %v1595, %v1594
      %v1614 = vpack.c.b16 %v1597, %v1596
      %v1615 = vpack.c.b16 %v1599, %v1598
      %v1618 = vunpack.c.l.b16 %v1272
      %v1619 = vunpack.c.l.b16 %v1273
      %v1620 = vpack.c.b16 %v1619, %v1618
      %v1622 = vsel %vm1394, %v1600, 0
      %v1625 = vsel %vm1394, %v1601, 0
      %v1628 = vsel %vm1394, %v1602, 0
      %v1631 = vsel %vm1394, %v1603, 0
      %v1634 = vsel %vm1394, %v1604, 0
      %v1637 = vsel %vm1394, %v1605, 0
      %v1640 = vsel %vm1394, %v1606, 0
      %v1643 = vsel %vm1394, %v1607, 0
      %v1646 = vsel %vm1394, %v1608, 0
      %v1649 = vsel %vm1394, %v1609, 0
      %v1652 = vsel %vm1394, %v1610, 0
      %v1655 = vsel %vm1394, %v1611, 0
      %v1658 = vsel %vm1394, %v1612, 0
      %v1661 = vsel %vm1394, %v1613, 0
      %v1664 = vsel %vm1394, %v1614, 0
      %v1667 = vsel %vm1394, %v1615, 0
      %v1670 = vsel %vm1443, %v1620, 0
      %1672 = vmatpush.bf16.msra.mxu0 0
      %1673 = vmatpush.bf16.msra.mxu0 0
      %1674 = vmatpush.bf16.msra.mxu0 0
      %1675 = vmatpush.bf16.msra.mxu0 0
      %1676 = vmatpush.bf16.msra.mxu0 0
      %1677 = vmatpush.bf16.msra.mxu0 0
      %1678 = vmatpush.bf16.msra.mxu0 0
      %1679 = vmatpush.bf16.msra.mxu0 %v1670
      %1680 = vmatmul.bf16.gmra.mxu0 %v1622
      %v1681 = vpop.f32.mrf.mxu0
      %v1682 = vadd.f32 %v1457, %v1681
      %v1683 = vpop.f32.mrf.mxu0
      %v1684 = vadd.f32 %v1459, %v1683
      %1685 = vmatmul.bf16.gmra.mxu0 %v1625
      %v1686 = vpop.f32.mrf.mxu0
      %v1687 = vadd.f32 %v1462, %v1686
      %v1688 = vpop.f32.mrf.mxu0
      %v1689 = vadd.f32 %v1464, %v1688
      %1690 = vmatmul.bf16.gmra.mxu0 %v1628
      %v1691 = vpop.f32.mrf.mxu0
      %v1692 = vadd.f32 %v1467, %v1691
      %v1693 = vpop.f32.mrf.mxu0
      %v1694 = vadd.f32 %v1469, %v1693
      %1695 = vmatmul.bf16.gmra.mxu0 %v1631
      %v1696 = vpop.f32.mrf.mxu0
      %v1697 = vadd.f32 %v1472, %v1696
      %v1698 = vpop.f32.mrf.mxu0
      %v1699 = vadd.f32 %v1474, %v1698
      %1700 = vmatmul.bf16.gmra.mxu0 %v1634
      %v1701 = vpop.f32.mrf.mxu0
      %v1702 = vadd.f32 %v1477, %v1701
      %v1703 = vpop.f32.mrf.mxu0
      %v1704 = vadd.f32 %v1479, %v1703
      %1705 = vmatmul.bf16.gmra.mxu0 %v1637
      %v1706 = vpop.f32.mrf.mxu0
      %v1707 = vadd.f32 %v1482, %v1706
      %v1708 = vpop.f32.mrf.mxu0
      %v1709 = vadd.f32 %v1484, %v1708
      %1710 = vmatmul.bf16.gmra.mxu0 %v1640
      %v1711 = vpop.f32.mrf.mxu0
      %v1712 = vadd.f32 %v1487, %v1711
      %v1713 = vpop.f32.mrf.mxu0
      %v1714 = vadd.f32 %v1489, %v1713
      %1715 = vmatmul.bf16.gmra.mxu0 %v1643
      %v1716 = vpop.f32.mrf.mxu0
      %v1717 = vadd.f32 %v1492, %v1716
      %v1718 = vpop.f32.mrf.mxu0
      %v1719 = vadd.f32 %v1494, %v1718
      %1720 = vmatmul.bf16.gmra.mxu0 %v1646
      %v1721 = vpop.f32.mrf.mxu0
      %v1722 = vadd.f32 %v1497, %v1721
      %v1723 = vpop.f32.mrf.mxu0
      %v1724 = vadd.f32 %v1499, %v1723
      %1725 = vmatmul.bf16.gmra.mxu0 %v1649
      %v1726 = vpop.f32.mrf.mxu0
      %v1727 = vadd.f32 %v1502, %v1726
      %v1728 = vpop.f32.mrf.mxu0
      %v1729 = vadd.f32 %v1504, %v1728
      %1730 = vmatmul.bf16.gmra.mxu0 %v1652
      %v1731 = vpop.f32.mrf.mxu0
      %v1732 = vadd.f32 %v1507, %v1731
      %v1733 = vpop.f32.mrf.mxu0
      %v1734 = vadd.f32 %v1509, %v1733
      %1735 = vmatmul.bf16.gmra.mxu0 %v1655
      %v1736 = vpop.f32.mrf.mxu0
      %v1737 = vadd.f32 %v1512, %v1736
      %v1738 = vpop.f32.mrf.mxu0
      %v1739 = vadd.f32 %v1514, %v1738
      %1740 = vmatmul.bf16.gmra.mxu0 %v1658
      %v1741 = vpop.f32.mrf.mxu0
      %v1742 = vadd.f32 %v1517, %v1741
      %v1743 = vpop.f32.mrf.mxu0
      %v1744 = vadd.f32 %v1519, %v1743
      %1745 = vmatmul.bf16.gmra.mxu0 %v1661
      %v1746 = vpop.f32.mrf.mxu0
      %v1747 = vadd.f32 %v1522, %v1746
      %v1748 = vpop.f32.mrf.mxu0
      %v1749 = vadd.f32 %v1524, %v1748
      %1750 = vmatmul.bf16.gmra.mxu0 %v1664
      %v1751 = vpop.f32.mrf.mxu0
      %v1752 = vadd.f32 %v1527, %v1751
      %v1753 = vpop.f32.mrf.mxu0
      %v1754 = vadd.f32 %v1529, %v1753
      %1755 = vmatmul.bf16.gmra.mxu0 %v1667
      %v1756 = vpop.f32.mrf.mxu0
      %v1757 = vadd.f32 %v1532, %v1756
      %v1758 = vpop.f32.mrf.mxu0
      %v1759 = vadd.f32 %v1534, %v1758
      %1760 = vdwg.mxu0
      %s1761 = scalar_lea.vmem [#allocation2], 16
      %v1762 = vld [vmem:[%s1761] sm:$0xf]
      %v1763 = vld [vmem:[%s1761 + $0x4] sm:$0xf]
      %v1764 = vld [vmem:[%s1761 + $0x8] sm:$0xf]
      %v1765 = vld [vmem:[%s1761 + $0xc] sm:$0xf]
      %v1766 = vld [vmem:[%s1761 + $0x10] sm:$0xf]
      %v1767 = vld [vmem:[%s1761 + $0x14] sm:$0xf]
      %v1768 = vld [vmem:[%s1761 + $0x18] sm:$0xf]
      %v1769 = vld [vmem:[%s1761 + $0x1c] sm:$0xf]
      %v1770 = vld [vmem:[%s1761 + $0x20] sm:$0xf]
      %v1771 = vld [vmem:[%s1761 + $0x24] sm:$0xf]
      %v1772 = vld [vmem:[%s1761 + $0x28] sm:$0xf]
      %v1773 = vld [vmem:[%s1761 + $0x2c] sm:$0xf]
      %v1774 = vld [vmem:[%s1761 + $0x30] sm:$0xf]
      %v1775 = vld [vmem:[%s1761 + $0x34] sm:$0xf]
      %v1776 = vld [vmem:[%s1761 + $0x38] sm:$0xf]
      %v1777 = vld [vmem:[%s1761 + $0x3c] sm:$0xf]
      %v1778 = vld [vmem:[%s1761 + $0x40] sm:$0xf]
      %v1779 = vld [vmem:[%s1761 + $0x44] sm:$0xf]
      %v1780 = vld [vmem:[%s1761 + $0x48] sm:$0xf]
      %v1781 = vld [vmem:[%s1761 + $0x4c] sm:$0xf]
      %v1782 = vld [vmem:[%s1761 + $0x50] sm:$0xf]
      %v1783 = vld [vmem:[%s1761 + $0x54] sm:$0xf]
      %v1784 = vld [vmem:[%s1761 + $0x58] sm:$0xf]
      %v1785 = vld [vmem:[%s1761 + $0x5c] sm:$0xf]
      %v1786 = vld [vmem:[%s1761 + $0x60] sm:$0xf]
      %v1787 = vld [vmem:[%s1761 + $0x64] sm:$0xf]
      %v1788 = vld [vmem:[%s1761 + $0x68] sm:$0xf]
      %v1789 = vld [vmem:[%s1761 + $0x6c] sm:$0xf]
      %v1790 = vld [vmem:[%s1761 + $0x70] sm:$0xf]
      %v1791 = vld [vmem:[%s1761 + $0x74] sm:$0xf]
      %v1792 = vld [vmem:[%s1761 + $0x78] sm:$0xf]
      %v1793 = vld [vmem:[%s1761 + $0x7c] sm:$0xf]
      %s1794 = scalar_lea.vmem %s1, 16
      %v1795 = vld [vmem:[%s1794] sm:$0xf]
      %v1796 = vld [vmem:[%s1794 + $0x4] sm:$0x3]
      %v1829 = vunpack.c.l.b16 %v1762
      %v1830 = vunpack.c.l.b16 %v1763
      %v1831 = vunpack.c.l.b16 %v1764
      %v1832 = vunpack.c.l.b16 %v1765
      %v1833 = vunpack.c.l.b16 %v1766
      %v1834 = vunpack.c.l.b16 %v1767
      %v1835 = vunpack.c.l.b16 %v1768
      %v1836 = vunpack.c.l.b16 %v1769
      %v1837 = vunpack.c.l.b16 %v1770
      %v1838 = vunpack.c.l.b16 %v1771
      %v1839 = vunpack.c.l.b16 %v1772
      %v1840 = vunpack.c.l.b16 %v1773
      %v1841 = vunpack.c.l.b16 %v1774
      %v1842 = vunpack.c.l.b16 %v1775
      %v1843 = vunpack.c.l.b16 %v1776
      %v1844 = vunpack.c.l.b16 %v1777
      %v1845 = vunpack.c.l.b16 %v1778
      %v1846 = vunpack.c.l.b16 %v1779
      %v1847 = vunpack.c.l.b16 %v1780
      %v1848 = vunpack.c.l.b16 %v1781
      %v1849 = vunpack.c.l.b16 %v1782
      %v1850 = vunpack.c.l.b16 %v1783
      %v1851 = vunpack.c.l.b16 %v1784
      %v1852 = vunpack.c.l.b16 %v1785
      %v1853 = vunpack.c.l.b16 %v1786
      %v1854 = vunpack.c.l.b16 %v1787
      %v1855 = vunpack.c.l.b16 %v1788
      %v1856 = vunpack.c.l.b16 %v1789
      %v1857 = vunpack.c.l.b16 %v1790
      %v1858 = vunpack.c.l.b16 %v1791
      %v1859 = vunpack.c.l.b16 %v1792
      %v1860 = vunpack.c.l.b16 %v1793
      %v1861 = vpack.c.b16 %v1830, %v1829
      %v1862 = vpack.c.b16 %v1832, %v1831
      %v1863 = vpack.c.b16 %v1834, %v1833
      %v1864 = vpack.c.b16 %v1836, %v1835
      %v1865 = vpack.c.b16 %v1838, %v1837
      %v1866 = vpack.c.b16 %v1840, %v1839
      %v1867 = vpack.c.b16 %v1842, %v1841
      %v1868 = vpack.c.b16 %v1844, %v1843
      %v1869 = vpack.c.b16 %v1846, %v1845
      %v1870 = vpack.c.b16 %v1848, %v1847
      %v1871 = vpack.c.b16 %v1850, %v1849
      %v1872 = vpack.c.b16 %v1852, %v1851
      %v1873 = vpack.c.b16 %v1854, %v1853
      %v1874 = vpack.c.b16 %v1856, %v1855
      %v1875 = vpack.c.b16 %v1858, %v1857
      %v1876 = vpack.c.b16 %v1860, %v1859
      %v1879 = vunpack.c.l.b16 %v1795
      %v1880 = vunpack.c.l.b16 %v1796
      %v1881 = vpack.c.b16 %v1880, %v1879
      %v1883 = vsel %vm1394, %v1861, 0
      %v1886 = vsel %vm1394, %v1862, 0
      %v1889 = vsel %vm1394, %v1863, 0
      %v1892 = vsel %vm1394, %v1864, 0
      %v1895 = vsel %vm1394, %v1865, 0
      %v1898 = vsel %vm1394, %v1866, 0
      %v1901 = vsel %vm1394, %v1867, 0
      %v1904 = vsel %vm1394, %v1868, 0
      %v1907 = vsel %vm1394, %v1869, 0
      %v1910 = vsel %vm1394, %v1870, 0
      %v1913 = vsel %vm1394, %v1871, 0
      %v1916 = vsel %vm1394, %v1872, 0
      %v1919 = vsel %vm1394, %v1873, 0
      %v1922 = vsel %vm1394, %v1874, 0
      %v1925 = vsel %vm1394, %v1875, 0
      %v1928 = vsel %vm1394, %v1876, 0
      %v1931 = vsel %vm1443, %v1881, 0
      %1933 = vmatpush.bf16.msra.mxu0 0
      %1934 = vmatpush.bf16.msra.mxu0 0
      %1935 = vmatpush.bf16.msra.mxu0 0
      %1936 = vmatpush.bf16.msra.mxu0 0
      %1937 = vmatpush.bf16.msra.mxu0 0
      %1938 = vmatpush.bf16.msra.mxu0 0
      %1939 = vmatpush.bf16.msra.mxu0 0
      %1940 = vmatpush.bf16.msra.mxu0 %v1931
      %1941 = vmatmul.bf16.gmra.mxu0 %v1883
      %v1942 = vpop.f32.mrf.mxu0
      %v1943 = vadd.f32 0.0, %v1942
      %v1944 = vpop.f32.mrf.mxu0
      %v1945 = vadd.f32 0.0, %v1944
      %1946 = vmatmul.bf16.gmra.mxu0 %v1886
      %v1947 = vpop.f32.mrf.mxu0
      %v1948 = vadd.f32 0.0, %v1947
      %v1949 = vpop.f32.mrf.mxu0
      %v1950 = vadd.f32 0.0, %v1949
      %1951 = vmatmul.bf16.gmra.mxu0 %v1889
      %v1952 = vpop.f32.mrf.mxu0
      %v1953 = vadd.f32 0.0, %v1952
      %v1954 = vpop.f32.mrf.mxu0
      %v1955 = vadd.f32 0.0, %v1954
      %1956 = vmatmul.bf16.gmra.mxu0 %v1892
      %v1957 = vpop.f32.mrf.mxu0
      %v1958 = vadd.f32 0.0, %v1957
      %v1959 = vpop.f32.mrf.mxu0
      %v1960 = vadd.f32 0.0, %v1959
      %1961 = vmatmul.bf16.gmra.mxu0 %v1895
      %v1962 = vpop.f32.mrf.mxu0
      %v1963 = vadd.f32 0.0, %v1962
      %v1964 = vpop.f32.mrf.mxu0
      %v1965 = vadd.f32 0.0, %v1964
      %1966 = vmatmul.bf16.gmra.mxu0 %v1898
      %v1967 = vpop.f32.mrf.mxu0
      %v1968 = vadd.f32 0.0, %v1967
      %v1969 = vpop.f32.mrf.mxu0
      %v1970 = vadd.f32 0.0, %v1969
      %1971 = vmatmul.bf16.gmra.mxu0 %v1901
      %v1972 = vpop.f32.mrf.mxu0
      %v1973 = vadd.f32 0.0, %v1972
      %v1974 = vpop.f32.mrf.mxu0
      %v1975 = vadd.f32 0.0, %v1974
      %1976 = vmatmul.bf16.gmra.mxu0 %v1904
      %v1977 = vpop.f32.mrf.mxu0
      %v1978 = vadd.f32 0.0, %v1977
      %v1979 = vpop.f32.mrf.mxu0
      %v1980 = vadd.f32 0.0, %v1979
      %1981 = vmatmul.bf16.gmra.mxu0 %v1907
      %v1982 = vpop.f32.mrf.mxu0
      %v1983 = vadd.f32 0.0, %v1982
      %v1984 = vpop.f32.mrf.mxu0
      %v1985 = vadd.f32 0.0, %v1984
      %1986 = vmatmul.bf16.gmra.mxu0 %v1910
      %v1987 = vpop.f32.mrf.mxu0
      %v1988 = vadd.f32 0.0, %v1987
      %v1989 = vpop.f32.mrf.mxu0
      %v1990 = vadd.f32 0.0, %v1989
      %1991 = vmatmul.bf16.gmra.mxu0 %v1913
      %v1992 = vpop.f32.mrf.mxu0
      %v1993 = vadd.f32 0.0, %v1992
      %v1994 = vpop.f32.mrf.mxu0
      %v1995 = vadd.f32 0.0, %v1994
      %1996 = vmatmul.bf16.gmra.mxu0 %v1916
      %v1997 = vpop.f32.mrf.mxu0
      %v1998 = vadd.f32 0.0, %v1997
      %v1999 = vpop.f32.mrf.mxu0
      %v2000 = vadd.f32 0.0, %v1999
      %2001 = vmatmul.bf16.gmra.mxu0 %v1919
      %v2002 = vpop.f32.mrf.mxu0
      %v2003 = vadd.f32 0.0, %v2002
      %v2004 = vpop.f32.mrf.mxu0
      %v2005 = vadd.f32 0.0, %v2004
      %2006 = vmatmul.bf16.gmra.mxu0 %v1922
      %v2007 = vpop.f32.mrf.mxu0
      %v2008 = vadd.f32 0.0, %v2007
      %v2009 = vpop.f32.mrf.mxu0
      %v2010 = vadd.f32 0.0, %v2009
      %2011 = vmatmul.bf16.gmra.mxu0 %v1925
      %v2012 = vpop.f32.mrf.mxu0
      %v2013 = vadd.f32 0.0, %v2012
      %v2014 = vpop.f32.mrf.mxu0
      %v2015 = vadd.f32 0.0, %v2014
      %2016 = vmatmul.bf16.gmra.mxu0 %v1928
      %v2017 = vpop.f32.mrf.mxu0
      %v2018 = vadd.f32 0.0, %v2017
      %v2019 = vpop.f32.mrf.mxu0
      %v2020 = vadd.f32 0.0, %v2019
      %2021 = vdwg.mxu0
      %v2022 = vadd.f32 %v1682, %v1943
      %v2023 = vadd.f32 %v1684, %v1945
      %v2024 = vadd.f32 %v1687, %v1948
      %v2025 = vadd.f32 %v1689, %v1950
      %v2026 = vadd.f32 %v1692, %v1953
      %v2027 = vadd.f32 %v1694, %v1955
      %v2028 = vadd.f32 %v1697, %v1958
      %v2029 = vadd.f32 %v1699, %v1960
      %v2030 = vadd.f32 %v1702, %v1963
      %v2031 = vadd.f32 %v1704, %v1965
      %v2032 = vadd.f32 %v1707, %v1968
      %v2033 = vadd.f32 %v1709, %v1970
      %v2034 = vadd.f32 %v1712, %v1973
      %v2035 = vadd.f32 %v1714, %v1975
      %v2036 = vadd.f32 %v1717, %v1978
      %v2037 = vadd.f32 %v1719, %v1980
      %v2038 = vadd.f32 %v1722, %v1983
      %v2039 = vadd.f32 %v1724, %v1985
      %v2040 = vadd.f32 %v1727, %v1988
      %v2041 = vadd.f32 %v1729, %v1990
      %v2042 = vadd.f32 %v1732, %v1993
      %v2043 = vadd.f32 %v1734, %v1995
      %v2044 = vadd.f32 %v1737, %v1998
      %v2045 = vadd.f32 %v1739, %v2000
      %v2046 = vadd.f32 %v1742, %v2003
      %v2047 = vadd.f32 %v1744, %v2005
      %v2048 = vadd.f32 %v1747, %v2008
      %v2049 = vadd.f32 %v1749, %v2010
      %v2050 = vadd.f32 %v1752, %v2013
      %v2051 = vadd.f32 %v1754, %v2015
      %v2052 = vadd.f32 %v1757, %v2018
      %v2053 = vadd.f32 %v1759, %v2020
      %v2054 = vld [vmem:[%s2] sm:$0x1]
      %v2056 = vperm.slane %v2054, 0
      %v2058 = vadd.f32 %v2022, %v2056
      %v2059 = vadd.f32 %v2023, %v2056
      %v2060 = vadd.f32 %v2024, %v2056
      %v2061 = vadd.f32 %v2025, %v2056
      %v2062 = vadd.f32 %v2026, %v2056
      %v2063 = vadd.f32 %v2027, %v2056
      %v2064 = vadd.f32 %v2028, %v2056
      %v2065 = vadd.f32 %v2029, %v2056
      %v2066 = vadd.f32 %v2030, %v2056
      %v2067 = vadd.f32 %v2031, %v2056
      %v2068 = vadd.f32 %v2032, %v2056
      %v2069 = vadd.f32 %v2033, %v2056
      %v2070 = vadd.f32 %v2034, %v2056
      %v2071 = vadd.f32 %v2035, %v2056
      %v2072 = vadd.f32 %v2036, %v2056
      %v2073 = vadd.f32 %v2037, %v2056
      %v2074 = vadd.f32 %v2038, %v2056
      %v2075 = vadd.f32 %v2039, %v2056
      %v2076 = vadd.f32 %v2040, %v2056
      %v2077 = vadd.f32 %v2041, %v2056
      %v2078 = vadd.f32 %v2042, %v2056
      %v2079 = vadd.f32 %v2043, %v2056
      %v2080 = vadd.f32 %v2044, %v2056
      %v2081 = vadd.f32 %v2045, %v2056
      %v2082 = vadd.f32 %v2046, %v2056
      %v2083 = vadd.f32 %v2047, %v2056
      %v2084 = vadd.f32 %v2048, %v2056
      %v2085 = vadd.f32 %v2049, %v2056
      %v2086 = vadd.f32 %v2050, %v2056
      %v2087 = vadd.f32 %v2051, %v2056
      %v2088 = vadd.f32 %v2052, %v2056
      %v2089 = vadd.f32 %v2053, %v2056
      %v2090 = vmax.f32 %v2058, 0.0
      %v2091 = vmax.f32 %v2059, 0.0
      %v2092 = vmax.f32 %v2060, 0.0
      %v2093 = vmax.f32 %v2061, 0.0
      %v2094 = vmax.f32 %v2062, 0.0
      %v2095 = vmax.f32 %v2063, 0.0
      %v2096 = vmax.f32 %v2064, 0.0
      %v2097 = vmax.f32 %v2065, 0.0
      %v2098 = vmax.f32 %v2066, 0.0
      %v2099 = vmax.f32 %v2067, 0.0
      %v2100 = vmax.f32 %v2068, 0.0
      %v2101 = vmax.f32 %v2069, 0.0
      %v2102 = vmax.f32 %v2070, 0.0
      %v2103 = vmax.f32 %v2071, 0.0
      %v2104 = vmax.f32 %v2072, 0.0
      %v2105 = vmax.f32 %v2073, 0.0
      %v2106 = vmax.f32 %v2074, 0.0
      %v2107 = vmax.f32 %v2075, 0.0
      %v2108 = vmax.f32 %v2076, 0.0
      %v2109 = vmax.f32 %v2077, 0.0
      %v2110 = vmax.f32 %v2078, 0.0
      %v2111 = vmax.f32 %v2079, 0.0
      %v2112 = vmax.f32 %v2080, 0.0
      %v2113 = vmax.f32 %v2081, 0.0
      %v2114 = vmax.f32 %v2082, 0.0
      %v2115 = vmax.f32 %v2083, 0.0
      %v2116 = vmax.f32 %v2084, 0.0
      %v2117 = vmax.f32 %v2085, 0.0
      %v2118 = vmax.f32 %v2086, 0.0
      %v2119 = vmax.f32 %v2087, 0.0
      %v2120 = vmax.f32 %v2088, 0.0
      %v2121 = vmax.f32 %v2089, 0.0
      %v2122 = vpack.c.bf16 %v2090, %v2090
      %v2123 = vpack.c.bf16 %v2091, %v2091
      %v2124 = vpack.c.bf16 %v2092, %v2092
      %v2125 = vpack.c.bf16 %v2093, %v2093
      %v2126 = vpack.c.bf16 %v2094, %v2094
      %v2127 = vpack.c.bf16 %v2095, %v2095
      %v2128 = vpack.c.bf16 %v2096, %v2096
      %v2129 = vpack.c.bf16 %v2097, %v2097
      %v2130 = vpack.c.bf16 %v2098, %v2098
      %v2131 = vpack.c.bf16 %v2099, %v2099
      %v2132 = vpack.c.bf16 %v2100, %v2100
      %v2133 = vpack.c.bf16 %v2101, %v2101
      %v2134 = vpack.c.bf16 %v2102, %v2102
      %v2135 = vpack.c.bf16 %v2103, %v2103
      %v2136 = vpack.c.bf16 %v2104, %v2104
      %v2137 = vpack.c.bf16 %v2105, %v2105
      %v2138 = vpack.c.bf16 %v2106, %v2106
      %v2139 = vpack.c.bf16 %v2107, %v2107
      %v2140 = vpack.c.bf16 %v2108, %v2108
      %v2141 = vpack.c.bf16 %v2109, %v2109
      %v2142 = vpack.c.bf16 %v2110, %v2110
      %v2143 = vpack.c.bf16 %v2111, %v2111
      %v2144 = vpack.c.bf16 %v2112, %v2112
      %v2145 = vpack.c.bf16 %v2113, %v2113
      %v2146 = vpack.c.bf16 %v2114, %v2114
      %v2147 = vpack.c.bf16 %v2115, %v2115
      %v2148 = vpack.c.bf16 %v2116, %v2116
      %v2149 = vpack.c.bf16 %v2117, %v2117
      %v2150 = vpack.c.bf16 %v2118, %v2118
      %v2151 = vpack.c.bf16 %v2119, %v2119
      %v2152 = vpack.c.bf16 %v2120, %v2120
      %v2153 = vpack.c.bf16 %v2121, %v2121
      %2186 = vrot.lane.b32.xlu0 %v2122, 4
      %v2187 = vpop.permute.xlu0 %2186
      %2188 = vrot.lane.b32.xlu0 %v2123, 4
      %v2189 = vpop.permute.xlu0 %2188
      %2190 = vrot.lane.b32.xlu0 %v2124, 4
      %v2191 = vpop.permute.xlu0 %2190
      %2192 = vrot.lane.b32.xlu0 %v2125, 4
      %v2193 = vpop.permute.xlu0 %2192
      %2194 = vrot.lane.b32.xlu0 %v2126, 4
      %v2195 = vpop.permute.xlu0 %2194
      %2196 = vrot.lane.b32.xlu0 %v2127, 4
      %v2197 = vpop.permute.xlu0 %2196
      %2198 = vrot.lane.b32.xlu0 %v2128, 4
      %v2199 = vpop.permute.xlu0 %2198
      %2200 = vrot.lane.b32.xlu0 %v2129, 4
      %v2201 = vpop.permute.xlu0 %2200
      %2202 = vrot.lane.b32.xlu0 %v2130, 4
      %v2203 = vpop.permute.xlu0 %2202
      %2204 = vrot.lane.b32.xlu0 %v2131, 4
      %v2205 = vpop.permute.xlu0 %2204
      %2206 = vrot.lane.b32.xlu0 %v2132, 4
      %v2207 = vpop.permute.xlu0 %2206
      %2208 = vrot.lane.b32.xlu0 %v2133, 4
      %v2209 = vpop.permute.xlu0 %2208
      %2210 = vrot.lane.b32.xlu0 %v2134, 4
      %v2211 = vpop.permute.xlu0 %2210
      %2212 = vrot.lane.b32.xlu0 %v2135, 4
      %v2213 = vpop.permute.xlu0 %2212
      %2214 = vrot.lane.b32.xlu0 %v2136, 4
      %v2215 = vpop.permute.xlu0 %2214
      %2216 = vrot.lane.b32.xlu0 %v2137, 4
      %v2217 = vpop.permute.xlu0 %2216
      %2218 = vrot.lane.b32.xlu0 %v2138, 4
      %v2219 = vpop.permute.xlu0 %2218
      %2220 = vrot.lane.b32.xlu0 %v2139, 4
      %v2221 = vpop.permute.xlu0 %2220
      %2222 = vrot.lane.b32.xlu0 %v2140, 4
      %v2223 = vpop.permute.xlu0 %2222
      %2224 = vrot.lane.b32.xlu0 %v2141, 4
      %v2225 = vpop.permute.xlu0 %2224
      %2226 = vrot.lane.b32.xlu0 %v2142, 4
      %v2227 = vpop.permute.xlu0 %2226
      %2228 = vrot.lane.b32.xlu0 %v2143, 4
      %v2229 = vpop.permute.xlu0 %2228
      %2230 = vrot.lane.b32.xlu0 %v2144, 4
      %v2231 = vpop.permute.xlu0 %2230
      %2232 = vrot.lane.b32.xlu0 %v2145, 4
      %v2233 = vpop.permute.xlu0 %2232
      %2234 = vrot.lane.b32.xlu0 %v2146, 4
      %v2235 = vpop.permute.xlu0 %2234
      %2236 = vrot.lane.b32.xlu0 %v2147, 4
      %v2237 = vpop.permute.xlu0 %2236
      %2238 = vrot.lane.b32.xlu0 %v2148, 4
      %v2239 = vpop.permute.xlu0 %2238
      %2240 = vrot.lane.b32.xlu0 %v2149, 4
      %v2241 = vpop.permute.xlu0 %2240
      %2242 = vrot.lane.b32.xlu0 %v2150, 4
      %v2243 = vpop.permute.xlu0 %2242
      %2244 = vrot.lane.b32.xlu0 %v2151, 4
      %v2245 = vpop.permute.xlu0 %2244
      %2246 = vrot.lane.b32.xlu0 %v2152, 4
      %v2247 = vpop.permute.xlu0 %2246
      %2248 = vrot.lane.b32.xlu0 %v2153, 4
      %v2249 = vpop.permute.xlu0 %2248
      %2282 = vst.msk [vmem:[%s538] sm:$0xf] %vm539, %v2187
      %2283 = vst.msk [vmem:[%s538 + $0x4] sm:$0xf] %vm539, %v2189
      %2284 = vst.msk [vmem:[%s538 + $0x8] sm:$0xf] %vm539, %v2191
      %2285 = vst.msk [vmem:[%s538 + $0xc] sm:$0xf] %vm539, %v2193
      %2286 = vst.msk [vmem:[%s538 + $0x10] sm:$0xf] %vm539, %v2195
      %2287 = vst.msk [vmem:[%s538 + $0x14] sm:$0xf] %vm539, %v2197
      %2288 = vst.msk [vmem:[%s538 + $0x18] sm:$0xf] %vm539, %v2199
      %2289 = vst.msk [vmem:[%s538 + $0x1c] sm:$0xf] %vm539, %v2201
      %2290 = vst.msk [vmem:[%s538 + $0x20] sm:$0xf] %vm539, %v2203
      %2291 = vst.msk [vmem:[%s538 + $0x24] sm:$0xf] %vm539, %v2205
      %2292 = vst.msk [vmem:[%s538 + $0x28] sm:$0xf] %vm539, %v2207
      %2293 = vst.msk [vmem:[%s538 + $0x2c] sm:$0xf] %vm539, %v2209
      %2294 = vst.msk [vmem:[%s538 + $0x30] sm:$0xf] %vm539, %v2211
      %2295 = vst.msk [vmem:[%s538 + $0x34] sm:$0xf] %vm539, %v2213
      %2296 = vst.msk [vmem:[%s538 + $0x38] sm:$0xf] %vm539, %v2215
      %2297 = vst.msk [vmem:[%s538 + $0x3c] sm:$0xf] %vm539, %v2217
      %2298 = vst.msk [vmem:[%s538 + $0x40] sm:$0xf] %vm539, %v2219
      %2299 = vst.msk [vmem:[%s538 + $0x44] sm:$0xf] %vm539, %v2221
      %2300 = vst.msk [vmem:[%s538 + $0x48] sm:$0xf] %vm539, %v2223
      %2301 = vst.msk [vmem:[%s538 + $0x4c] sm:$0xf] %vm539, %v2225
      %2302 = vst.msk [vmem:[%s538 + $0x50] sm:$0xf] %vm539, %v2227
      %2303 = vst.msk [vmem:[%s538 + $0x54] sm:$0xf] %vm539, %v2229
      %2304 = vst.msk [vmem:[%s538 + $0x58] sm:$0xf] %vm539, %v2231
      %2305 = vst.msk [vmem:[%s538 + $0x5c] sm:$0xf] %vm539, %v2233
      %2306 = vst.msk [vmem:[%s538 + $0x60] sm:$0xf] %vm539, %v2235
      %2307 = vst.msk [vmem:[%s538 + $0x64] sm:$0xf] %vm539, %v2237
      %2308 = vst.msk [vmem:[%s538 + $0x68] sm:$0xf] %vm539, %v2239
      %2309 = vst.msk [vmem:[%s538 + $0x6c] sm:$0xf] %vm539, %v2241
      %2310 = vst.msk [vmem:[%s538 + $0x70] sm:$0xf] %vm539, %v2243
      %2311 = vst.msk [vmem:[%s538 + $0x74] sm:$0xf] %vm539, %v2245
      %2312 = vst.msk [vmem:[%s538 + $0x78] sm:$0xf] %vm539, %v2247
      %2313 = vst.msk [vmem:[%s538 + $0x7c] sm:$0xf] %vm539, %v2249
      %v2315 = vshrl.u32 %v2122, 16
      %v2317 = vrot.slane %v2315, 7
      %v2318 = vshll.u32 %v2122, 16
      %v2320 = vor.u32 %v2317, %v2318
      %v2321 = vrot.slane %v2317, 4
      %v2323 = vshrl.u32 %v2123, 16
      %v2325 = vrot.slane %v2323, 7
      %v2326 = vshll.u32 %v2123, 16
      %v2328 = vor.u32 %v2325, %v2326
      %v2329 = vsel %vm573, %v2321, %v2328
      %v2331 = vshrl.u32 %v2124, 16
      %v2333 = vrot.slane %v2331, 7
      %v2334 = vshll.u32 %v2124, 16
      %v2336 = vor.u32 %v2333, %v2334
      %v2337 = vrot.slane %v2333, 4
      %v2339 = vshrl.u32 %v2125, 16
      %v2341 = vrot.slane %v2339, 7
      %v2342 = vshll.u32 %v2125, 16
      %v2344 = vor.u32 %v2341, %v2342
      %v2345 = vsel %vm573, %v2337, %v2344
      %v2347 = vshrl.u32 %v2126, 16
      %v2349 = vrot.slane %v2347, 7
      %v2350 = vshll.u32 %v2126, 16
      %v2352 = vor.u32 %v2349, %v2350
      %v2353 = vrot.slane %v2349, 4
      %v2355 = vshrl.u32 %v2127, 16
      %v2357 = vrot.slane %v2355, 7
      %v2358 = vshll.u32 %v2127, 16
      %v2360 = vor.u32 %v2357, %v2358
      %v2361 = vsel %vm573, %v2353, %v2360
      %v2363 = vshrl.u32 %v2128, 16
      %v2365 = vrot.slane %v2363, 7
      %v2366 = vshll.u32 %v2128, 16
      %v2368 = vor.u32 %v2365, %v2366
      %v2369 = vrot.slane %v2365, 4
      %v2371 = vshrl.u32 %v2129, 16
      %v2373 = vrot.slane %v2371, 7
      %v2374 = vshll.u32 %v2129, 16
      %v2376 = vor.u32 %v2373, %v2374
      %v2377 = vsel %vm573, %v2369, %v2376
      %v2379 = vshrl.u32 %v2130, 16
      %v2381 = vrot.slane %v2379, 7
      %v2382 = vshll.u32 %v2130, 16
      %v2384 = vor.u32 %v2381, %v2382
      %v2385 = vrot.slane %v2381, 4
      %v2387 = vshrl.u32 %v2131, 16
      %v2389 = vrot.slane %v2387, 7
      %v2390 = vshll.u32 %v2131, 16
      %v2392 = vor.u32 %v2389, %v2390
      %v2393 = vsel %vm573, %v2385, %v2392
      %v2395 = vshrl.u32 %v2132, 16
      %v2397 = vrot.slane %v2395, 7
      %v2398 = vshll.u32 %v2132, 16
      %v2400 = vor.u32 %v2397, %v2398
      %v2401 = vrot.slane %v2397, 4
      %v2403 = vshrl.u32 %v2133, 16
      %v2405 = vrot.slane %v2403, 7
      %v2406 = vshll.u32 %v2133, 16
      %v2408 = vor.u32 %v2405, %v2406
      %v2409 = vsel %vm573, %v2401, %v2408
      %v2411 = vshrl.u32 %v2134, 16
      %v2413 = vrot.slane %v2411, 7
      %v2414 = vshll.u32 %v2134, 16
      %v2416 = vor.u32 %v2413, %v2414
      %v2417 = vrot.slane %v2413, 4
      %v2419 = vshrl.u32 %v2135, 16
      %v2421 = vrot.slane %v2419, 7
      %v2422 = vshll.u32 %v2135, 16
      %v2424 = vor.u32 %v2421, %v2422
      %v2425 = vsel %vm573, %v2417, %v2424
      %v2427 = vshrl.u32 %v2136, 16
      %v2429 = vrot.slane %v2427, 7
      %v2430 = vshll.u32 %v2136, 16
      %v2432 = vor.u32 %v2429, %v2430
      %v2433 = vrot.slane %v2429, 4
      %v2435 = vshrl.u32 %v2137, 16
      %v2437 = vrot.slane %v2435, 7
      %v2438 = vshll.u32 %v2137, 16
      %v2440 = vor.u32 %v2437, %v2438
      %v2441 = vsel %vm573, %v2433, %v2440
      %v2443 = vshrl.u32 %v2138, 16
      %v2445 = vrot.slane %v2443, 7
      %v2446 = vshll.u32 %v2138, 16
      %v2448 = vor.u32 %v2445, %v2446
      %v2449 = vrot.slane %v2445, 4
      %v2451 = vshrl.u32 %v2139, 16
      %v2453 = vrot.slane %v2451, 7
      %v2454 = vshll.u32 %v2139, 16
      %v2456 = vor.u32 %v2453, %v2454
      %v2457 = vsel %vm573, %v2449, %v2456
      %v2459 = vshrl.u32 %v2140, 16
      %v2461 = vrot.slane %v2459, 7
      %v2462 = vshll.u32 %v2140, 16
      %v2464 = vor.u32 %v2461, %v2462
      %v2465 = vrot.slane %v2461, 4
      %v2467 = vshrl.u32 %v2141, 16
      %v2469 = vrot.slane %v2467, 7
      %v2470 = vshll.u32 %v2141, 16
      %v2472 = vor.u32 %v2469, %v2470
      %v2473 = vsel %vm573, %v2465, %v2472
      %v2475 = vshrl.u32 %v2142, 16
      %v2477 = vrot.slane %v2475, 7
      %v2478 = vshll.u32 %v2142, 16
      %v2480 = vor.u32 %v2477, %v2478
      %v2481 = vrot.slane %v2477, 4
      %v2483 = vshrl.u32 %v2143, 16
      %v2485 = vrot.slane %v2483, 7
      %v2486 = vshll.u32 %v2143, 16
      %v2488 = vor.u32 %v2485, %v2486
      %v2489 = vsel %vm573, %v2481, %v2488
      %v2491 = vshrl.u32 %v2144, 16
      %v2493 = vrot.slane %v2491, 7
      %v2494 = vshll.u32 %v2144, 16
      %v2496 = vor.u32 %v2493, %v2494
      %v2497 = vrot.slane %v2493, 4
      %v2499 = vshrl.u32 %v2145, 16
      %v2501 = vrot.slane %v2499, 7
      %v2502 = vshll.u32 %v2145, 16
      %v2504 = vor.u32 %v2501, %v2502
      %v2505 = vsel %vm573, %v2497, %v2504
      %v2507 = vshrl.u32 %v2146, 16
      %v2509 = vrot.slane %v2507, 7
      %v2510 = vshll.u32 %v2146, 16
      %v2512 = vor.u32 %v2509, %v2510
      %v2513 = vrot.slane %v2509, 4
      %v2515 = vshrl.u32 %v2147, 16
      %v2517 = vrot.slane %v2515, 7
      %v2518 = vshll.u32 %v2147, 16
      %v2520 = vor.u32 %v2517, %v2518
      %v2521 = vsel %vm573, %v2513, %v2520
      %v2523 = vshrl.u32 %v2148, 16
      %v2525 = vrot.slane %v2523, 7
      %v2526 = vshll.u32 %v2148, 16
      %v2528 = vor.u32 %v2525, %v2526
      %v2529 = vrot.slane %v2525, 4
      %v2531 = vshrl.u32 %v2149, 16
      %v2533 = vrot.slane %v2531, 7
      %v2534 = vshll.u32 %v2149, 16
      %v2536 = vor.u32 %v2533, %v2534
      %v2537 = vsel %vm573, %v2529, %v2536
      %v2539 = vshrl.u32 %v2150, 16
      %v2541 = vrot.slane %v2539, 7
      %v2542 = vshll.u32 %v2150, 16
      %v2544 = vor.u32 %v2541, %v2542
      %v2545 = vrot.slane %v2541, 4
      %v2547 = vshrl.u32 %v2151, 16
      %v2549 = vrot.slane %v2547, 7
      %v2550 = vshll.u32 %v2151, 16
      %v2552 = vor.u32 %v2549, %v2550
      %v2553 = vsel %vm573, %v2545, %v2552
      %v2555 = vshrl.u32 %v2152, 16
      %v2557 = vrot.slane %v2555, 7
      %v2558 = vshll.u32 %v2152, 16
      %v2560 = vor.u32 %v2557, %v2558
      %v2561 = vrot.slane %v2557, 4
      %v2563 = vshrl.u32 %v2153, 16
      %v2565 = vrot.slane %v2563, 7
      %v2566 = vshll.u32 %v2153, 16
      %v2568 = vor.u32 %v2565, %v2566
      %v2569 = vsel %vm573, %v2561, %v2568
      %v2602 = vld [vmem:[%s538] sm:$0xf]
      %v2603 = vsel %vm864, %v2320, %v2602
      %2604 = vst [vmem:[%s538] sm:$0xf] %v2603
      %2605 = vst.msk [vmem:[%s538 + $0x4] sm:$0xf] %vm868, %v2329
      %v2606 = vld [vmem:[%s538 + $0x8] sm:$0xf]
      %v2607 = vsel %vm864, %v2336, %v2606
      %2608 = vst [vmem:[%s538 + $0x8] sm:$0xf] %v2607
      %2609 = vst.msk [vmem:[%s538 + $0xc] sm:$0xf] %vm868, %v2345
      %v2610 = vld [vmem:[%s538 + $0x10] sm:$0xf]
      %v2611 = vsel %vm864, %v2352, %v2610
      %2612 = vst [vmem:[%s538 + $0x10] sm:$0xf] %v2611
      %2613 = vst.msk [vmem:[%s538 + $0x14] sm:$0xf] %vm868, %v2361
      %v2614 = vld [vmem:[%s538 + $0x18] sm:$0xf]
      %v2615 = vsel %vm864, %v2368, %v2614
      %2616 = vst [vmem:[%s538 + $0x18] sm:$0xf] %v2615
      %2617 = vst.msk [vmem:[%s538 + $0x1c] sm:$0xf] %vm868, %v2377
      %v2618 = vld [vmem:[%s538 + $0x20] sm:$0xf]
      %v2619 = vsel %vm864, %v2384, %v2618
      %2620 = vst [vmem:[%s538 + $0x20] sm:$0xf] %v2619
      %2621 = vst.msk [vmem:[%s538 + $0x24] sm:$0xf] %vm868, %v2393
      %v2622 = vld [vmem:[%s538 + $0x28] sm:$0xf]
      %v2623 = vsel %vm864, %v2400, %v2622
      %2624 = vst [vmem:[%s538 + $0x28] sm:$0xf] %v2623
      %2625 = vst.msk [vmem:[%s538 + $0x2c] sm:$0xf] %vm868, %v2409
      %v2626 = vld [vmem:[%s538 + $0x30] sm:$0xf]
      %v2627 = vsel %vm864, %v2416, %v2626
      %2628 = vst [vmem:[%s538 + $0x30] sm:$0xf] %v2627
      %2629 = vst.msk [vmem:[%s538 + $0x34] sm:$0xf] %vm868, %v2425
      %v2630 = vld [vmem:[%s538 + $0x38] sm:$0xf]
      %v2631 = vsel %vm864, %v2432, %v2630
      %2632 = vst [vmem:[%s538 + $0x38] sm:$0xf] %v2631
      %2633 = vst.msk [vmem:[%s538 + $0x3c] sm:$0xf] %vm868, %v2441
      %v2634 = vld [vmem:[%s538 + $0x40] sm:$0xf]
      %v2635 = vsel %vm864, %v2448, %v2634
      %2636 = vst [vmem:[%s538 + $0x40] sm:$0xf] %v2635
      %2637 = vst.msk [vmem:[%s538 + $0x44] sm:$0xf] %vm868, %v2457
      %v2638 = vld [vmem:[%s538 + $0x48] sm:$0xf]
      %v2639 = vsel %vm864, %v2464, %v2638
      %2640 = vst [vmem:[%s538 + $0x48] sm:$0xf] %v2639
      %2641 = vst.msk [vmem:[%s538 + $0x4c] sm:$0xf] %vm868, %v2473
      %v2642 = vld [vmem:[%s538 + $0x50] sm:$0xf]
      %v2643 = vsel %vm864, %v2480, %v2642
      %2644 = vst [vmem:[%s538 + $0x50] sm:$0xf] %v2643
      %2645 = vst.msk [vmem:[%s538 + $0x54] sm:$0xf] %vm868, %v2489
      %v2646 = vld [vmem:[%s538 + $0x58] sm:$0xf]
      %v2647 = vsel %vm864, %v2496, %v2646
      %2648 = vst [vmem:[%s538 + $0x58] sm:$0xf] %v2647
      %2649 = vst.msk [vmem:[%s538 + $0x5c] sm:$0xf] %vm868, %v2505
      %v2650 = vld [vmem:[%s538 + $0x60] sm:$0xf]
      %v2651 = vsel %vm864, %v2512, %v2650
      %2652 = vst [vmem:[%s538 + $0x60] sm:$0xf] %v2651
      %2653 = vst.msk [vmem:[%s538 + $0x64] sm:$0xf] %vm868, %v2521
      %v2654 = vld [vmem:[%s538 + $0x68] sm:$0xf]
      %v2655 = vsel %vm864, %v2528, %v2654
      %2656 = vst [vmem:[%s538 + $0x68] sm:$0xf] %v2655
      %2657 = vst.msk [vmem:[%s538 + $0x6c] sm:$0xf] %vm868, %v2537
      %v2658 = vld [vmem:[%s538 + $0x70] sm:$0xf]
      %v2659 = vsel %vm864, %v2544, %v2658
      %2660 = vst [vmem:[%s538 + $0x70] sm:$0xf] %v2659
      %2661 = vst.msk [vmem:[%s538 + $0x74] sm:$0xf] %vm868, %v2553
      %v2662 = vld [vmem:[%s538 + $0x78] sm:$0xf]
      %v2663 = vsel %vm864, %v2560, %v2662
      %2664 = vst [vmem:[%s538 + $0x78] sm:$0xf] %v2663
      %2665 = vst.msk [vmem:[%s538 + $0x7c] sm:$0xf] %vm868, %v2569
      %v2666 = vrot.slane %v2315, 4
      %v2667 = vrot.slane %v2318, 5
      %v2668 = vor.u32 %v2666, %v2667
      %v2669 = vrot.slane %v2668, 4
      %v2670 = vrot.slane %v2326, 5
      %v2671 = vsel %vm932, %v2669, %v2670
      %v2672 = vrot.slane %v2323, 4
      %v2673 = vor.u32 %v2672, %v2670
      %v2674 = vrot.slane %v2673, 4
      %v2675 = vrot.slane %v2331, 4
      %v2676 = vrot.slane %v2334, 5
      %v2677 = vor.u32 %v2675, %v2676
      %v2678 = vrot.slane %v2677, 4
      %v2679 = vrot.slane %v2342, 5
      %v2680 = vsel %vm932, %v2678, %v2679
      %v2681 = vrot.slane %v2339, 4
      %v2682 = vor.u32 %v2681, %v2679
      %v2683 = vrot.slane %v2682, 4
      %v2684 = vrot.slane %v2347, 4
      %v2685 = vrot.slane %v2350, 5
      %v2686 = vor.u32 %v2684, %v2685
      %v2687 = vrot.slane %v2686, 4
      %v2688 = vrot.slane %v2358, 5
      %v2689 = vsel %vm932, %v2687, %v2688
      %v2690 = vrot.slane %v2355, 4
      %v2691 = vor.u32 %v2690, %v2688
      %v2692 = vrot.slane %v2691, 4
      %v2693 = vrot.slane %v2363, 4
      %v2694 = vrot.slane %v2366, 5
      %v2695 = vor.u32 %v2693, %v2694
      %v2696 = vrot.slane %v2695, 4
      %v2697 = vrot.slane %v2374, 5
      %v2698 = vsel %vm932, %v2696, %v2697
      %v2699 = vrot.slane %v2371, 4
      %v2700 = vor.u32 %v2699, %v2697
      %v2701 = vrot.slane %v2700, 4
      %v2702 = vrot.slane %v2379, 4
      %v2703 = vrot.slane %v2382, 5
      %v2704 = vor.u32 %v2702, %v2703
      %v2705 = vrot.slane %v2704, 4
      %v2706 = vrot.slane %v2390, 5
      %v2707 = vsel %vm932, %v2705, %v2706
      %v2708 = vrot.slane %v2387, 4
      %v2709 = vor.u32 %v2708, %v2706
      %v2710 = vrot.slane %v2709, 4
      %v2711 = vrot.slane %v2395, 4
      %v2712 = vrot.slane %v2398, 5
      %v2713 = vor.u32 %v2711, %v2712
      %v2714 = vrot.slane %v2713, 4
      %v2715 = vrot.slane %v2406, 5
      %v2716 = vsel %vm932, %v2714, %v2715
      %v2717 = vrot.slane %v2403, 4
      %v2718 = vor.u32 %v2717, %v2715
      %v2719 = vrot.slane %v2718, 4
      %v2720 = vrot.slane %v2411, 4
      %v2721 = vrot.slane %v2414, 5
      %v2722 = vor.u32 %v2720, %v2721
      %v2723 = vrot.slane %v2722, 4
      %v2724 = vrot.slane %v2422, 5
      %v2725 = vsel %vm932, %v2723, %v2724
      %v2726 = vrot.slane %v2419, 4
      %v2727 = vor.u32 %v2726, %v2724
      %v2728 = vrot.slane %v2727, 4
      %v2729 = vrot.slane %v2427, 4
      %v2730 = vrot.slane %v2430, 5
      %v2731 = vor.u32 %v2729, %v2730
      %v2732 = vrot.slane %v2731, 4
      %v2733 = vrot.slane %v2438, 5
      %v2734 = vsel %vm932, %v2732, %v2733
      %v2735 = vrot.slane %v2435, 4
      %v2736 = vor.u32 %v2735, %v2733
      %v2737 = vrot.slane %v2736, 4
      %v2738 = vrot.slane %v2443, 4
      %v2739 = vrot.slane %v2446, 5
      %v2740 = vor.u32 %v2738, %v2739
      %v2741 = vrot.slane %v2740, 4
      %v2742 = vrot.slane %v2454, 5
      %v2743 = vsel %vm932, %v2741, %v2742
      %v2744 = vrot.slane %v2451, 4
      %v2745 = vor.u32 %v2744, %v2742
      %v2746 = vrot.slane %v2745, 4
      %v2747 = vrot.slane %v2459, 4
      %v2748 = vrot.slane %v2462, 5
      %v2749 = vor.u32 %v2747, %v2748
      %v2750 = vrot.slane %v2749, 4
      %v2751 = vrot.slane %v2470, 5
      %v2752 = vsel %vm932, %v2750, %v2751
      %v2753 = vrot.slane %v2467, 4
      %v2754 = vor.u32 %v2753, %v2751
      %v2755 = vrot.slane %v2754, 4
      %v2756 = vrot.slane %v2475, 4
      %v2757 = vrot.slane %v2478, 5
      %v2758 = vor.u32 %v2756, %v2757
      %v2759 = vrot.slane %v2758, 4
      %v2760 = vrot.slane %v2486, 5
      %v2761 = vsel %vm932, %v2759, %v2760
      %v2762 = vrot.slane %v2483, 4
      %v2763 = vor.u32 %v2762, %v2760
      %v2764 = vrot.slane %v2763, 4
      %v2765 = vrot.slane %v2491, 4
      %v2766 = vrot.slane %v2494, 5
      %v2767 = vor.u32 %v2765, %v2766
      %v2768 = vrot.slane %v2767, 4
      %v2769 = vrot.slane %v2502, 5
      %v2770 = vsel %vm932, %v2768, %v2769
      %v2771 = vrot.slane %v2499, 4
      %v2772 = vor.u32 %v2771, %v2769
      %v2773 = vrot.slane %v2772, 4
      %v2774 = vrot.slane %v2507, 4
      %v2775 = vrot.slane %v2510, 5
      %v2776 = vor.u32 %v2774, %v2775
      %v2777 = vrot.slane %v2776, 4
      %v2778 = vrot.slane %v2518, 5
      %v2779 = vsel %vm932, %v2777, %v2778
      %v2780 = vrot.slane %v2515, 4
      %v2781 = vor.u32 %v2780, %v2778
      %v2782 = vrot.slane %v2781, 4
      %v2783 = vrot.slane %v2523, 4
      %v2784 = vrot.slane %v2526, 5
      %v2785 = vor.u32 %v2783, %v2784
      %v2786 = vrot.slane %v2785, 4
      %v2787 = vrot.slane %v2534, 5
      %v2788 = vsel %vm932, %v2786, %v2787
      %v2789 = vrot.slane %v2531, 4
      %v2790 = vor.u32 %v2789, %v2787
      %v2791 = vrot.slane %v2790, 4
      %v2792 = vrot.slane %v2539, 4
      %v2793 = vrot.slane %v2542, 5
      %v2794 = vor.u32 %v2792, %v2793
      %v2795 = vrot.slane %v2794, 4
      %v2796 = vrot.slane %v2550, 5
      %v2797 = vsel %vm932, %v2795, %v2796
      %v2798 = vrot.slane %v2547, 4
      %v2799 = vor.u32 %v2798, %v2796
      %v2800 = vrot.slane %v2799, 4
      %v2801 = vrot.slane %v2555, 4
      %v2802 = vrot.slane %v2558, 5
      %v2803 = vor.u32 %v2801, %v2802
      %v2804 = vrot.slane %v2803, 4
      %v2805 = vrot.slane %v2566, 5
      %v2806 = vsel %vm932, %v2804, %v2805
      %v2807 = vrot.slane %v2563, 4
      %v2808 = vor.u32 %v2807, %v2805
      %v2809 = vrot.slane %v2808, 4
      %2810 = vrot.lane.b32.xlu0 %v2671, 8
      %v2811 = vpop.permute.xlu0 %2810
      %2812 = vrot.lane.b32.xlu0 %v2674, 8
      %v2813 = vpop.permute.xlu0 %2812
      %2814 = vrot.lane.b32.xlu0 %v2680, 8
      %v2815 = vpop.permute.xlu0 %2814
      %2816 = vrot.lane.b32.xlu0 %v2683, 8
      %v2817 = vpop.permute.xlu0 %2816
      %2818 = vrot.lane.b32.xlu0 %v2689, 8
      %v2819 = vpop.permute.xlu0 %2818
      %2820 = vrot.lane.b32.xlu0 %v2692, 8
      %v2821 = vpop.permute.xlu0 %2820
      %2822 = vrot.lane.b32.xlu0 %v2698, 8
      %v2823 = vpop.permute.xlu0 %2822
      %2824 = vrot.lane.b32.xlu0 %v2701, 8
      %v2825 = vpop.permute.xlu0 %2824
      %2826 = vrot.lane.b32.xlu0 %v2707, 8
      %v2827 = vpop.permute.xlu0 %2826
      %2828 = vrot.lane.b32.xlu0 %v2710, 8
      %v2829 = vpop.permute.xlu0 %2828
      %2830 = vrot.lane.b32.xlu0 %v2716, 8
      %v2831 = vpop.permute.xlu0 %2830
      %2832 = vrot.lane.b32.xlu0 %v2719, 8
      %v2833 = vpop.permute.xlu0 %2832
      %2834 = vrot.lane.b32.xlu0 %v2725, 8
      %v2835 = vpop.permute.xlu0 %2834
      %2836 = vrot.lane.b32.xlu0 %v2728, 8
      %v2837 = vpop.permute.xlu0 %2836
      %2838 = vrot.lane.b32.xlu0 %v2734, 8
      %v2839 = vpop.permute.xlu0 %2838
      %2840 = vrot.lane.b32.xlu0 %v2737, 8
      %v2841 = vpop.permute.xlu0 %2840
      %2842 = vrot.lane.b32.xlu0 %v2743, 8
      %v2843 = vpop.permute.xlu0 %2842
      %2844 = vrot.lane.b32.xlu0 %v2746, 8
      %v2845 = vpop.permute.xlu0 %2844
      %2846 = vrot.lane.b32.xlu0 %v2752, 8
      %v2847 = vpop.permute.xlu0 %2846
      %2848 = vrot.lane.b32.xlu0 %v2755, 8
      %v2849 = vpop.permute.xlu0 %2848
      %2850 = vrot.lane.b32.xlu0 %v2761, 8
      %v2851 = vpop.permute.xlu0 %2850
      %2852 = vrot.lane.b32.xlu0 %v2764, 8
      %v2853 = vpop.permute.xlu0 %2852
      %2854 = vrot.lane.b32.xlu0 %v2770, 8
      %v2855 = vpop.permute.xlu0 %2854
      %2856 = vrot.lane.b32.xlu0 %v2773, 8
      %v2857 = vpop.permute.xlu0 %2856
      %2858 = vrot.lane.b32.xlu0 %v2779, 8
      %v2859 = vpop.permute.xlu0 %2858
      %2860 = vrot.lane.b32.xlu0 %v2782, 8
      %v2861 = vpop.permute.xlu0 %2860
      %2862 = vrot.lane.b32.xlu0 %v2788, 8
      %v2863 = vpop.permute.xlu0 %2862
      %2864 = vrot.lane.b32.xlu0 %v2791, 8
      %v2865 = vpop.permute.xlu0 %2864
      %2866 = vrot.lane.b32.xlu0 %v2797, 8
      %v2867 = vpop.permute.xlu0 %2866
      %2868 = vrot.lane.b32.xlu0 %v2800, 8
      %v2869 = vpop.permute.xlu0 %2868
      %2870 = vrot.lane.b32.xlu0 %v2806, 8
      %v2871 = vpop.permute.xlu0 %2870
      %2872 = vrot.lane.b32.xlu0 %v2809, 8
      %v2873 = vpop.permute.xlu0 %2872
      %2906 = vst.msk [vmem:[%s538] sm:$0xf] %vm1173, %v2811
      %v2907 = vld [vmem:[%s538 + $0x4] sm:$0xf]
      %v2908 = vsel %vm1176, %v2813, %v2907
      %2909 = vst [vmem:[%s538 + $0x4] sm:$0xf] %v2908
      %2910 = vst.msk [vmem:[%s538 + $0x8] sm:$0xf] %vm1173, %v2815
      %v2911 = vld [vmem:[%s538 + $0xc] sm:$0xf]
      %v2912 = vsel %vm1176, %v2817, %v2911
      %2913 = vst [vmem:[%s538 + $0xc] sm:$0xf] %v2912
      %2914 = vst.msk [vmem:[%s538 + $0x10] sm:$0xf] %vm1173, %v2819
      %v2915 = vld [vmem:[%s538 + $0x14] sm:$0xf]
      %v2916 = vsel %vm1176, %v2821, %v2915
      %2917 = vst [vmem:[%s538 + $0x14] sm:$0xf] %v2916
      %2918 = vst.msk [vmem:[%s538 + $0x18] sm:$0xf] %vm1173, %v2823
      %v2919 = vld [vmem:[%s538 + $0x1c] sm:$0xf]
      %v2920 = vsel %vm1176, %v2825, %v2919
      %2921 = vst [vmem:[%s538 + $0x1c] sm:$0xf] %v2920
      %2922 = vst.msk [vmem:[%s538 + $0x20] sm:$0xf] %vm1173, %v2827
      %v2923 = vld [vmem:[%s538 + $0x24] sm:$0xf]
      %v2924 = vsel %vm1176, %v2829, %v2923
      %2925 = vst [vmem:[%s538 + $0x24] sm:$0xf] %v2924
      %2926 = vst.msk [vmem:[%s538 + $0x28] sm:$0xf] %vm1173, %v2831
      %v2927 = vld [vmem:[%s538 + $0x2c] sm:$0xf]
      %v2928 = vsel %vm1176, %v2833, %v2927
      %2929 = vst [vmem:[%s538 + $0x2c] sm:$0xf] %v2928
      %2930 = vst.msk [vmem:[%s538 + $0x30] sm:$0xf] %vm1173, %v2835
      %v2931 = vld [vmem:[%s538 + $0x34] sm:$0xf]
      %v2932 = vsel %vm1176, %v2837, %v2931
      %2933 = vst [vmem:[%s538 + $0x34] sm:$0xf] %v2932
      %2934 = vst.msk [vmem:[%s538 + $0x38] sm:$0xf] %vm1173, %v2839
      %v2935 = vld [vmem:[%s538 + $0x3c] sm:$0xf]
      %v2936 = vsel %vm1176, %v2841, %v2935
      %2937 = vst [vmem:[%s538 + $0x3c] sm:$0xf] %v2936
      %2938 = vst.msk [vmem:[%s538 + $0x40] sm:$0xf] %vm1173, %v2843
      %v2939 = vld [vmem:[%s538 + $0x44] sm:$0xf]
      %v2940 = vsel %vm1176, %v2845, %v2939
      %2941 = vst [vmem:[%s538 + $0x44] sm:$0xf] %v2940
      %2942 = vst.msk [vmem:[%s538 + $0x48] sm:$0xf] %vm1173, %v2847
      %v2943 = vld [vmem:[%s538 + $0x4c] sm:$0xf]
      %v2944 = vsel %vm1176, %v2849, %v2943
      %2945 = vst [vmem:[%s538 + $0x4c] sm:$0xf] %v2944
      %2946 = vst.msk [vmem:[%s538 + $0x50] sm:$0xf] %vm1173, %v2851
      %v2947 = vld [vmem:[%s538 + $0x54] sm:$0xf]
      %v2948 = vsel %vm1176, %v2853, %v2947
      %2949 = vst [vmem:[%s538 + $0x54] sm:$0xf] %v2948
      %2950 = vst.msk [vmem:[%s538 + $0x58] sm:$0xf] %vm1173, %v2855
      %v2951 = vld [vmem:[%s538 + $0x5c] sm:$0xf]
      %v2952 = vsel %vm1176, %v2857, %v2951
      %2953 = vst [vmem:[%s538 + $0x5c] sm:$0xf] %v2952
      %2954 = vst.msk [vmem:[%s538 + $0x60] sm:$0xf] %vm1173, %v2859
      %v2955 = vld [vmem:[%s538 + $0x64] sm:$0xf]
      %v2956 = vsel %vm1176, %v2861, %v2955
      %2957 = vst [vmem:[%s538 + $0x64] sm:$0xf] %v2956
      %2958 = vst.msk [vmem:[%s538 + $0x68] sm:$0xf] %vm1173, %v2863
      %v2959 = vld [vmem:[%s538 + $0x6c] sm:$0xf]
      %v2960 = vsel %vm1176, %v2865, %v2959
      %2961 = vst [vmem:[%s538 + $0x6c] sm:$0xf] %v2960
      %2962 = vst.msk [vmem:[%s538 + $0x70] sm:$0xf] %vm1173, %v2867
      %v2963 = vld [vmem:[%s538 + $0x74] sm:$0xf]
      %v2964 = vsel %vm1176, %v2869, %v2963
      %2965 = vst [vmem:[%s538 + $0x74] sm:$0xf] %v2964
      %2966 = vst.msk [vmem:[%s538 + $0x78] sm:$0xf] %vm1173, %v2871
      %v2967 = vld [vmem:[%s538 + $0x7c] sm:$0xf]
      %v2968 = vsel %vm1176, %v2873, %v2967
      %2969 = vst [vmem:[%s538 + $0x7c] sm:$0xf] %v2968
      %v2970 = vld [vmem:[#allocation2] sm:$0xf]
      %v2971 = vld [vmem:[#allocation2 + $0x4] sm:$0xf]
      %v2972 = vld [vmem:[#allocation2 + $0x8] sm:$0xf]
      %v2973 = vld [vmem:[#allocation2 + $0xc] sm:$0xf]
      %v2974 = vld [vmem:[#allocation2 + $0x10] sm:$0xf]
      %v2975 = vld [vmem:[#allocation2 + $0x14] sm:$0xf]
      %v2976 = vld [vmem:[#allocation2 + $0x18] sm:$0xf]
      %v2977 = vld [vmem:[#allocation2 + $0x1c] sm:$0xf]
      %v2978 = vld [vmem:[#allocation2 + $0x20] sm:$0xf]
      %v2979 = vld [vmem:[#allocation2 + $0x24] sm:$0xf]
      %v2980 = vld [vmem:[#allocation2 + $0x28] sm:$0xf]
      %v2981 = vld [vmem:[#allocation2 + $0x2c] sm:$0xf]
      %v2982 = vld [vmem:[#allocation2 + $0x30] sm:$0xf]
      %v2983 = vld [vmem:[#allocation2 + $0x34] sm:$0xf]
      %v2984 = vld [vmem:[#allocation2 + $0x38] sm:$0xf]
      %v2985 = vld [vmem:[#allocation2 + $0x3c] sm:$0xf]
      %v2986 = vld [vmem:[#allocation2 + $0x40] sm:$0xf]
      %v2987 = vld [vmem:[#allocation2 + $0x44] sm:$0xf]
      %v2988 = vld [vmem:[#allocation2 + $0x48] sm:$0xf]
      %v2989 = vld [vmem:[#allocation2 + $0x4c] sm:$0xf]
      %v2990 = vld [vmem:[#allocation2 + $0x50] sm:$0xf]
      %v2991 = vld [vmem:[#allocation2 + $0x54] sm:$0xf]
      %v2992 = vld [vmem:[#allocation2 + $0x58] sm:$0xf]
      %v2993 = vld [vmem:[#allocation2 + $0x5c] sm:$0xf]
      %v2994 = vld [vmem:[#allocation2 + $0x60] sm:$0xf]
      %v2995 = vld [vmem:[#allocation2 + $0x64] sm:$0xf]
      %v2996 = vld [vmem:[#allocation2 + $0x68] sm:$0xf]
      %v2997 = vld [vmem:[#allocation2 + $0x6c] sm:$0xf]
      %v2998 = vld [vmem:[#allocation2 + $0x70] sm:$0xf]
      %v2999 = vld [vmem:[#allocation2 + $0x74] sm:$0xf]
      %v3000 = vld [vmem:[#allocation2 + $0x78] sm:$0xf]
      %v3001 = vld [vmem:[#allocation2 + $0x7c] sm:$0xf]
      %v3002 = vld [vmem:[%s3] sm:$0xf]
      %v3003 = vld [vmem:[%s3 + $0x4] sm:$0x3]
      %v3004 = vld [vmem:[%s538] sm:$0xf]
      %v3005 = vld [vmem:[%s538 + $0x4] sm:$0xf]
      %v3006 = vld [vmem:[%s538 + $0x8] sm:$0xf]
      %v3007 = vld [vmem:[%s538 + $0xc] sm:$0xf]
      %v3008 = vld [vmem:[%s538 + $0x10] sm:$0xf]
      %v3009 = vld [vmem:[%s538 + $0x14] sm:$0xf]
      %v3010 = vld [vmem:[%s538 + $0x18] sm:$0xf]
      %v3011 = vld [vmem:[%s538 + $0x1c] sm:$0xf]
      %v3012 = vld [vmem:[%s538 + $0x20] sm:$0xf]
      %v3013 = vld [vmem:[%s538 + $0x24] sm:$0xf]
      %v3014 = vld [vmem:[%s538 + $0x28] sm:$0xf]
      %v3015 = vld [vmem:[%s538 + $0x2c] sm:$0xf]
      %v3016 = vld [vmem:[%s538 + $0x30] sm:$0xf]
      %v3017 = vld [vmem:[%s538 + $0x34] sm:$0xf]
      %v3018 = vld [vmem:[%s538 + $0x38] sm:$0xf]
      %v3019 = vld [vmem:[%s538 + $0x3c] sm:$0xf]
      %v3020 = vld [vmem:[%s538 + $0x40] sm:$0xf]
      %v3021 = vld [vmem:[%s538 + $0x44] sm:$0xf]
      %v3022 = vld [vmem:[%s538 + $0x48] sm:$0xf]
      %v3023 = vld [vmem:[%s538 + $0x4c] sm:$0xf]
      %v3024 = vld [vmem:[%s538 + $0x50] sm:$0xf]
      %v3025 = vld [vmem:[%s538 + $0x54] sm:$0xf]
      %v3026 = vld [vmem:[%s538 + $0x58] sm:$0xf]
      %v3027 = vld [vmem:[%s538 + $0x5c] sm:$0xf]
      %v3028 = vld [vmem:[%s538 + $0x60] sm:$0xf]
      %v3029 = vld [vmem:[%s538 + $0x64] sm:$0xf]
      %v3030 = vld [vmem:[%s538 + $0x68] sm:$0xf]
      %v3031 = vld [vmem:[%s538 + $0x6c] sm:$0xf]
      %v3032 = vld [vmem:[%s538 + $0x70] sm:$0xf]
      %v3033 = vld [vmem:[%s538 + $0x74] sm:$0xf]
      %v3034 = vld [vmem:[%s538 + $0x78] sm:$0xf]
      %v3035 = vld [vmem:[%s538 + $0x7c] sm:$0xf]
      %s3036 = scalar_lea.vmem %s3, 8
      %v3037 = vld [vmem:[%s3036] sm:$0xf]
      %v3038 = vld [vmem:[%s3036 + $0x4] sm:$0x3]
      %v3071 = vunpack.c.l.b16 %v3004
      %v3072 = vunpack.c.l.b16 %v3005
      %v3073 = vunpack.c.l.b16 %v3006
      %v3074 = vunpack.c.l.b16 %v3007
      %v3075 = vunpack.c.l.b16 %v3008
      %v3076 = vunpack.c.l.b16 %v3009
      %v3077 = vunpack.c.l.b16 %v3010
      %v3078 = vunpack.c.l.b16 %v3011
      %v3079 = vunpack.c.l.b16 %v3012
      %v3080 = vunpack.c.l.b16 %v3013
      %v3081 = vunpack.c.l.b16 %v3014
      %v3082 = vunpack.c.l.b16 %v3015
      %v3083 = vunpack.c.l.b16 %v3016
      %v3084 = vunpack.c.l.b16 %v3017
      %v3085 = vunpack.c.l.b16 %v3018
      %v3086 = vunpack.c.l.b16 %v3019
      %v3087 = vunpack.c.l.b16 %v3020
      %v3088 = vunpack.c.l.b16 %v3021
      %v3089 = vunpack.c.l.b16 %v3022
      %v3090 = vunpack.c.l.b16 %v3023
      %v3091 = vunpack.c.l.b16 %v3024
      %v3092 = vunpack.c.l.b16 %v3025
      %v3093 = vunpack.c.l.b16 %v3026
      %v3094 = vunpack.c.l.b16 %v3027
      %v3095 = vunpack.c.l.b16 %v3028
      %v3096 = vunpack.c.l.b16 %v3029
      %v3097 = vunpack.c.l.b16 %v3030
      %v3098 = vunpack.c.l.b16 %v3031
      %v3099 = vunpack.c.l.b16 %v3032
      %v3100 = vunpack.c.l.b16 %v3033
      %v3101 = vunpack.c.l.b16 %v3034
      %v3102 = vunpack.c.l.b16 %v3035
      %v3103 = vpack.c.b16 %v3072, %v3071
      %v3104 = vpack.c.b16 %v3074, %v3073
      %v3105 = vpack.c.b16 %v3076, %v3075
      %v3106 = vpack.c.b16 %v3078, %v3077
      %v3107 = vpack.c.b16 %v3080, %v3079
      %v3108 = vpack.c.b16 %v3082, %v3081
      %v3109 = vpack.c.b16 %v3084, %v3083
      %v3110 = vpack.c.b16 %v3086, %v3085
      %v3111 = vpack.c.b16 %v3088, %v3087
      %v3112 = vpack.c.b16 %v3090, %v3089
      %v3113 = vpack.c.b16 %v3092, %v3091
      %v3114 = vpack.c.b16 %v3094, %v3093
      %v3115 = vpack.c.b16 %v3096, %v3095
      %v3116 = vpack.c.b16 %v3098, %v3097
      %v3117 = vpack.c.b16 %v3100, %v3099
      %v3118 = vpack.c.b16 %v3102, %v3101
      %v3121 = vunpack.c.l.b16 %v3037
      %v3122 = vunpack.c.l.b16 %v3038
      %v3123 = vpack.c.b16 %v3122, %v3121
      %v3125 = vsel %vm1394, %v3103, 0
      %v3128 = vsel %vm1394, %v3104, 0
      %v3131 = vsel %vm1394, %v3105, 0
      %v3134 = vsel %vm1394, %v3106, 0
      %v3137 = vsel %vm1394, %v3107, 0
      %v3140 = vsel %vm1394, %v3108, 0
      %v3143 = vsel %vm1394, %v3109, 0
      %v3146 = vsel %vm1394, %v3110, 0
      %v3149 = vsel %vm1394, %v3111, 0
      %v3152 = vsel %vm1394, %v3112, 0
      %v3155 = vsel %vm1394, %v3113, 0
      %v3158 = vsel %vm1394, %v3114, 0
      %v3161 = vsel %vm1394, %v3115, 0
      %v3164 = vsel %vm1394, %v3116, 0
      %v3167 = vsel %vm1394, %v3117, 0
      %v3170 = vsel %vm1394, %v3118, 0
      %v3173 = vsel %vm1443, %v3123, 0
      %3175 = vmatpush.bf16.msra.mxu0 0
      %3176 = vmatpush.bf16.msra.mxu0 0
      %3177 = vmatpush.bf16.msra.mxu0 0
      %3178 = vmatpush.bf16.msra.mxu0 0
      %3179 = vmatpush.bf16.msra.mxu0 0
      %3180 = vmatpush.bf16.msra.mxu0 0
      %3181 = vmatpush.bf16.msra.mxu0 0
      %3182 = vmatpush.bf16.msra.mxu0 %v3173
      %3183 = vmatmul.bf16.gmra.mxu0 %v3125
      %v3184 = vpop.f32.mrf.mxu0
      %v3185 = vadd.f32 0.0, %v3184
      %v3186 = vpop.f32.mrf.mxu0
      %v3187 = vadd.f32 0.0, %v3186
      %3188 = vmatmul.bf16.gmra.mxu0 %v3128
      %v3189 = vpop.f32.mrf.mxu0
      %v3190 = vadd.f32 0.0, %v3189
      %v3191 = vpop.f32.mrf.mxu0
      %v3192 = vadd.f32 0.0, %v3191
      %3193 = vmatmul.bf16.gmra.mxu0 %v3131
      %v3194 = vpop.f32.mrf.mxu0
      %v3195 = vadd.f32 0.0, %v3194
      %v3196 = vpop.f32.mrf.mxu0
      %v3197 = vadd.f32 0.0, %v3196
      %3198 = vmatmul.bf16.gmra.mxu0 %v3134
      %v3199 = vpop.f32.mrf.mxu0
      %v3200 = vadd.f32 0.0, %v3199
      %v3201 = vpop.f32.mrf.mxu0
      %v3202 = vadd.f32 0.0, %v3201
      %3203 = vmatmul.bf16.gmra.mxu0 %v3137
      %v3204 = vpop.f32.mrf.mxu0
      %v3205 = vadd.f32 0.0, %v3204
      %v3206 = vpop.f32.mrf.mxu0
      %v3207 = vadd.f32 0.0, %v3206
      %3208 = vmatmul.bf16.gmra.mxu0 %v3140
      %v3209 = vpop.f32.mrf.mxu0
      %v3210 = vadd.f32 0.0, %v3209
      %v3211 = vpop.f32.mrf.mxu0
      %v3212 = vadd.f32 0.0, %v3211
      %3213 = vmatmul.bf16.gmra.mxu0 %v3143
      %v3214 = vpop.f32.mrf.mxu0
      %v3215 = vadd.f32 0.0, %v3214
      %v3216 = vpop.f32.mrf.mxu0
      %v3217 = vadd.f32 0.0, %v3216
      %3218 = vmatmul.bf16.gmra.mxu0 %v3146
      %v3219 = vpop.f32.mrf.mxu0
      %v3220 = vadd.f32 0.0, %v3219
      %v3221 = vpop.f32.mrf.mxu0
      %v3222 = vadd.f32 0.0, %v3221
      %3223 = vmatmul.bf16.gmra.mxu0 %v3149
      %v3224 = vpop.f32.mrf.mxu0
      %v3225 = vadd.f32 0.0, %v3224
      %v3226 = vpop.f32.mrf.mxu0
      %v3227 = vadd.f32 0.0, %v3226
      %3228 = vmatmul.bf16.gmra.mxu0 %v3152
      %v3229 = vpop.f32.mrf.mxu0
      %v3230 = vadd.f32 0.0, %v3229
      %v3231 = vpop.f32.mrf.mxu0
      %v3232 = vadd.f32 0.0, %v3231
      %3233 = vmatmul.bf16.gmra.mxu0 %v3155
      %v3234 = vpop.f32.mrf.mxu0
      %v3235 = vadd.f32 0.0, %v3234
      %v3236 = vpop.f32.mrf.mxu0
      %v3237 = vadd.f32 0.0, %v3236
      %3238 = vmatmul.bf16.gmra.mxu0 %v3158
      %v3239 = vpop.f32.mrf.mxu0
      %v3240 = vadd.f32 0.0, %v3239
      %v3241 = vpop.f32.mrf.mxu0
      %v3242 = vadd.f32 0.0, %v3241
      %3243 = vmatmul.bf16.gmra.mxu0 %v3161
      %v3244 = vpop.f32.mrf.mxu0
      %v3245 = vadd.f32 0.0, %v3244
      %v3246 = vpop.f32.mrf.mxu0
      %v3247 = vadd.f32 0.0, %v3246
      %3248 = vmatmul.bf16.gmra.mxu0 %v3164
      %v3249 = vpop.f32.mrf.mxu0
      %v3250 = vadd.f32 0.0, %v3249
      %v3251 = vpop.f32.mrf.mxu0
      %v3252 = vadd.f32 0.0, %v3251
      %3253 = vmatmul.bf16.gmra.mxu0 %v3167
      %v3254 = vpop.f32.mrf.mxu0
      %v3255 = vadd.f32 0.0, %v3254
      %v3256 = vpop.f32.mrf.mxu0
      %v3257 = vadd.f32 0.0, %v3256
      %3258 = vmatmul.bf16.gmra.mxu0 %v3170
      %v3259 = vpop.f32.mrf.mxu0
      %v3260 = vadd.f32 0.0, %v3259
      %v3261 = vpop.f32.mrf.mxu0
      %v3262 = vadd.f32 0.0, %v3261
      %3263 = vdwg.mxu0
      %v3296 = vunpack.c.l.b16 %v2970
      %v3297 = vunpack.c.l.b16 %v2971
      %v3298 = vunpack.c.l.b16 %v2972
      %v3299 = vunpack.c.l.b16 %v2973
      %v3300 = vunpack.c.l.b16 %v2974
      %v3301 = vunpack.c.l.b16 %v2975
      %v3302 = vunpack.c.l.b16 %v2976
      %v3303 = vunpack.c.l.b16 %v2977
      %v3304 = vunpack.c.l.b16 %v2978
      %v3305 = vunpack.c.l.b16 %v2979
      %v3306 = vunpack.c.l.b16 %v2980
      %v3307 = vunpack.c.l.b16 %v2981
      %v3308 = vunpack.c.l.b16 %v2982
      %v3309 = vunpack.c.l.b16 %v2983
      %v3310 = vunpack.c.l.b16 %v2984
      %v3311 = vunpack.c.l.b16 %v2985
      %v3312 = vunpack.c.l.b16 %v2986
      %v3313 = vunpack.c.l.b16 %v2987
      %v3314 = vunpack.c.l.b16 %v2988
      %v3315 = vunpack.c.l.b16 %v2989
      %v3316 = vunpack.c.l.b16 %v2990
      %v3317 = vunpack.c.l.b16 %v2991
      %v3318 = vunpack.c.l.b16 %v2992
      %v3319 = vunpack.c.l.b16 %v2993
      %v3320 = vunpack.c.l.b16 %v2994
      %v3321 = vunpack.c.l.b16 %v2995
      %v3322 = vunpack.c.l.b16 %v2996
      %v3323 = vunpack.c.l.b16 %v2997
      %v3324 = vunpack.c.l.b16 %v2998
      %v3325 = vunpack.c.l.b16 %v2999
      %v3326 = vunpack.c.l.b16 %v3000
      %v3327 = vunpack.c.l.b16 %v3001
      %v3328 = vpack.c.b16 %v3297, %v3296
      %v3329 = vpack.c.b16 %v3299, %v3298
      %v3330 = vpack.c.b16 %v3301, %v3300
      %v3331 = vpack.c.b16 %v3303, %v3302
      %v3332 = vpack.c.b16 %v3305, %v3304
      %v3333 = vpack.c.b16 %v3307, %v3306
      %v3334 = vpack.c.b16 %v3309, %v3308
      %v3335 = vpack.c.b16 %v3311, %v3310
      %v3336 = vpack.c.b16 %v3313, %v3312
      %v3337 = vpack.c.b16 %v3315, %v3314
      %v3338 = vpack.c.b16 %v3317, %v3316
      %v3339 = vpack.c.b16 %v3319, %v3318
      %v3340 = vpack.c.b16 %v3321, %v3320
      %v3341 = vpack.c.b16 %v3323, %v3322
      %v3342 = vpack.c.b16 %v3325, %v3324
      %v3343 = vpack.c.b16 %v3327, %v3326
      %v3346 = vunpack.c.l.b16 %v3002
      %v3347 = vunpack.c.l.b16 %v3003
      %v3348 = vpack.c.b16 %v3347, %v3346
      %v3350 = vsel %vm1394, %v3328, 0
      %v3353 = vsel %vm1394, %v3329, 0
      %v3356 = vsel %vm1394, %v3330, 0
      %v3359 = vsel %vm1394, %v3331, 0
      %v3362 = vsel %vm1394, %v3332, 0
      %v3365 = vsel %vm1394, %v3333, 0
      %v3368 = vsel %vm1394, %v3334, 0
      %v3371 = vsel %vm1394, %v3335, 0
      %v3374 = vsel %vm1394, %v3336, 0
      %v3377 = vsel %vm1394, %v3337, 0
      %v3380 = vsel %vm1394, %v3338, 0
      %v3383 = vsel %vm1394, %v3339, 0
      %v3386 = vsel %vm1394, %v3340, 0
      %v3389 = vsel %vm1394, %v3341, 0
      %v3392 = vsel %vm1394, %v3342, 0
      %v3395 = vsel %vm1394, %v3343, 0
      %v3398 = vsel %vm1443, %v3348, 0
      %3400 = vmatpush.bf16.msra.mxu0 0
      %3401 = vmatpush.bf16.msra.mxu0 0
      %3402 = vmatpush.bf16.msra.mxu0 0
      %3403 = vmatpush.bf16.msra.mxu0 0
      %3404 = vmatpush.bf16.msra.mxu0 0
      %3405 = vmatpush.bf16.msra.mxu0 0
      %3406 = vmatpush.bf16.msra.mxu0 0
      %3407 = vmatpush.bf16.msra.mxu0 %v3398
      %3408 = vmatmul.bf16.gmra.mxu0 %v3350
      %v3409 = vpop.f32.mrf.mxu0
      %v3410 = vadd.f32 %v3185, %v3409
      %v3411 = vpop.f32.mrf.mxu0
      %v3412 = vadd.f32 %v3187, %v3411
      %3413 = vmatmul.bf16.gmra.mxu0 %v3353
      %v3414 = vpop.f32.mrf.mxu0
      %v3415 = vadd.f32 %v3190, %v3414
      %v3416 = vpop.f32.mrf.mxu0
      %v3417 = vadd.f32 %v3192, %v3416
      %3418 = vmatmul.bf16.gmra.mxu0 %v3356
      %v3419 = vpop.f32.mrf.mxu0
      %v3420 = vadd.f32 %v3195, %v3419
      %v3421 = vpop.f32.mrf.mxu0
      %v3422 = vadd.f32 %v3197, %v3421
      %3423 = vmatmul.bf16.gmra.mxu0 %v3359
      %v3424 = vpop.f32.mrf.mxu0
      %v3425 = vadd.f32 %v3200, %v3424
      %v3426 = vpop.f32.mrf.mxu0
      %v3427 = vadd.f32 %v3202, %v3426
      %3428 = vmatmul.bf16.gmra.mxu0 %v3362
      %v3429 = vpop.f32.mrf.mxu0
      %v3430 = vadd.f32 %v3205, %v3429
      %v3431 = vpop.f32.mrf.mxu0
      %v3432 = vadd.f32 %v3207, %v3431
      %3433 = vmatmul.bf16.gmra.mxu0 %v3365
      %v3434 = vpop.f32.mrf.mxu0
      %v3435 = vadd.f32 %v3210, %v3434
      %v3436 = vpop.f32.mrf.mxu0
      %v3437 = vadd.f32 %v3212, %v3436
      %3438 = vmatmul.bf16.gmra.mxu0 %v3368
      %v3439 = vpop.f32.mrf.mxu0
      %v3440 = vadd.f32 %v3215, %v3439
      %v3441 = vpop.f32.mrf.mxu0
      %v3442 = vadd.f32 %v3217, %v3441
      %3443 = vmatmul.bf16.gmra.mxu0 %v3371
      %v3444 = vpop.f32.mrf.mxu0
      %v3445 = vadd.f32 %v3220, %v3444
      %v3446 = vpop.f32.mrf.mxu0
      %v3447 = vadd.f32 %v3222, %v3446
      %3448 = vmatmul.bf16.gmra.mxu0 %v3374
      %v3449 = vpop.f32.mrf.mxu0
      %v3450 = vadd.f32 %v3225, %v3449
      %v3451 = vpop.f32.mrf.mxu0
      %v3452 = vadd.f32 %v3227, %v3451
      %3453 = vmatmul.bf16.gmra.mxu0 %v3377
      %v3454 = vpop.f32.mrf.mxu0
      %v3455 = vadd.f32 %v3230, %v3454
      %v3456 = vpop.f32.mrf.mxu0
      %v3457 = vadd.f32 %v3232, %v3456
      %3458 = vmatmul.bf16.gmra.mxu0 %v3380
      %v3459 = vpop.f32.mrf.mxu0
      %v3460 = vadd.f32 %v3235, %v3459
      %v3461 = vpop.f32.mrf.mxu0
      %v3462 = vadd.f32 %v3237, %v3461
      %3463 = vmatmul.bf16.gmra.mxu0 %v3383
      %v3464 = vpop.f32.mrf.mxu0
      %v3465 = vadd.f32 %v3240, %v3464
      %v3466 = vpop.f32.mrf.mxu0
      %v3467 = vadd.f32 %v3242, %v3466
      %3468 = vmatmul.bf16.gmra.mxu0 %v3386
      %v3469 = vpop.f32.mrf.mxu0
      %v3470 = vadd.f32 %v3245, %v3469
      %v3471 = vpop.f32.mrf.mxu0
      %v3472 = vadd.f32 %v3247, %v3471
      %3473 = vmatmul.bf16.gmra.mxu0 %v3389
      %v3474 = vpop.f32.mrf.mxu0
      %v3475 = vadd.f32 %v3250, %v3474
      %v3476 = vpop.f32.mrf.mxu0
      %v3477 = vadd.f32 %v3252, %v3476
      %3478 = vmatmul.bf16.gmra.mxu0 %v3392
      %v3479 = vpop.f32.mrf.mxu0
      %v3480 = vadd.f32 %v3255, %v3479
      %v3481 = vpop.f32.mrf.mxu0
      %v3482 = vadd.f32 %v3257, %v3481
      %3483 = vmatmul.bf16.gmra.mxu0 %v3395
      %v3484 = vpop.f32.mrf.mxu0
      %v3485 = vadd.f32 %v3260, %v3484
      %v3486 = vpop.f32.mrf.mxu0
      %v3487 = vadd.f32 %v3262, %v3486
      %3488 = vdwg.mxu0
      %v3489 = vld [vmem:[%s1761] sm:$0xf]
      %v3490 = vld [vmem:[%s1761 + $0x4] sm:$0xf]
      %v3491 = vld [vmem:[%s1761 + $0x8] sm:$0xf]
      %v3492 = vld [vmem:[%s1761 + $0xc] sm:$0xf]
      %v3493 = vld [vmem:[%s1761 + $0x10] sm:$0xf]
      %v3494 = vld [vmem:[%s1761 + $0x14] sm:$0xf]
      %v3495 = vld [vmem:[%s1761 + $0x18] sm:$0xf]
      %v3496 = vld [vmem:[%s1761 + $0x1c] sm:$0xf]
      %v3497 = vld [vmem:[%s1761 + $0x20] sm:$0xf]
      %v3498 = vld [vmem:[%s1761 + $0x24] sm:$0xf]
      %v3499 = vld [vmem:[%s1761 + $0x28] sm:$0xf]
      %v3500 = vld [vmem:[%s1761 + $0x2c] sm:$0xf]
      %v3501 = vld [vmem:[%s1761 + $0x30] sm:$0xf]
      %v3502 = vld [vmem:[%s1761 + $0x34] sm:$0xf]
      %v3503 = vld [vmem:[%s1761 + $0x38] sm:$0xf]
      %v3504 = vld [vmem:[%s1761 + $0x3c] sm:$0xf]
      %v3505 = vld [vmem:[%s1761 + $0x40] sm:$0xf]
      %v3506 = vld [vmem:[%s1761 + $0x44] sm:$0xf]
      %v3507 = vld [vmem:[%s1761 + $0x48] sm:$0xf]
      %v3508 = vld [vmem:[%s1761 + $0x4c] sm:$0xf]
      %v3509 = vld [vmem:[%s1761 + $0x50] sm:$0xf]
      %v3510 = vld [vmem:[%s1761 + $0x54] sm:$0xf]
      %v3511 = vld [vmem:[%s1761 + $0x58] sm:$0xf]
      %v3512 = vld [vmem:[%s1761 + $0x5c] sm:$0xf]
      %v3513 = vld [vmem:[%s1761 + $0x60] sm:$0xf]
      %v3514 = vld [vmem:[%s1761 + $0x64] sm:$0xf]
      %v3515 = vld [vmem:[%s1761 + $0x68] sm:$0xf]
      %v3516 = vld [vmem:[%s1761 + $0x6c] sm:$0xf]
      %v3517 = vld [vmem:[%s1761 + $0x70] sm:$0xf]
      %v3518 = vld [vmem:[%s1761 + $0x74] sm:$0xf]
      %v3519 = vld [vmem:[%s1761 + $0x78] sm:$0xf]
      %v3520 = vld [vmem:[%s1761 + $0x7c] sm:$0xf]
      %s3521 = scalar_lea.vmem %s3, 16
      %v3522 = vld [vmem:[%s3521] sm:$0xf]
      %v3523 = vld [vmem:[%s3521 + $0x4] sm:$0x3]
      %v3556 = vunpack.c.l.b16 %v3489
      %v3557 = vunpack.c.l.b16 %v3490
      %v3558 = vunpack.c.l.b16 %v3491
      %v3559 = vunpack.c.l.b16 %v3492
      %v3560 = vunpack.c.l.b16 %v3493
      %v3561 = vunpack.c.l.b16 %v3494
      %v3562 = vunpack.c.l.b16 %v3495
      %v3563 = vunpack.c.l.b16 %v3496
      %v3564 = vunpack.c.l.b16 %v3497
      %v3565 = vunpack.c.l.b16 %v3498
      %v3566 = vunpack.c.l.b16 %v3499
      %v3567 = vunpack.c.l.b16 %v3500
      %v3568 = vunpack.c.l.b16 %v3501
      %v3569 = vunpack.c.l.b16 %v3502
      %v3570 = vunpack.c.l.b16 %v3503
      %v3571 = vunpack.c.l.b16 %v3504
      %v3572 = vunpack.c.l.b16 %v3505
      %v3573 = vunpack.c.l.b16 %v3506
      %v3574 = vunpack.c.l.b16 %v3507
      %v3575 = vunpack.c.l.b16 %v3508
      %v3576 = vunpack.c.l.b16 %v3509
      %v3577 = vunpack.c.l.b16 %v3510
      %v3578 = vunpack.c.l.b16 %v3511
      %v3579 = vunpack.c.l.b16 %v3512
      %v3580 = vunpack.c.l.b16 %v3513
      %v3581 = vunpack.c.l.b16 %v3514
      %v3582 = vunpack.c.l.b16 %v3515
      %v3583 = vunpack.c.l.b16 %v3516
      %v3584 = vunpack.c.l.b16 %v3517
      %v3585 = vunpack.c.l.b16 %v3518
      %v3586 = vunpack.c.l.b16 %v3519
      %v3587 = vunpack.c.l.b16 %v3520
      %v3588 = vpack.c.b16 %v3557, %v3556
      %v3589 = vpack.c.b16 %v3559, %v3558
      %v3590 = vpack.c.b16 %v3561, %v3560
      %v3591 = vpack.c.b16 %v3563, %v3562
      %v3592 = vpack.c.b16 %v3565, %v3564
      %v3593 = vpack.c.b16 %v3567, %v3566
      %v3594 = vpack.c.b16 %v3569, %v3568
      %v3595 = vpack.c.b16 %v3571, %v3570
      %v3596 = vpack.c.b16 %v3573, %v3572
      %v3597 = vpack.c.b16 %v3575, %v3574
      %v3598 = vpack.c.b16 %v3577, %v3576
      %v3599 = vpack.c.b16 %v3579, %v3578
      %v3600 = vpack.c.b16 %v3581, %v3580
      %v3601 = vpack.c.b16 %v3583, %v3582
      %v3602 = vpack.c.b16 %v3585, %v3584
      %v3603 = vpack.c.b16 %v3587, %v3586
      %v3606 = vunpack.c.l.b16 %v3522
      %v3607 = vunpack.c.l.b16 %v3523
      %v3608 = vpack.c.b16 %v3607, %v3606
      %v3610 = vsel %vm1394, %v3588, 0
      %v3613 = vsel %vm1394, %v3589, 0
      %v3616 = vsel %vm1394, %v3590, 0
      %v3619 = vsel %vm1394, %v3591, 0
      %v3622 = vsel %vm1394, %v3592, 0
      %v3625 = vsel %vm1394, %v3593, 0
      %v3628 = vsel %vm1394, %v3594, 0
      %v3631 = vsel %vm1394, %v3595, 0
      %v3634 = vsel %vm1394, %v3596, 0
      %v3637 = vsel %vm1394, %v3597, 0
      %v3640 = vsel %vm1394, %v3598, 0
      %v3643 = vsel %vm1394, %v3599, 0
      %v3646 = vsel %vm1394, %v3600, 0
      %v3649 = vsel %vm1394, %v3601, 0
      %v3652 = vsel %vm1394, %v3602, 0
      %v3655 = vsel %vm1394, %v3603, 0
      %v3658 = vsel %vm1443, %v3608, 0
      %3660 = vmatpush.bf16.msra.mxu0 0
      %3661 = vmatpush.bf16.msra.mxu0 0
      %3662 = vmatpush.bf16.msra.mxu0 0
      %3663 = vmatpush.bf16.msra.mxu0 0
      %3664 = vmatpush.bf16.msra.mxu0 0
      %3665 = vmatpush.bf16.msra.mxu0 0
      %3666 = vmatpush.bf16.msra.mxu0 0
      %3667 = vmatpush.bf16.msra.mxu0 %v3658
      %3668 = vmatmul.bf16.gmra.mxu0 %v3610
      %v3669 = vpop.f32.mrf.mxu0
      %v3670 = vadd.f32 0.0, %v3669
      %v3671 = vpop.f32.mrf.mxu0
      %v3672 = vadd.f32 0.0, %v3671
      %3673 = vmatmul.bf16.gmra.mxu0 %v3613
      %v3674 = vpop.f32.mrf.mxu0
      %v3675 = vadd.f32 0.0, %v3674
      %v3676 = vpop.f32.mrf.mxu0
      %v3677 = vadd.f32 0.0, %v3676
      %3678 = vmatmul.bf16.gmra.mxu0 %v3616
      %v3679 = vpop.f32.mrf.mxu0
      %v3680 = vadd.f32 0.0, %v3679
      %v3681 = vpop.f32.mrf.mxu0
      %v3682 = vadd.f32 0.0, %v3681
      %3683 = vmatmul.bf16.gmra.mxu0 %v3619
      %v3684 = vpop.f32.mrf.mxu0
      %v3685 = vadd.f32 0.0, %v3684
      %v3686 = vpop.f32.mrf.mxu0
      %v3687 = vadd.f32 0.0, %v3686
      %3688 = vmatmul.bf16.gmra.mxu0 %v3622
      %v3689 = vpop.f32.mrf.mxu0
      %v3690 = vadd.f32 0.0, %v3689
      %v3691 = vpop.f32.mrf.mxu0
      %v3692 = vadd.f32 0.0, %v3691
      %3693 = vmatmul.bf16.gmra.mxu0 %v3625
      %v3694 = vpop.f32.mrf.mxu0
      %v3695 = vadd.f32 0.0, %v3694
      %v3696 = vpop.f32.mrf.mxu0
      %v3697 = vadd.f32 0.0, %v3696
      %3698 = vmatmul.bf16.gmra.mxu0 %v3628
      %v3699 = vpop.f32.mrf.mxu0
      %v3700 = vadd.f32 0.0, %v3699
      %v3701 = vpop.f32.mrf.mxu0
      %v3702 = vadd.f32 0.0, %v3701
      %3703 = vmatmul.bf16.gmra.mxu0 %v3631
      %v3704 = vpop.f32.mrf.mxu0
      %v3705 = vadd.f32 0.0, %v3704
      %v3706 = vpop.f32.mrf.mxu0
      %v3707 = vadd.f32 0.0, %v3706
      %3708 = vmatmul.bf16.gmra.mxu0 %v3634
      %v3709 = vpop.f32.mrf.mxu0
      %v3710 = vadd.f32 0.0, %v3709
      %v3711 = vpop.f32.mrf.mxu0
      %v3712 = vadd.f32 0.0, %v3711
      %3713 = vmatmul.bf16.gmra.mxu0 %v3637
      %v3714 = vpop.f32.mrf.mxu0
      %v3715 = vadd.f32 0.0, %v3714
      %v3716 = vpop.f32.mrf.mxu0
      %v3717 = vadd.f32 0.0, %v3716
      %3718 = vmatmul.bf16.gmra.mxu0 %v3640
      %v3719 = vpop.f32.mrf.mxu0
      %v3720 = vadd.f32 0.0, %v3719
      %v3721 = vpop.f32.mrf.mxu0
      %v3722 = vadd.f32 0.0, %v3721
      %3723 = vmatmul.bf16.gmra.mxu0 %v3643
      %v3724 = vpop.f32.mrf.mxu0
      %v3725 = vadd.f32 0.0, %v3724
      %v3726 = vpop.f32.mrf.mxu0
      %v3727 = vadd.f32 0.0, %v3726
      %3728 = vmatmul.bf16.gmra.mxu0 %v3646
      %v3729 = vpop.f32.mrf.mxu0
      %v3730 = vadd.f32 0.0, %v3729
      %v3731 = vpop.f32.mrf.mxu0
      %v3732 = vadd.f32 0.0, %v3731
      %3733 = vmatmul.bf16.gmra.mxu0 %v3649
      %v3734 = vpop.f32.mrf.mxu0
      %v3735 = vadd.f32 0.0, %v3734
      %v3736 = vpop.f32.mrf.mxu0
      %v3737 = vadd.f32 0.0, %v3736
      %3738 = vmatmul.bf16.gmra.mxu0 %v3652
      %v3739 = vpop.f32.mrf.mxu0
      %v3740 = vadd.f32 0.0, %v3739
      %v3741 = vpop.f32.mrf.mxu0
      %v3742 = vadd.f32 0.0, %v3741
      %3743 = vmatmul.bf16.gmra.mxu0 %v3655
      %v3744 = vpop.f32.mrf.mxu0
      %v3745 = vadd.f32 0.0, %v3744
      %v3746 = vpop.f32.mrf.mxu0
      %v3747 = vadd.f32 0.0, %v3746
      %3748 = vdwg.mxu0
      %v3749 = vadd.f32 %v3410, %v3670
      %v3750 = vadd.f32 %v3412, %v3672
      %v3751 = vadd.f32 %v3415, %v3675
      %v3752 = vadd.f32 %v3417, %v3677
      %v3753 = vadd.f32 %v3420, %v3680
      %v3754 = vadd.f32 %v3422, %v3682
      %v3755 = vadd.f32 %v3425, %v3685
      %v3756 = vadd.f32 %v3427, %v3687
      %v3757 = vadd.f32 %v3430, %v3690
      %v3758 = vadd.f32 %v3432, %v3692
      %v3759 = vadd.f32 %v3435, %v3695
      %v3760 = vadd.f32 %v3437, %v3697
      %v3761 = vadd.f32 %v3440, %v3700
      %v3762 = vadd.f32 %v3442, %v3702
      %v3763 = vadd.f32 %v3445, %v3705
      %v3764 = vadd.f32 %v3447, %v3707
      %v3765 = vadd.f32 %v3450, %v3710
      %v3766 = vadd.f32 %v3452, %v3712
      %v3767 = vadd.f32 %v3455, %v3715
      %v3768 = vadd.f32 %v3457, %v3717
      %v3769 = vadd.f32 %v3460, %v3720
      %v3770 = vadd.f32 %v3462, %v3722
      %v3771 = vadd.f32 %v3465, %v3725
      %v3772 = vadd.f32 %v3467, %v3727
      %v3773 = vadd.f32 %v3470, %v3730
      %v3774 = vadd.f32 %v3472, %v3732
      %v3775 = vadd.f32 %v3475, %v3735
      %v3776 = vadd.f32 %v3477, %v3737
      %v3777 = vadd.f32 %v3480, %v3740
      %v3778 = vadd.f32 %v3482, %v3742
      %v3779 = vadd.f32 %v3485, %v3745
      %v3780 = vadd.f32 %v3487, %v3747
      %v3781 = vld [vmem:[%s4] sm:$0x1]
      %v3783 = vperm.slane %v3781, 0
      %v3785 = vadd.f32 %v3749, %v3783
      %v3786 = vadd.f32 %v3750, %v3783
      %v3787 = vadd.f32 %v3751, %v3783
      %v3788 = vadd.f32 %v3752, %v3783
      %v3789 = vadd.f32 %v3753, %v3783
      %v3790 = vadd.f32 %v3754, %v3783
      %v3791 = vadd.f32 %v3755, %v3783
      %v3792 = vadd.f32 %v3756, %v3783
      %v3793 = vadd.f32 %v3757, %v3783
      %v3794 = vadd.f32 %v3758, %v3783
      %v3795 = vadd.f32 %v3759, %v3783
      %v3796 = vadd.f32 %v3760, %v3783
      %v3797 = vadd.f32 %v3761, %v3783
      %v3798 = vadd.f32 %v3762, %v3783
      %v3799 = vadd.f32 %v3763, %v3783
      %v3800 = vadd.f32 %v3764, %v3783
      %v3801 = vadd.f32 %v3765, %v3783
      %v3802 = vadd.f32 %v3766, %v3783
      %v3803 = vadd.f32 %v3767, %v3783
      %v3804 = vadd.f32 %v3768, %v3783
      %v3805 = vadd.f32 %v3769, %v3783
      %v3806 = vadd.f32 %v3770, %v3783
      %v3807 = vadd.f32 %v3771, %v3783
      %v3808 = vadd.f32 %v3772, %v3783
      %v3809 = vadd.f32 %v3773, %v3783
      %v3810 = vadd.f32 %v3774, %v3783
      %v3811 = vadd.f32 %v3775, %v3783
      %v3812 = vadd.f32 %v3776, %v3783
      %v3813 = vadd.f32 %v3777, %v3783
      %v3814 = vadd.f32 %v3778, %v3783
      %v3815 = vadd.f32 %v3779, %v3783
      %v3816 = vadd.f32 %v3780, %v3783
      %v3817 = vld [vmem:[%s219] sm:$0xff]
      %v3818 = vld [vmem:[%s219 + $0x8] sm:$0xff]
      %v3819 = vld [vmem:[%s219 + $0x10] sm:$0xff]
      %v3820 = vld [vmem:[%s219 + $0x18] sm:$0xff]
      %v3821 = vld [vmem:[%s219 + $0x20] sm:$0xff]
      %v3822 = vld [vmem:[%s219 + $0x28] sm:$0xff]
      %v3823 = vld [vmem:[%s219 + $0x30] sm:$0xff]
      %v3824 = vld [vmem:[%s219 + $0x38] sm:$0xff]
      %v3825 = vld [vmem:[%s219 + $0x40] sm:$0xff]
      %v3826 = vld [vmem:[%s219 + $0x48] sm:$0xff]
      %v3827 = vld [vmem:[%s219 + $0x50] sm:$0xff]
      %v3828 = vld [vmem:[%s219 + $0x58] sm:$0xff]
      %v3829 = vld [vmem:[%s219 + $0x60] sm:$0xff]
      %v3830 = vld [vmem:[%s219 + $0x68] sm:$0xff]
      %v3831 = vld [vmem:[%s219 + $0x70] sm:$0xff]
      %v3832 = vld [vmem:[%s219 + $0x78] sm:$0xff]
      %v3833 = vld [vmem:[%s219 + $0x80] sm:$0xff]
      %v3834 = vld [vmem:[%s219 + $0x88] sm:$0xff]
      %v3835 = vld [vmem:[%s219 + $0x90] sm:$0xff]
      %v3836 = vld [vmem:[%s219 + $0x98] sm:$0xff]
      %v3837 = vld [vmem:[%s219 + $0xa0] sm:$0xff]
      %v3838 = vld [vmem:[%s219 + $0xa8] sm:$0xff]
      %v3839 = vld [vmem:[%s219 + $0xb0] sm:$0xff]
      %v3840 = vld [vmem:[%s219 + $0xb8] sm:$0xff]
      %v3841 = vld [vmem:[%s219 + $0xc0] sm:$0xff]
      %v3842 = vld [vmem:[%s219 + $0xc8] sm:$0xff]
      %v3843 = vld [vmem:[%s219 + $0xd0] sm:$0xff]
      %v3844 = vld [vmem:[%s219 + $0xd8] sm:$0xff]
      %v3845 = vld [vmem:[%s219 + $0xe0] sm:$0xff]
      %v3846 = vld [vmem:[%s219 + $0xe8] sm:$0xff]
      %v3847 = vld [vmem:[%s219 + $0xf0] sm:$0xff]
      %v3848 = vld [vmem:[%s219 + $0xf8] sm:$0xff]
      %v3849 = vadd.f32 %v3785, %v3817
      %v3850 = vadd.f32 %v3786, %v3818
      %v3851 = vadd.f32 %v3787, %v3819
      %v3852 = vadd.f32 %v3788, %v3820
      %v3853 = vadd.f32 %v3789, %v3821
      %v3854 = vadd.f32 %v3790, %v3822
      %v3855 = vadd.f32 %v3791, %v3823
      %v3856 = vadd.f32 %v3792, %v3824
      %v3857 = vadd.f32 %v3793, %v3825
      %v3858 = vadd.f32 %v3794, %v3826
      %v3859 = vadd.f32 %v3795, %v3827
      %v3860 = vadd.f32 %v3796, %v3828
      %v3861 = vadd.f32 %v3797, %v3829
      %v3862 = vadd.f32 %v3798, %v3830
      %v3863 = vadd.f32 %v3799, %v3831
      %v3864 = vadd.f32 %v3800, %v3832
      %v3865 = vadd.f32 %v3801, %v3833
      %v3866 = vadd.f32 %v3802, %v3834
      %v3867 = vadd.f32 %v3803, %v3835
      %v3868 = vadd.f32 %v3804, %v3836
      %v3869 = vadd.f32 %v3805, %v3837
      %v3870 = vadd.f32 %v3806, %v3838
      %v3871 = vadd.f32 %v3807, %v3839
      %v3872 = vadd.f32 %v3808, %v3840
      %v3873 = vadd.f32 %v3809, %v3841
      %v3874 = vadd.f32 %v3810, %v3842
      %v3875 = vadd.f32 %v3811, %v3843
      %v3876 = vadd.f32 %v3812, %v3844
      %v3877 = vadd.f32 %v3813, %v3845
      %v3878 = vadd.f32 %v3814, %v3846
      %v3879 = vadd.f32 %v3815, %v3847
      %v3880 = vadd.f32 %v3816, %v3848
      %v3881 = vmax.f32 %v3849, 0.0
      %v3882 = vmax.f32 %v3850, 0.0
      %v3883 = vmax.f32 %v3851, 0.0
      %v3884 = vmax.f32 %v3852, 0.0
      %v3885 = vmax.f32 %v3853, 0.0
      %v3886 = vmax.f32 %v3854, 0.0
      %v3887 = vmax.f32 %v3855, 0.0
      %v3888 = vmax.f32 %v3856, 0.0
      %v3889 = vmax.f32 %v3857, 0.0
      %v3890 = vmax.f32 %v3858, 0.0
      %v3891 = vmax.f32 %v3859, 0.0
      %v3892 = vmax.f32 %v3860, 0.0
      %v3893 = vmax.f32 %v3861, 0.0
      %v3894 = vmax.f32 %v3862, 0.0
      %v3895 = vmax.f32 %v3863, 0.0
      %v3896 = vmax.f32 %v3864, 0.0
      %v3897 = vmax.f32 %v3865, 0.0
      %v3898 = vmax.f32 %v3866, 0.0
      %v3899 = vmax.f32 %v3867, 0.0
      %v3900 = vmax.f32 %v3868, 0.0
      %v3901 = vmax.f32 %v3869, 0.0
      %v3902 = vmax.f32 %v3870, 0.0
      %v3903 = vmax.f32 %v3871, 0.0
      %v3904 = vmax.f32 %v3872, 0.0
      %v3905 = vmax.f32 %v3873, 0.0
      %v3906 = vmax.f32 %v3874, 0.0
      %v3907 = vmax.f32 %v3875, 0.0
      %v3908 = vmax.f32 %v3876, 0.0
      %v3909 = vmax.f32 %v3877, 0.0
      %v3910 = vmax.f32 %v3878, 0.0
      %v3911 = vmax.f32 %v3879, 0.0
      %v3912 = vmax.f32 %v3880, 0.0
      %vm3913 = vcmask 31744
      %3914 = vst.msk [vmem:[%s224] sm:$0xff] %vm3913, %v3881
      %3915 = vst.msk [vmem:[%s224 + $0x8] sm:$0xff] %vm3913, %v3882
      %3916 = vst.msk [vmem:[%s224 + $0x10] sm:$0xff] %vm3913, %v3883
      %3917 = vst.msk [vmem:[%s224 + $0x18] sm:$0xff] %vm3913, %v3884
      %3918 = vst.msk [vmem:[%s224 + $0x20] sm:$0xff] %vm3913, %v3885
      %3919 = vst.msk [vmem:[%s224 + $0x28] sm:$0xff] %vm3913, %v3886
      %3920 = vst.msk [vmem:[%s224 + $0x30] sm:$0xff] %vm3913, %v3887
      %3921 = vst.msk [vmem:[%s224 + $0x38] sm:$0xff] %vm3913, %v3888
      %3922 = vst.msk [vmem:[%s224 + $0x40] sm:$0xff] %vm3913, %v3889
      %3923 = vst.msk [vmem:[%s224 + $0x48] sm:$0xff] %vm3913, %v3890
      %3924 = vst.msk [vmem:[%s224 + $0x50] sm:$0xff] %vm3913, %v3891
      %3925 = vst.msk [vmem:[%s224 + $0x58] sm:$0xff] %vm3913, %v3892
      %3926 = vst.msk [vmem:[%s224 + $0x60] sm:$0xff] %vm3913, %v3893
      %3927 = vst.msk [vmem:[%s224 + $0x68] sm:$0xff] %vm3913, %v3894
      %3928 = vst.msk [vmem:[%s224 + $0x70] sm:$0xff] %vm3913, %v3895
      %3929 = vst.msk [vmem:[%s224 + $0x78] sm:$0xff] %vm3913, %v3896
      %3930 = vst.msk [vmem:[%s224 + $0x80] sm:$0xff] %vm3913, %v3897
      %3931 = vst.msk [vmem:[%s224 + $0x88] sm:$0xff] %vm3913, %v3898
      %3932 = vst.msk [vmem:[%s224 + $0x90] sm:$0xff] %vm3913, %v3899
      %3933 = vst.msk [vmem:[%s224 + $0x98] sm:$0xff] %vm3913, %v3900
      %3934 = vst.msk [vmem:[%s224 + $0xa0] sm:$0xff] %vm3913, %v3901
      %3935 = vst.msk [vmem:[%s224 + $0xa8] sm:$0xff] %vm3913, %v3902
      %3936 = vst.msk [vmem:[%s224 + $0xb0] sm:$0xff] %vm3913, %v3903
      %3937 = vst.msk [vmem:[%s224 + $0xb8] sm:$0xff] %vm3913, %v3904
      %3938 = vst.msk [vmem:[%s224 + $0xc0] sm:$0xff] %vm3913, %v3905
      %3939 = vst.msk [vmem:[%s224 + $0xc8] sm:$0xff] %vm3913, %v3906
      %3940 = vst.msk [vmem:[%s224 + $0xd0] sm:$0xff] %vm3913, %v3907
      %3941 = vst.msk [vmem:[%s224 + $0xd8] sm:$0xff] %vm3913, %v3908
      %3942 = vst.msk [vmem:[%s224 + $0xe0] sm:$0xff] %vm3913, %v3909
      %3943 = vst.msk [vmem:[%s224 + $0xe8] sm:$0xff] %vm3913, %v3910
      %3944 = vst.msk [vmem:[%s224 + $0xf0] sm:$0xff] %vm3913, %v3911
      %3945 = vst.msk [vmem:[%s224 + $0xf8] sm:$0xff] %vm3913, %v3912
      %p3946 = scmp.lt.s32.totalorder %s16, 1
      %s3947 = scalar_select %p3946, %s16, 1
      %s3948 = smul.addr %s3947, 32
      %s3949 = smul.addr %s3948, 8
      %s3950 = scalar_lea.vmem %s5, %s3949
      // Predicated region
      $region41: #{tpu_custom_call.1} parent=39 // pred_check
        %p3951 = pneg %p144
      $region42: #{tpu_custom_call.1} parent=39 // pred_check_branch
        %3953 = sbr.rel (%p3951) target = $region44
      $region43: #{tpu_custom_call.1} parent=39 // pred_region
        _
      $region44: #{tpu_custom_call.1} parent=39 // pred_fallthru
        _
    $region40: #{tpu_custom_call.1} parent=5 // pred_fallthru
      _
    %p3954 = scmp.le.s32.totalorder 2, %s11
    // Predicated region
    $region45: #{tpu_custom_call.1} parent=5 // pred_check
      %p3955 = pneg %p3954
    $region46: #{tpu_custom_call.1} parent=5 // pred_check_branch
      %3957 = sbr.rel (%p3955) target = $region48
    $region47: #{tpu_custom_call.1} parent=5 // pred_region
      %s3958 = ssub.s32 %s11, 2
      // Predicated region
      $region49: #{tpu_custom_call.1} parent=47 // pred_check
        %p3959 = pneg %p150
      $region50: #{tpu_custom_call.1} parent=47 // pred_check_branch
        %3961 = sbr.rel (%p3959) target = $region52
      $region51: #{tpu_custom_call.1} parent=47 // pred_region
        %p3962 = scmp.lt.s32.totalorder %s17, 1
        %s3963 = scalar_select %p3962, %s17, 1
        %s3964 = smul.addr %s3963, 32
        %s3965 = smul.addr %s3964, 8
        %s3966 = scalar_lea.vmem %s5, %s3965
      $region52: #{tpu_custom_call.1} parent=47 // pred_fallthru
        _
    $region48: #{tpu_custom_call.1} parent=5 // pred_fallthru
      _
  $region6: #{tpu_custom_call.1} parent=0 // loop_footer
    %s15 = sadd.s32 1, %s11
  $region7: #{tpu_custom_call.1} parent=0 // loop_footer_branch
    %10 = sbr.rel target = $region3
  $region8: #{tpu_custom_call.1} parent=0 // loop_exit
    _

</llo_original>
